<compile_context>
chip_gen: v6e
topology: v6e:2x2x1
jax: 0.10.0
libtpu: 0.0.40
codegen_flags: <defaults>
</compile_context>

<pallas_src>
import numpy as np
import jax
import jax.numpy as jnp
from jax.experimental import pallas as pl
from jax.experimental.pallas import tpu as pltpu

# ----------------------------- fixed geometry -------------------------------
H, W = 18, 24                      # input image (1 channel)
C1, C2 = 32, 64                    # conv channels
PH1, PW1 = H // 2, W // 2          # 9, 12  : pool1 output spatial size
PH2, PW2 = PH1 // 2, PW1 // 2      # 4, 6   : pool2 output spatial size
FC_IN = C2 * PH2 * PW2             # 1536
FC_HID, FC_OUT = 128, 6
K1 = 6 * (PW1 + 1)                 # 78  : conv1 structured K  ((cp, dh) blocks of 13)
K1P = 128                          # conv1 K zero-padded to one aligned MXU pass
HALF1 = PW1 * C1                   # 384 : half of conv1 out lanes (w-parity split)
HALF2 = PW2 * C2                   # 384 : half of conv2 out lanes (w-parity split)
ROWS_IMG = PH1 + 2                 # 11  : h-padded pool1 rows per image


# ------------------------------- the kernel ---------------------------------
def _cnn_kernel(lhs1_ref, r1_ref, b1_ref, r2_ref, b2_ref,
                w1fc_ref, bfc1_ref, w2fc_ref, bfc2_ref, out_ref, p1p_ref):
    f32, bf16 = jnp.float32, jnp.bfloat16
    NP = p1p_ref.shape[0]          # N * 11
    N = NP // ROWS_IMG
    M2 = NP - 2                    # conv2 matmul M (interior rows + per-image seams)

    # ---------------- conv1 + relu : one aligned K=128 MXU pass per h-parity slab ------
    # lhs1_ref[hp] rows: image n, pooled row r  (conv output row h = 2r + hp)
    # out lanes       : wpar*384 + pw*32 + c    (conv output col  w = 2pw + wpar)
    r1 = r1_ref[...]
    c1e = jnp.maximum(jnp.dot(lhs1_ref[0], r1, preferred_element_type=f32)
                      + b1_ref[...], 0.0)                         # (N*9, 768) f32
    c1o = jnp.maximum(jnp.dot(lhs1_ref[1], r1, preferred_element_type=f32)
                      + b1_ref[...], 0.0)                         # (N*9, 768) f32

    # ---------------- pool1 (2x2/2) : purely lane/slab-aligned maxes --------------------
    p1 = jnp.maximum(jnp.maximum(c1e[:, :HALF1], c1e[:, HALF1:]),
                     jnp.maximum(c1o[:, :HALF1], c1o[:, HALF1:]))  # (N*9, 384) lane=pw*32+c

    # ---------------- stage pool1 into a zero-padded VMEM scratch (h-padding) -----------
    # image n, pool1 row h1 -> scratch row n*11 + 1 + h1 ; rows n*11 and n*11+10 stay 0.
    p1p_ref[...] = jnp.zeros_like(p1p_ref)
    for n in range(N):
        p1p_ref[pl.ds(n * ROWS_IMG + 1, PH1), :] = p1[n * PH1:(n + 1) * PH1, :]

    # ---------------- conv2 + relu : 3 structured K=384 taps, plain ref loads -----------
    # out lane = (w2%2)*384 + (w2//2)*64 + co ; image n's output row h2 lives at row
    # n*11 + h2 of c2 (rows n*11+9 / +10 are cross-image seams, computed but unused).
    c2 = (jnp.dot(p1p_ref[pl.ds(0, M2), :].astype(bf16), r2_ref[0],
                  preferred_element_type=f32)
          + jnp.dot(p1p_ref[pl.ds(1, M2), :].astype(bf16), r2_ref[1],
                    preferred_element_type=f32)
          + jnp.dot(p1p_ref[pl.ds(2, M2), :].astype(bf16), r2_ref[2],
                    preferred_element_type=f32)
          + b2_ref[...])
    c2 = jnp.maximum(c2, 0.0)                                      # (M2, 768) f32

    # ---------------- pool2 + flatten (NCHW flatten order folded into W1fc) -------------
    wp2 = jnp.maximum(c2[:, :HALF2], c2[:, HALF2:])                # (M2, 384) lane=pw2*64+c
    img_rows = []
    for n in range(N):
        base = n * ROWS_IMG
        hrows = [jnp.maximum(wp2[base + 2 * q: base + 2 * q + 1, :],
                             wp2[base + 2 * q + 1: base + 2 * q + 2, :])
                 for q in range(PH2)]                              # 4 x (1, 384)
        img_rows.append(jnp.concatenate(hrows, axis=1))            # (1, 1536)
    xfc = jnp.concatenate(img_rows, axis=0)                        # (N, 1536) lane=h*384+w*64+c

    # ---------------- fc1 + relu + fc2 (lane-dense 128-wide output) ---------------------
    h1 = jnp.maximum(jnp.dot(xfc.astype(bf16), w1fc_ref[...],
                             preferred_element_type=f32) + bfc1_ref[...], 0.0)   # (N, 128)
    out = jnp.dot(h1, w2fc_ref[...], preferred_element_type=f32) + bfc2_ref[...]  # (N, 128)
    out_ref[...] = out.astype(out_ref.dtype)


# ------------------------------ wrapper / specs ------------------------------
def _full_spec(shape):
    nd = len(shape)
    return pl.BlockSpec(shape, lambda i, _nd=nd: (0,) * _nd)


@jax.jit
def cnn_net_forward(x, prep):
    """x: (N, 1, 18, 24) float32 NCHW -> logits (N, 6)."""
    N = x.shape[0]
    xs = x.astype(jnp.float32).reshape(N, H, W)
    xpad = jnp.pad(xs, ((0, 0), (1, 1), (1, 1)))                   # (N, 20, 26)
    # column-parity split: xcp[n, cp, h, q] = xpad[n, h, 2q + cp]
    xcp = jnp.stack([xpad[:, :, 0::2], xpad[:, :, 1::2]], axis=1)  # (N, 2, 20, 13)

    # conv1 lhs, assembled in XLA (not in-kernel):
    #   lhs1[hp, n*9 + r, (cp*3 + dh)*13 + q] = xpad[n, 2r + hp + dh, 2q + cp]
    parts = []
    for hp in (0, 1):
        pieces = []
        for cp in (0, 1):
            for dh in range(3):
                pieces.append(xcp[:, cp, hp + dh: hp + dh + 2 * PH1 - 1: 2, :])  # (N, 9, 13)
        parts.append(jnp.concatenate(pieces, axis=-1))              # (N, 9, 78)
    lhs1 = jnp.stack(parts, axis=0).reshape(2, N * PH1, K1)
    lhs1 = jnp.pad(lhs1, ((0, 0), (0, 0), (0, K1P - K1))).astype(jnp.bfloat16)  # (2, N*9, 128)

    args = (lhs1, prep["R1"], prep["b1"], prep["R2"], prep["b2"],
            prep["W1fc"], prep["bfc1"], prep["W2fc"], prep["bfc2"])
    out = pl.pallas_call(
        _cnn_kernel,
        out_shape=jax.ShapeDtypeStruct((N, FC_HID), jnp.float32),   # 128-lane-dense output
        grid=(1,),
        in_specs=[_full_spec(a.shape) for a in args],
        out_specs=_full_spec((N, FC_HID)),
        scratch_shapes=[pltpu.VMEM((N * ROWS_IMG, PW1 * C1), jnp.float32)],
        compiler_params=pltpu.CompilerParams(
            dimension_semantics=("arbitrary",),
            vmem_limit_bytes=32 * 1024 * 1024),
    )(*args)
    return out[:, :FC_OUT]


# --------------------- one-time weight folding at init -----------------------
def prepare_params(params):
    """Fold PyTorch-layout weights into the structured (bf16) matrices the fused kernel
    consumes (conv taps, pool parity layout, NCHW flatten order, fc transposes).
    Runs once at init; nothing here executes per forward call."""
    c1w = np.asarray(params["conv1_w"], np.float32)      # (32, 1, 3, 3)
    c1b = np.asarray(params["conv1_b"], np.float32)
    c2w = np.asarray(params["conv2_w"], np.float32)      # (64, 32, 3, 3)
    c2b = np.asarray(params["conv2_b"], np.float32)
    f1w = np.asarray(params["fc1_w"], np.float32)        # (128, 1536)
    f1b = np.asarray(params["fc1_b"], np.float32)
    f2w = np.asarray(params["fc2_w"], np.float32)        # (6, 128)
    f2b = np.asarray(params["fc2_b"], np.float32)

    # conv1 structured matrix R1 (K padded to 128, out 768).
    # lhs lane = (cp*3 + dh)*13 + q  carries xpad[h+dh, 2q+cp];
    # out lane = wpar*384 + pw*32 + c for output column w = 2*pw + wpar.
    A = c1w[:, 0].transpose(1, 2, 0)                     # (dh, dw, c)
    R1 = np.zeros((K1P, 2 * PW1 * C1), np.float32)
    for dh in range(3):
        for pw in range(PW1):
            e0 = pw * C1                                 # even-w output block
            o0 = PW1 * C1 + pw * C1                      # odd-w output block
            R1[(0 * 3 + dh) * 13 + pw,     e0:e0 + C1] += A[dh, 0]   # col 2pw   (dw=0)
            R1[(1 * 3 + dh) * 13 + pw,     e0:e0 + C1] += A[dh, 1]   # col 2pw+1 (dw=1)
            R1[(0 * 3 + dh) * 13 + pw + 1, e0:e0 + C1] += A[dh, 2]   # col 2pw+2 (dw=2)
            R1[(1 * 3 + dh) * 13 + pw,     o0:o0 + C1] += A[dh, 0]   # col 2pw+1
            R1[(0 * 3 + dh) * 13 + pw + 1, o0:o0 + C1] += A[dh, 1]   # col 2pw+2
            R1[(1 * 3 + dh) * 13 + pw + 1, o0:o0 + C1] += A[dh, 2]   # col 2pw+3
    b1 = np.tile(c1b, 2 * PW1)[None, :]                  # (1, 768)

    # conv2 structured matrices R2 (3, 384, 768), one per tap row dh, acting directly on
    # UNPADDED pool1 lanes (w-padding folded in by dropping out-of-range taps).
    # lhs lane = w1*32 + ci ; out lane = (w2%2)*384 + (w2//2)*64 + co (parity-split so
    # pool2's w-max is lane aligned).
    W2T = c2w.transpose(2, 3, 1, 0)                      # (dh, dw, ci, co)
    R2 = np.zeros((3, PW1 * C1, PW1 * C2), np.float32)
    for dh in range(3):
        for w2 in range(PW1):
            col = (w2 % 2) * (PW2 * C2) + (w2 // 2) * C2
            for dw in range(3):
                w1 = w2 - 1 + dw
                if 0 <= w1 < PW1:
                    R2[dh, w1 * C1:(w1 + 1) * C1, col:col + C2] += W2T[dh, dw]
    b2 = np.tile(c2b, PW1)[None, :]                      # (1, 768)

    # fc1: fold the PyTorch NCHW flatten permutation (k = c*24 + h*6 + w) into the weight
    # so it consumes the kernel's lane order (h*384 + w*64 + c) directly.
    W1fc = f1w.reshape(FC_HID, C2, PH2, PW2).transpose(2, 3, 1, 0).reshape(FC_IN, FC_HID)

    # fc2: transpose + pad to 128 output lanes (lane-dense store; wrapper slices [:, :6]).
    W2fc = np.zeros((FC_HID, FC_HID), np.float32)
    W2fc[:, :FC_OUT] = f2w.T
    bfc2 = np.zeros((1, FC_HID), np.float32)
    bfc2[0, :FC_OUT] = f2b

    jf32 = lambda a: jnp.asarray(a, jnp.float32)
    jbf = lambda a: jnp.asarray(a, jnp.bfloat16)
    return {"R1": jbf(R1), "b1": jf32(b1), "R2": jbf(R2), "b2": jf32(b2),
            "W1fc": jbf(W1fc), "bfc1": jf32(f1b[None, :]),
            "W2fc": jf32(W2fc), "bfc2": jf32(bfc2)}


# ------------------------------ params / reference ---------------------------
def init_params(key):
    ks = jax.random.split(key, 8)
    s = 0.1
    return {
        "conv1_w": s * jax.random.normal(ks[0], (C1, 1, 3, 3), jnp.float32),
        "conv1_b": s * jax.random.normal(ks[1], (C1,), jnp.float32),
        "conv2_w": s * jax.random.normal(ks[2], (C2, C1, 3, 3), jnp.float32),
        "conv2_b": s * jax.random.normal(ks[3], (C2,), jnp.float32),
        "fc1_w":   s * jax.random.normal(ks[4], (FC_HID, FC_IN), jnp.float32),
        "fc1_b":   s * jax.random.normal(ks[5], (FC_HID,), jnp.float32),
        "fc2_w":   s * jax.random.normal(ks[6], (FC_OUT, FC_HID), jnp.float32),
        "fc2_b":   s * jax.random.normal(ks[7], (FC_OUT,), jnp.float32),
    }


def _reference_forward(x, params):
    """Plain-JAX reference matching the PyTorch module (sanity check only)."""
    y = jax.lax.conv_general_dilated(x.astype(jnp.float32), params["conv1_w"],
                                     (1, 1), ((1, 1), (1, 1)),
                                     dimension_numbers=("NCHW", "OIHW", "NCHW"))
    y = jnp.maximum(y + params["conv1_b"][None, :, None, None], 0.0)
    y = jax.lax.reduce_window(y, -jnp.inf, jax.lax.max, (1, 1, 2, 2), (1, 1, 2, 2), "VALID")
    y = jax.lax.conv_general_dilated(y, params["conv2_w"], (1, 1), ((1, 1), (1, 1)),
                                     dimension_numbers=("NCHW", "OIHW", "NCHW"))
    y = jnp.maximum(y + params["conv2_b"][None, :, None, None], 0.0)
    y = jax.lax.reduce_window(y, -jnp.inf, jax.lax.max, (1, 1, 2, 2), (1, 1, 2, 2), "VALID")
    y = y.reshape(y.shape[0], -1)
    y = jnp.maximum(y @ params["fc1_w"].T + params["fc1_b"], 0.0)
    return y @ params["fc2_w"].T + params["fc2_b"]


if __name__ == "__main__":
    key = jax.random.PRNGKey(0)
    kp, kx = jax.random.split(key)
    params = init_params(kp)
    prep = prepare_params(params)          # one-time weight folding (bf16 structured mats)

    x = jax.random.normal(kx, (2, 1, H, W), jnp.float32)

    out = cnn_net_forward(x, prep)
    out = jax.block_until_ready(out)
    assert out.shape == (2, FC_OUT)

    # sanity check vs plain-JAX f32 reference (tolerance covers bf16 MXU operands)
    ref = jax.block_until_ready(_reference_forward(x, params))
    err = float(jnp.max(jnp.abs(out - ref)))
    assert err < 5e-2, f"mismatch vs reference: max abs err = {err}"

    print("KERNEL_OK")
</pallas_src>

<mosaic_0001>
module attributes {stable_mosaic.version = 11 : i64} {
  func.func @_cnn_kernel(%arg0: i32, %arg1: memref<2x18x128xbf16, #tpu.memory_space<vmem>>, %arg2: memref<128x768xbf16, #tpu.memory_space<vmem>>, %arg3: memref<1x768xf32, #tpu.memory_space<vmem>>, %arg4: memref<3x384x768xbf16, #tpu.memory_space<vmem>>, %arg5: memref<1x768xf32, #tpu.memory_space<vmem>>, %arg6: memref<1536x128xbf16, #tpu.memory_space<vmem>>, %arg7: memref<1x128xf32, #tpu.memory_space<vmem>>, %arg8: memref<128x128xf32, #tpu.memory_space<vmem>>, %arg9: memref<1x128xf32, #tpu.memory_space<vmem>>, %arg10: memref<2x128xf32, #tpu.memory_space<vmem>>, %arg11: memref<22x384xf32, #tpu.memory_space<vmem>>) attributes {dimension_semantics = [#tpu.dimension_semantics<arbitrary>], iteration_bounds = array<i64: 1>, scalar_prefetch = 0 : i64, scratch_operands = 1 : i64, tpu.core_type = #tpu.core_type<tc>, window_params = [{pipeline_mode = #tpu.pipeline_mode<synchronous>, transform_indices = @transform_0, window_bounds = array<i64: 2, 18, 128>}, {pipeline_mode = #tpu.pipeline_mode<synchronous>, transform_indices = @transform_1, window_bounds = array<i64: 128, 768>}, {pipeline_mode = #tpu.pipeline_mode<synchronous>, transform_indices = @transform_2, window_bounds = array<i64: 1, 768>}, {pipeline_mode = #tpu.pipeline_mode<synchronous>, transform_indices = @transform_3, window_bounds = array<i64: 3, 384, 768>}, {pipeline_mode = #tpu.pipeline_mode<synchronous>, transform_indices = @transform_4, window_bounds = array<i64: 1, 768>}, {pipeline_mode = #tpu.pipeline_mode<synchronous>, transform_indices = @transform_5, window_bounds = array<i64: 1536, 128>}, {pipeline_mode = #tpu.pipeline_mode<synchronous>, transform_indices = @transform_6, window_bounds = array<i64: 1, 128>}, {pipeline_mode = #tpu.pipeline_mode<synchronous>, transform_indices = @transform_7, window_bounds = array<i64: 128, 128>}, {pipeline_mode = #tpu.pipeline_mode<synchronous>, transform_indices = @transform_8, window_bounds = array<i64: 1, 128>}, {pipeline_mode = #tpu.pipeline_mode<synchronous>, transform_indices = @transform_9, window_bounds = array<i64: 2, 128>}]} {
    %c0 = arith.constant 0 : index
    %c0_0 = arith.constant 0 : index
    %0 = vector.load %arg2[%c0, %c0_0] : memref<128x768xbf16, #tpu.memory_space<vmem>>, vector<128x768xbf16>
    %c0_1 = arith.constant 0 : index
    %c0_2 = arith.constant 0 : index
    %c0_3 = arith.constant 0 : index
    %1 = vector.load %arg1[%c0_1, %c0_2, %c0_3] : memref<2x18x128xbf16, #tpu.memory_space<vmem>>, vector<1x18x128xbf16>
    %2 = vector.shape_cast %1 : vector<1x18x128xbf16> to vector<18x128xbf16>
    %cst = arith.constant dense<0.000000e+00> : vector<18x768xf32>
    %3 = tpu.matmul %2, %0, %cst {dimension_numbers = #tpu.dot_dimension_numbers<[1], [0], [0], [1], [0, 0, 1, 1], [], []>} : vector<18x128xbf16>, vector<128x768xbf16>, vector<18x768xf32> -> vector<18x768xf32>
    %c0_4 = arith.constant 0 : index
    %c0_5 = arith.constant 0 : index
    %4 = vector.load %arg3[%c0_4, %c0_5] : memref<1x768xf32, #tpu.memory_space<vmem>>, vector<1x768xf32>
    %5 = vector.broadcast %4 : vector<1x768xf32> to vector<18x768xf32>
    %6 = arith.addf %3, %5 : vector<18x768xf32>
    %cst_6 = arith.constant 0.000000e+00 : f32
    %7 = vector.broadcast %cst_6 : f32 to vector<18x768xf32>
    %8 = arith.maximumf %6, %7 : vector<18x768xf32>
    %c1 = arith.constant 1 : index
    %c0_7 = arith.constant 0 : index
    %c0_8 = arith.constant 0 : index
    %9 = vector.load %arg1[%c1, %c0_7, %c0_8] : memref<2x18x128xbf16, #tpu.memory_space<vmem>>, vector<1x18x128xbf16>
    %10 = vector.shape_cast %9 : vector<1x18x128xbf16> to vector<18x128xbf16>
    %cst_9 = arith.constant dense<0.000000e+00> : vector<18x768xf32>
    %11 = tpu.matmul %10, %0, %cst_9 {dimension_numbers = #tpu.dot_dimension_numbers<[1], [0], [0], [1], [0, 0, 1, 1], [], []>} : vector<18x128xbf16>, vector<128x768xbf16>, vector<18x768xf32> -> vector<18x768xf32>
    %c0_10 = arith.constant 0 : index
    %c0_11 = arith.constant 0 : index
    %12 = vector.load %arg3[%c0_10, %c0_11] : memref<1x768xf32, #tpu.memory_space<vmem>>, vector<1x768xf32>
    %13 = vector.broadcast %12 : vector<1x768xf32> to vector<18x768xf32>
    %14 = arith.addf %11, %13 : vector<18x768xf32>
    %cst_12 = arith.constant 0.000000e+00 : f32
    %15 = vector.broadcast %cst_12 : f32 to vector<18x768xf32>
    %16 = arith.maximumf %14, %15 : vector<18x768xf32>
    %17 = vector.extract_strided_slice %8 {offsets = [0, 0], sizes = [18, 384], strides = [1, 1]} : vector<18x768xf32> to vector<18x384xf32>
    %18 = vector.extract_strided_slice %8 {offsets = [0, 384], sizes = [18, 384], strides = [1, 1]} : vector<18x768xf32> to vector<18x384xf32>
    %19 = arith.maximumf %17, %18 : vector<18x384xf32>
    %20 = vector.extract_strided_slice %16 {offsets = [0, 0], sizes = [18, 384], strides = [1, 1]} : vector<18x768xf32> to vector<18x384xf32>
    %21 = vector.extract_strided_slice %16 {offsets = [0, 384], sizes = [18, 384], strides = [1, 1]} : vector<18x768xf32> to vector<18x384xf32>
    %22 = arith.maximumf %20, %21 : vector<18x384xf32>
    %23 = arith.maximumf %19, %22 : vector<18x384xf32>
    %cst_13 = arith.constant 0.000000e+00 : f32
    %24 = vector.broadcast %cst_13 : f32 to vector<22x384xf32>
    %c0_14 = arith.constant 0 : index
    %c0_15 = arith.constant 0 : index
    %25 = vector.load %arg11[%c0_14, %c0_15] : memref<22x384xf32, #tpu.memory_space<vmem>>, vector<22x384xf32>
    tpu.vector_store %arg11[%c0_14, %c0_15], %24 {strides = array<i32>} : memref<22x384xf32, #tpu.memory_space<vmem>>, vector<22x384xf32>,
    %26 = vector.extract_strided_slice %23 {offsets = [0, 0], sizes = [9, 384], strides = [1, 1]} : vector<18x384xf32> to vector<9x384xf32>
    %c1_16 = arith.constant 1 : index
    %c0_17 = arith.constant 0 : index
    %27 = vector.load %arg11[%c1_16, %c0_17] : memref<22x384xf32, #tpu.memory_space<vmem>>, vector<9x384xf32>
    tpu.vector_store %arg11[%c1_16, %c0_17], %26 {strides = array<i32>} : memref<22x384xf32, #tpu.memory_space<vmem>>, vector<9x384xf32>,
    %28 = vector.extract_strided_slice %23 {offsets = [9, 0], sizes = [9, 384], strides = [1, 1]} : vector<18x384xf32> to vector<9x384xf32>
    %c12 = arith.constant 12 : index
    %c0_18 = arith.constant 0 : index
    %29 = vector.load %arg11[%c12, %c0_18] : memref<22x384xf32, #tpu.memory_space<vmem>>, vector<9x384xf32>
    tpu.vector_store %arg11[%c12, %c0_18], %28 {strides = array<i32>} : memref<22x384xf32, #tpu.memory_space<vmem>>, vector<9x384xf32>,
    %c0_19 = arith.constant 0 : index
    %c0_20 = arith.constant 0 : index
    %30 = vector.load %arg11[%c0_19, %c0_20] : memref<22x384xf32, #tpu.memory_space<vmem>>, vector<20x384xf32>
    %31 = arith.truncf %30 : vector<20x384xf32> to vector<20x384xbf16>
    %c0_21 = arith.constant 0 : index
    %c0_22 = arith.constant 0 : index
    %c0_23 = arith.constant 0 : index
    %32 = vector.load %arg4[%c0_21, %c0_22, %c0_23] : memref<3x384x768xbf16, #tpu.memory_space<vmem>>, vector<1x384x768xbf16>
    %33 = vector.shape_cast %32 : vector<1x384x768xbf16> to vector<384x768xbf16>
    %cst_24 = arith.constant dense<0.000000e+00> : vector<20x768xf32>
    %34 = tpu.matmul %31, %33, %cst_24 {dimension_numbers = #tpu.dot_dimension_numbers<[1], [0], [0], [1], [0, 0, 1, 1], [], []>} : vector<20x384xbf16>, vector<384x768xbf16>, vector<20x768xf32> -> vector<20x768xf32>
    %c1_25 = arith.constant 1 : index
    %c0_26 = arith.constant 0 : index
    %35 = vector.load %arg11[%c1_25, %c0_26] : memref<22x384xf32, #tpu.memory_space<vmem>>, vector<20x384xf32>
    %36 = arith.truncf %35 : vector<20x384xf32> to vector<20x384xbf16>
    %c1_27 = arith.constant 1 : index
    %c0_28 = arith.constant 0 : index
    %c0_29 = arith.constant 0 : index
    %37 = vector.load %arg4[%c1_27, %c0_28, %c0_29] : memref<3x384x768xbf16, #tpu.memory_space<vmem>>, vector<1x384x768xbf16>
    %38 = vector.shape_cast %37 : vector<1x384x768xbf16> to vector<384x768xbf16>
    %cst_30 = arith.constant dense<0.000000e+00> : vector<20x768xf32>
    %39 = tpu.matmul %36, %38, %cst_30 {dimension_numbers = #tpu.dot_dimension_numbers<[1], [0], [0], [1], [0, 0, 1, 1], [], []>} : vector<20x384xbf16>, vector<384x768xbf16>, vector<20x768xf32> -> vector<20x768xf32>
    %40 = arith.addf %34, %39 : vector<20x768xf32>
    %c2 = arith.constant 2 : index
    %c0_31 = arith.constant 0 : index
    %41 = vector.load %arg11[%c2, %c0_31] : memref<22x384xf32, #tpu.memory_space<vmem>>, vector<20x384xf32>
    %42 = arith.truncf %41 : vector<20x384xf32> to vector<20x384xbf16>
    %c2_32 = arith.constant 2 : index
    %c0_33 = arith.constant 0 : index
    %c0_34 = arith.constant 0 : index
    %43 = vector.load %arg4[%c2_32, %c0_33, %c0_34] : memref<3x384x768xbf16, #tpu.memory_space<vmem>>, vector<1x384x768xbf16>
    %44 = vector.shape_cast %43 : vector<1x384x768xbf16> to vector<384x768xbf16>
    %cst_35 = arith.constant dense<0.000000e+00> : vector<20x768xf32>
    %45 = tpu.matmul %42, %44, %cst_35 {dimension_numbers = #tpu.dot_dimension_numbers<[1], [0], [0], [1], [0, 0, 1, 1], [], []>} : vector<20x384xbf16>, vector<384x768xbf16>, vector<20x768xf32> -> vector<20x768xf32>
    %46 = arith.addf %40, %45 : vector<20x768xf32>
    %c0_36 = arith.constant 0 : index
    %c0_37 = arith.constant 0 : index
    %47 = vector.load %arg5[%c0_36, %c0_37] : memref<1x768xf32, #tpu.memory_space<vmem>>, vector<1x768xf32>
    %48 = vector.broadcast %47 : vector<1x768xf32> to vector<20x768xf32>
    %49 = arith.addf %46, %48 : vector<20x768xf32>
    %cst_38 = arith.constant 0.000000e+00 : f32
    %50 = vector.broadcast %cst_38 : f32 to vector<20x768xf32>
    %51 = arith.maximumf %49, %50 : vector<20x768xf32>
    %52 = vector.extract_strided_slice %51 {offsets = [0, 0], sizes = [20, 384], strides = [1, 1]} : vector<20x768xf32> to vector<20x384xf32>
    %53 = vector.extract_strided_slice %51 {offsets = [0, 384], sizes = [20, 384], strides = [1, 1]} : vector<20x768xf32> to vector<20x384xf32>
    %54 = arith.maximumf %52, %53 : vector<20x384xf32>
    %55 = vector.extract_strided_slice %54 {offsets = [0, 0], sizes = [1, 384], strides = [1, 1]} : vector<20x384xf32> to vector<1x384xf32>
    %56 = vector.extract_strided_slice %54 {offsets = [1, 0], sizes = [1, 384], strides = [1, 1]} : vector<20x384xf32> to vector<1x384xf32>
    %57 = arith.maximumf %55, %56 : vector<1x384xf32>
    %58 = vector.extract_strided_slice %54 {offsets = [2, 0], sizes = [1, 384], strides = [1, 1]} : vector<20x384xf32> to vector<1x384xf32>
    %59 = vector.extract_strided_slice %54 {offsets = [3, 0], sizes = [1, 384], strides = [1, 1]} : vector<20x384xf32> to vector<1x384xf32>
    %60 = arith.maximumf %58, %59 : vector<1x384xf32>
    %61 = vector.extract_strided_slice %54 {offsets = [4, 0], sizes = [1, 384], strides = [1, 1]} : vector<20x384xf32> to vector<1x384xf32>
    %62 = vector.extract_strided_slice %54 {offsets = [5, 0], sizes = [1, 384], strides = [1, 1]} : vector<20x384xf32> to vector<1x384xf32>
    %63 = arith.maximumf %61, %62 : vector<1x384xf32>
    %64 = vector.extract_strided_slice %54 {offsets = [6, 0], sizes = [1, 384], strides = [1, 1]} : vector<20x384xf32> to vector<1x384xf32>
    %65 = vector.extract_strided_slice %54 {offsets = [7, 0], sizes = [1, 384], strides = [1, 1]} : vector<20x384xf32> to vector<1x384xf32>
    %66 = arith.maximumf %64, %65 : vector<1x384xf32>
    %67 = tpu.concatenate %57, %60, %63, %66 in 1 : vector<1x384xf32>, vector<1x384xf32>, vector<1x384xf32>, vector<1x384xf32> -> vector<1x1536xf32>
    %68 = vector.extract_strided_slice %54 {offsets = [11, 0], sizes = [1, 384], strides = [1, 1]} : vector<20x384xf32> to vector<1x384xf32>
    %69 = vector.extract_strided_slice %54 {offsets = [12, 0], sizes = [1, 384], strides = [1, 1]} : vector<20x384xf32> to vector<1x384xf32>
    %70 = arith.maximumf %68, %69 : vector<1x384xf32>
    %71 = vector.extract_strided_slice %54 {offsets = [13, 0], sizes = [1, 384], strides = [1, 1]} : vector<20x384xf32> to vector<1x384xf32>
    %72 = vector.extract_strided_slice %54 {offsets = [14, 0], sizes = [1, 384], strides = [1, 1]} : vector<20x384xf32> to vector<1x384xf32>
    %73 = arith.maximumf %71, %72 : vector<1x384xf32>
    %74 = vector.extract_strided_slice %54 {offsets = [15, 0], sizes = [1, 384], strides = [1, 1]} : vector<20x384xf32> to vector<1x384xf32>
    %75 = vector.extract_strided_slice %54 {offsets = [16, 0], sizes = [1, 384], strides = [1, 1]} : vector<20x384xf32> to vector<1x384xf32>
    %76 = arith.maximumf %74, %75 : vector<1x384xf32>
    %77 = vector.extract_strided_slice %54 {offsets = [17, 0], sizes = [1, 384], strides = [1, 1]} : vector<20x384xf32> to vector<1x384xf32>
    %78 = vector.extract_strided_slice %54 {offsets = [18, 0], sizes = [1, 384], strides = [1, 1]} : vector<20x384xf32> to vector<1x384xf32>
    %79 = arith.maximumf %77, %78 : vector<1x384xf32>
    %80 = tpu.concatenate %70, %73, %76, %79 in 1 : vector<1x384xf32>, vector<1x384xf32>, vector<1x384xf32>, vector<1x384xf32> -> vector<1x1536xf32>
    %81 = tpu.concatenate %67, %80 in 0 : vector<1x1536xf32>, vector<1x1536xf32> -> vector<2x1536xf32>
    %82 = arith.truncf %81 : vector<2x1536xf32> to vector<2x1536xbf16>
    %c0_39 = arith.constant 0 : index
    %c0_40 = arith.constant 0 : index
    %83 = vector.load %arg6[%c0_39, %c0_40] : memref<1536x128xbf16, #tpu.memory_space<vmem>>, vector<1536x128xbf16>
    %cst_41 = arith.constant dense<0.000000e+00> : vector<2x128xf32>
    %84 = tpu.matmul %82, %83, %cst_41 {dimension_numbers = #tpu.dot_dimension_numbers<[1], [0], [0], [1], [0, 0, 1, 1], [], []>} : vector<2x1536xbf16>, vector<1536x128xbf16>, vector<2x128xf32> -> vector<2x128xf32>
    %c0_42 = arith.constant 0 : index
    %c0_43 = arith.constant 0 : index
    %85 = vector.load %arg7[%c0_42, %c0_43] : memref<1x128xf32, #tpu.memory_space<vmem>>, vector<1x128xf32>
    %86 = vector.broadcast %85 : vector<1x128xf32> to vector<2x128xf32>
    %87 = arith.addf %84, %86 : vector<2x128xf32>
    %cst_44 = arith.constant 0.000000e+00 : f32
    %88 = vector.broadcast %cst_44 : f32 to vector<2x128xf32>
    %89 = arith.maximumf %87, %88 : vector<2x128xf32>
    %c0_45 = arith.constant 0 : index
    %c0_46 = arith.constant 0 : index
    %90 = vector.load %arg8[%c0_45, %c0_46] : memref<128x128xf32, #tpu.memory_space<vmem>>, vector<128x128xf32>
    %cst_47 = arith.constant dense<0.000000e+00> : vector<2x128xf32>
    %91 = tpu.matmul %89, %90, %cst_47 {dimension_numbers = #tpu.dot_dimension_numbers<[1], [0], [0], [1], [0, 0, 1, 1], [], []>} : vector<2x128xf32>, vector<128x128xf32>, vector<2x128xf32> -> vector<2x128xf32>
    %c0_48 = arith.constant 0 : index
    %c0_49 = arith.constant 0 : index
    %92 = vector.load %arg9[%c0_48, %c0_49] : memref<1x128xf32, #tpu.memory_space<vmem>>, vector<1x128xf32>
    %93 = vector.broadcast %92 : vector<1x128xf32> to vector<2x128xf32>
    %94 = arith.addf %91, %93 : vector<2x128xf32>
    %c0_50 = arith.constant 0 : index
    %c0_51 = arith.constant 0 : index
    %95 = vector.load %arg10[%c0_50, %c0_51] : memref<2x128xf32, #tpu.memory_space<vmem>>, vector<2x128xf32>
    tpu.vector_store %arg10[%c0_50, %c0_51], %94 {strides = array<i32>} : memref<2x128xf32, #tpu.memory_space<vmem>>, vector<2x128xf32>,
    return
  }
  func.func @transform_0(%arg0: i32) -> (i32, i32, i32) {
    %c0_i32 = arith.constant 0 : i32
    %c0_i32_0 = arith.constant 0 : i32
    %c0_i32_1 = arith.constant 0 : i32
    %c0_i32_2 = arith.constant 0 : i32
    return %c0_i32, %c0_i32_0, %c0_i32_1 : i32, i32, i32
  }
  func.func @transform_1(%arg0: i32) -> (i32, i32) {
    %c0_i32 = arith.constant 0 : i32
    %c0_i32_0 = arith.constant 0 : i32
    %c0_i32_1 = arith.constant 0 : i32
    return %c0_i32, %c0_i32_0 : i32, i32
  }
  func.func @transform_2(%arg0: i32) -> (i32, i32) {
    %c0_i32 = arith.constant 0 : i32
    %c0_i32_0 = arith.constant 0 : i32
    %c0_i32_1 = arith.constant 0 : i32
    return %c0_i32, %c0_i32_0 : i32, i32
  }
  func.func @transform_3(%arg0: i32) -> (i32, i32, i32) {
    %c0_i32 = arith.constant 0 : i32
    %c0_i32_0 = arith.constant 0 : i32
    %c0_i32_1 = arith.constant 0 : i32
    %c0_i32_2 = arith.constant 0 : i32
    return %c0_i32, %c0_i32_0, %c0_i32_1 : i32, i32, i32
  }
  func.func @transform_4(%arg0: i32) -> (i32, i32) {
    %c0_i32 = arith.constant 0 : i32
    %c0_i32_0 = arith.constant 0 : i32
    %c0_i32_1 = arith.constant 0 : i32
    return %c0_i32, %c0_i32_0 : i32, i32
  }
  func.func @transform_5(%arg0: i32) -> (i32, i32) {
    %c0_i32 = arith.constant 0 : i32
    %c0_i32_0 = arith.constant 0 : i32
    %c0_i32_1 = arith.constant 0 : i32
    return %c0_i32, %c0_i32_0 : i32, i32
  }
  func.func @transform_6(%arg0: i32) -> (i32, i32) {
    %c0_i32 = arith.constant 0 : i32
    %c0_i32_0 = arith.constant 0 : i32
    %c0_i32_1 = arith.constant 0 : i32
    return %c0_i32, %c0_i32_0 : i32, i32
  }
  func.func @transform_7(%arg0: i32) -> (i32, i32) {
    %c0_i32 = arith.constant 0 : i32
    %c0_i32_0 = arith.constant 0 : i32
    %c0_i32_1 = arith.constant 0 : i32
    return %c0_i32, %c0_i32_0 : i32, i32
  }
  func.func @transform_8(%arg0: i32) -> (i32, i32) {
    %c0_i32 = arith.constant 0 : i32
    %c0_i32_0 = arith.constant 0 : i32
    %c0_i32_1 = arith.constant 0 : i32
    return %c0_i32, %c0_i32_0 : i32, i32
  }
  func.func @transform_9(%arg0: i32) -> (i32, i32) {
    %c0_i32 = arith.constant 0 : i32
    %c0_i32_0 = arith.constant 0 : i32
    %c0_i32_1 = arith.constant 0 : i32
    return %c0_i32, %c0_i32_0 : i32, i32
  }
}

</mosaic_0001>

<llo_original>
// kernel: cnn_net_forward.1
$region0: #{cnn_net_forward.1}
  #allocation0 [shape = 'u32[]', space=smem, size = 0x4, offset = 0x4, fixed_abs, tag = 'smem constant byte address 0x4 - core index']
  #allocation1 [shape = 'u32[144,128]{1,0:T(1,128)}', space=vmem, size = 0x12000, scoped, tag = 'internal scratch']
  #allocation2 [shape = 'f32[22,384]{1,0:T(8,128)}', space=vmem, size = 0x9000, scoped, tag = 'scratch operand']
  %s0 = inlined_call_operand.vmem [shape: bf16[2,18,128], index: 0, kind: input, shape index: {}]
  %s1 = inlined_call_operand.hbm [shape: bf16[128,768], index: 1, kind: input, shape index: {}]
  %s2 = inlined_call_operand.hbm [shape: f32[1,768], index: 2, kind: input, shape index: {}]
  %s3 = inlined_call_operand.hbm [shape: bf16[3,384,768], index: 3, kind: input, shape index: {}]
  %s4 = inlined_call_operand.hbm [shape: f32[1,768], index: 4, kind: input, shape index: {}]
  %s5 = inlined_call_operand.hbm [shape: bf16[1536,128], index: 5, kind: input, shape index: {}]
  %s6 = inlined_call_operand.hbm [shape: f32[1,128], index: 6, kind: input, shape index: {}]
  %s7 = inlined_call_operand.hbm [shape: f32[128,128], index: 7, kind: input, shape index: {}]
  %s8 = inlined_call_operand.hbm [shape: f32[1,128], index: 8, kind: input, shape index: {}]
  %s9 = inlined_call_operand.hbm [shape: f32[2,128], index: 9, kind: output, shape index: {}]
  %s10 = sld [smem:[#allocation0]]
  $region78: #{cnn_net_forward.1} parent=0
    _
  %s12 = ssub.s32 1, %s10
  %s13 = scalar_select 0, %s12, %s10
  $region1: #{cnn_net_forward.1} parent=0
    #allocation3 [shape = 'u8[196608]{0}', space=vmem, size = 0x30000, scoped, tag = 'input window, operand 1, single buffered']
    #allocation4 [shape = 's32[1]{0}', space=sflag, size = 0x4, scoped, tag = 'scoped memory for cnn_net_forward.1']
    #allocation5 [shape = 's32[1]{0}', space=sflag, size = 0x4, scoped, tag = 'scoped memory for cnn_net_forward.1']
    #allocation6 [shape = 'u8[3072]{0}', space=vmem, size = 0xc00, scoped, tag = 'input window, operand 2, single buffered']
    #allocation7 [shape = 's32[1]{0}', space=sflag, size = 0x4, scoped, tag = 'scoped memory for cnn_net_forward.1']
    #allocation8 [shape = 'u8[1769472]{0}', space=vmem, size = 0x1b0000, scoped, tag = 'input window, operand 3, single buffered']
    #allocation9 [shape = 'u8[3072]{0}', space=vmem, size = 0xc00, scoped, tag = 'input window, operand 4, single buffered']
    #allocation10 [shape = 's32[1]{0}', space=sflag, size = 0x4, scoped, tag = 'scoped memory for cnn_net_forward.1']
    #allocation11 [shape = 'u8[393216]{0}', space=vmem, size = 0x60000, scoped, tag = 'input window, operand 5, single buffered']
    #allocation12 [shape = 'u8[512]{0}', space=vmem, size = 0x400, scoped, tag = 'input window, operand 6, single buffered']
    #allocation13 [shape = 's32[1]{0}', space=sflag, size = 0x4, scoped, tag = 'scoped memory for cnn_net_forward.1']
    #allocation14 [shape = 'u8[65536]{0}', space=vmem, size = 0x10000, scoped, tag = 'input window, operand 7, single buffered']
    #allocation15 [shape = 'u8[512]{0}', space=vmem, size = 0x400, scoped, tag = 'input window, operand 8, single buffered']
    #allocation16 [shape = 's32[1]{0}', space=sflag, size = 0x4, scoped, tag = 'scoped memory for cnn_net_forward.1']
    #allocation17 [shape = 'u8[1024]{0}', space=vmem, size = 0x400, scoped, tag = 'output window, operand 0, single buffered']
    %14 = vsyncpa [#allocation4], 0
    %15 = vsyncpa [#allocation7], 0
    %16 = vsyncpa [#allocation10], 0
    %17 = vsyncpa [#allocation13], 0
    %18 = vsyncpa [#allocation16], 0
    %19 = vsyncpa [#allocation5], 0
    // Predicated region
    $region2: #{cnn_net_forward.1} parent=1 // pred_check
      _
    $region3: #{cnn_net_forward.1} parent=1 // pred_check_branch
      %21 = sbr.rel (0) target = $region5
    $region4: #{cnn_net_forward.1} parent=1 // pred_region
      _
    $region5: #{cnn_net_forward.1} parent=1 // pred_fallthru
      _
    // Predicated region
    $region6: #{cnn_net_forward.1} parent=1 // pred_check
      _
    $region7: #{cnn_net_forward.1} parent=1 // pred_check_branch
      %23 = sbr.rel (0) target = $region9
    $region8: #{cnn_net_forward.1} parent=1 // pred_region
      %s25 = ssub.s32 6144, 6144
      %26 = vsyncadd [#allocation4], %s25
      %s27 = sshll.u32 [#allocation3], 4
      %s28 = int_to_ptr.vmem [resolvable:$true] %s27
      %33 = dma.hbm_to_vmem [thread:$0]  %s1, 6144, %s28, [#allocation4], 384, 384, 24
    $region9: #{cnn_net_forward.1} parent=1 // pred_fallthru
      _
    // Predicated region
    $region10: #{cnn_net_forward.1} parent=1 // pred_check
      _
    $region11: #{cnn_net_forward.1} parent=1 // pred_check_branch
      %35 = sbr.rel (0) target = $region13
    $region12: #{cnn_net_forward.1} parent=1 // pred_region
      %s37 = ssub.s32 96, 96
      %38 = vsyncadd [#allocation7], %s37
      %s40 = sshll.u32 [#allocation6], 4
      %s41 = int_to_ptr.vmem [resolvable:$true] %s40
      %43 = dma.hbm_to_vmem [thread:$0]  %s2, 96, %s41, [#allocation7]
    $region13: #{cnn_net_forward.1} parent=1 // pred_fallthru
      _
    // Predicated region
    $region14: #{cnn_net_forward.1} parent=1 // pred_check
      _
    $region15: #{cnn_net_forward.1} parent=1 // pred_check_branch
      %45 = sbr.rel (0) target = $region17
    $region16: #{cnn_net_forward.1} parent=1 // pred_region
      %s47 = ssub.s32 55296, 55296
      %48 = vsyncadd [#allocation7], %s47
      %s49 = sshll.u32 [#allocation8], 4
      %s50 = int_to_ptr.vmem [resolvable:$true] %s49
      %55 = dma.hbm_to_vmem [thread:$0]  %s3, 55296, %s50, [#allocation7], 384, 384, 24
    $region17: #{cnn_net_forward.1} parent=1 // pred_fallthru
      _
    // Predicated region
    $region18: #{cnn_net_forward.1} parent=1 // pred_check
      _
    $region19: #{cnn_net_forward.1} parent=1 // pred_check_branch
      %57 = sbr.rel (0) target = $region21
    $region20: #{cnn_net_forward.1} parent=1 // pred_region
      %s59 = ssub.s32 96, 96
      %60 = vsyncadd [#allocation10], %s59
      %s62 = sshll.u32 [#allocation9], 4
      %s63 = int_to_ptr.vmem [resolvable:$true] %s62
      %65 = dma.hbm_to_vmem [thread:$0]  %s4, 96, %s63, [#allocation10]
    $region21: #{cnn_net_forward.1} parent=1 // pred_fallthru
      _
    // Predicated region
    $region22: #{cnn_net_forward.1} parent=1 // pred_check
      _
    $region23: #{cnn_net_forward.1} parent=1 // pred_check_branch
      %67 = sbr.rel (0) target = $region25
    $region24: #{cnn_net_forward.1} parent=1 // pred_region
      %s69 = ssub.s32 12288, 12288
      %70 = vsyncadd [#allocation10], %s69
      %s71 = sshll.u32 [#allocation11], 4
      %s72 = int_to_ptr.vmem [resolvable:$true] %s71
      %77 = dma.hbm_to_vmem [thread:$0]  %s5, 12288, %s72, [#allocation10], 64, 64, 4
    $region25: #{cnn_net_forward.1} parent=1 // pred_fallthru
      _
    // Predicated region
    $region26: #{cnn_net_forward.1} parent=1 // pred_check
      _
    $region27: #{cnn_net_forward.1} parent=1 // pred_check_branch
      %79 = sbr.rel (0) target = $region29
    $region28: #{cnn_net_forward.1} parent=1 // pred_region
      %s81 = ssub.s32 16, 16
      %82 = vsyncadd [#allocation13], %s81
      %s84 = sshll.u32 [#allocation12], 4
      %s85 = int_to_ptr.vmem [resolvable:$true] %s84
      %87 = dma.hbm_to_vmem [thread:$0]  %s6, 16, %s85, [#allocation13]
    $region29: #{cnn_net_forward.1} parent=1 // pred_fallthru
      _
    // Predicated region
    $region30: #{cnn_net_forward.1} parent=1 // pred_check
      _
    $region31: #{cnn_net_forward.1} parent=1 // pred_check_branch
      %89 = sbr.rel (0) target = $region33
    $region32: #{cnn_net_forward.1} parent=1 // pred_region
      %s91 = ssub.s32 2048, 2048
      %92 = vsyncadd [#allocation13], %s91
      %s93 = sshll.u32 [#allocation14], 4
      %s94 = int_to_ptr.vmem [resolvable:$true] %s93
      %99 = dma.hbm_to_vmem [thread:$0]  %s7, 2048, %s94, [#allocation13], 128, 128, 8
    $region33: #{cnn_net_forward.1} parent=1 // pred_fallthru
      _
    // Predicated region
    $region34: #{cnn_net_forward.1} parent=1 // pred_check
      _
    $region35: #{cnn_net_forward.1} parent=1 // pred_check_branch
      %101 = sbr.rel (0) target = $region37
    $region36: #{cnn_net_forward.1} parent=1 // pred_region
      %s103 = ssub.s32 16, 16
      %104 = vsyncadd [#allocation16], %s103
      %s106 = sshll.u32 [#allocation15], 4
      %s107 = int_to_ptr.vmem [resolvable:$true] %s106
      %109 = dma.hbm_to_vmem [thread:$0]  %s8, 16, %s107, [#allocation16]
    $region37: #{cnn_net_forward.1} parent=1 // pred_fallthru
      _
    // Predicated region
    $region38: #{cnn_net_forward.1} parent=1 // pred_check
      _
    $region39: #{cnn_net_forward.1} parent=1 // pred_check_branch
      %111 = sbr.rel (0) target = $region41
    $region40: #{cnn_net_forward.1} parent=1 // pred_region
      %112 = dma.done [#allocation4], 6144
    $region41: #{cnn_net_forward.1} parent=1 // pred_fallthru
      _
    // Predicated region
    $region42: #{cnn_net_forward.1} parent=1 // pred_check
      _
    $region43: #{cnn_net_forward.1} parent=1 // pred_check_branch
      %114 = sbr.rel (0) target = $region45
    $region44: #{cnn_net_forward.1} parent=1 // pred_region
      %115 = dma.done [#allocation7], 96
    $region45: #{cnn_net_forward.1} parent=1 // pred_fallthru
      _
    // Predicated region
    $region46: #{cnn_net_forward.1} parent=1 // pred_check
      _
    $region47: #{cnn_net_forward.1} parent=1 // pred_check_branch
      %117 = sbr.rel (0) target = $region49
    $region48: #{cnn_net_forward.1} parent=1 // pred_region
      %118 = dma.done [#allocation7], 55296
    $region49: #{cnn_net_forward.1} parent=1 // pred_fallthru
      _
    // Predicated region
    $region50: #{cnn_net_forward.1} parent=1 // pred_check
      _
    $region51: #{cnn_net_forward.1} parent=1 // pred_check_branch
      %120 = sbr.rel (0) target = $region53
    $region52: #{cnn_net_forward.1} parent=1 // pred_region
      %121 = dma.done [#allocation10], 96
    $region53: #{cnn_net_forward.1} parent=1 // pred_fallthru
      _
    // Predicated region
    $region54: #{cnn_net_forward.1} parent=1 // pred_check
      _
    $region55: #{cnn_net_forward.1} parent=1 // pred_check_branch
      %123 = sbr.rel (0) target = $region57
    $region56: #{cnn_net_forward.1} parent=1 // pred_region
      %124 = dma.done [#allocation10], 12288
    $region57: #{cnn_net_forward.1} parent=1 // pred_fallthru
      _
    // Predicated region
    $region58: #{cnn_net_forward.1} parent=1 // pred_check
      _
    $region59: #{cnn_net_forward.1} parent=1 // pred_check_branch
      %126 = sbr.rel (0) target = $region61
    $region60: #{cnn_net_forward.1} parent=1 // pred_region
      %127 = dma.done [#allocation13], 16
    $region61: #{cnn_net_forward.1} parent=1 // pred_fallthru
      _
    // Predicated region
    $region62: #{cnn_net_forward.1} parent=1 // pred_check
      _
    $region63: #{cnn_net_forward.1} parent=1 // pred_check_branch
      %129 = sbr.rel (0) target = $region65
    $region64: #{cnn_net_forward.1} parent=1 // pred_region
      %130 = dma.done [#allocation13], 2048
    $region65: #{cnn_net_forward.1} parent=1 // pred_fallthru
      _
    // Predicated region
    $region66: #{cnn_net_forward.1} parent=1 // pred_check
      _
    $region67: #{cnn_net_forward.1} parent=1 // pred_check_branch
      %132 = sbr.rel (0) target = $region69
    $region68: #{cnn_net_forward.1} parent=1 // pred_region
      %133 = dma.done [#allocation16], 16
    $region69: #{cnn_net_forward.1} parent=1 // pred_fallthru
      _
    %v135 = vld [vmem:[#allocation3] sm:$0xff]
    %v136 = vld [vmem:[#allocation3 + $0x8] sm:$0xff]
    %v137 = vld [vmem:[#allocation3 + $0x10] sm:$0xff]
    %v138 = vld [vmem:[#allocation3 + $0x18] sm:$0xff]
    %v139 = vld [vmem:[#allocation3 + $0x20] sm:$0xff]
    %v140 = vld [vmem:[#allocation3 + $0x28] sm:$0xff]
    %v141 = vld [vmem:[#allocation3 + $0x30] sm:$0xff]
    %v142 = vld [vmem:[#allocation3 + $0x38] sm:$0xff]
    %v143 = vld [vmem:[#allocation3 + $0x40] sm:$0xff]
    %v144 = vld [vmem:[#allocation3 + $0x48] sm:$0xff]
    %v145 = vld [vmem:[#allocation3 + $0x50] sm:$0xff]
    %v146 = vld [vmem:[#allocation3 + $0x58] sm:$0xff]
    %v147 = vld [vmem:[#allocation3 + $0x60] sm:$0xff]
    %v148 = vld [vmem:[#allocation3 + $0x68] sm:$0xff]
    %v149 = vld [vmem:[#allocation3 + $0x70] sm:$0xff]
    %v150 = vld [vmem:[#allocation3 + $0x78] sm:$0xff]
    %v151 = vld [vmem:[#allocation3 + $0x80] sm:$0xff]
    %v152 = vld [vmem:[#allocation3 + $0x88] sm:$0xff]
    %v153 = vld [vmem:[#allocation3 + $0x90] sm:$0xff]
    %v154 = vld [vmem:[#allocation3 + $0x98] sm:$0xff]
    %v155 = vld [vmem:[#allocation3 + $0xa0] sm:$0xff]
    %v156 = vld [vmem:[#allocation3 + $0xa8] sm:$0xff]
    %v157 = vld [vmem:[#allocation3 + $0xb0] sm:$0xff]
    %v158 = vld [vmem:[#allocation3 + $0xb8] sm:$0xff]
    %v159 = vld [vmem:[#allocation3 + $0xc0] sm:$0xff]
    %v160 = vld [vmem:[#allocation3 + $0xc8] sm:$0xff]
    %v161 = vld [vmem:[#allocation3 + $0xd0] sm:$0xff]
    %v162 = vld [vmem:[#allocation3 + $0xd8] sm:$0xff]
    %v163 = vld [vmem:[#allocation3 + $0xe0] sm:$0xff]
    %v164 = vld [vmem:[#allocation3 + $0xe8] sm:$0xff]
    %v165 = vld [vmem:[#allocation3 + $0xf0] sm:$0xff]
    %v166 = vld [vmem:[#allocation3 + $0xf8] sm:$0xff]
    %v167 = vld [vmem:[#allocation3 + $0x100] sm:$0xff]
    %v168 = vld [vmem:[#allocation3 + $0x108] sm:$0xff]
    %v169 = vld [vmem:[#allocation3 + $0x110] sm:$0xff]
    %v170 = vld [vmem:[#allocation3 + $0x118] sm:$0xff]
    %v171 = vld [vmem:[#allocation3 + $0x120] sm:$0xff]
    %v172 = vld [vmem:[#allocation3 + $0x128] sm:$0xff]
    %v173 = vld [vmem:[#allocation3 + $0x130] sm:$0xff]
    %v174 = vld [vmem:[#allocation3 + $0x138] sm:$0xff]
    %v175 = vld [vmem:[#allocation3 + $0x140] sm:$0xff]
    %v176 = vld [vmem:[#allocation3 + $0x148] sm:$0xff]
    %v177 = vld [vmem:[#allocation3 + $0x150] sm:$0xff]
    %v178 = vld [vmem:[#allocation3 + $0x158] sm:$0xff]
    %v179 = vld [vmem:[#allocation3 + $0x160] sm:$0xff]
    %v180 = vld [vmem:[#allocation3 + $0x168] sm:$0xff]
    %v181 = vld [vmem:[#allocation3 + $0x170] sm:$0xff]
    %v182 = vld [vmem:[#allocation3 + $0x178] sm:$0xff]
    %v183 = vld [vmem:[%s0] sm:$0xf]
    %v184 = vld [vmem:[%s0 + $0x4] sm:$0xf]
    %v185 = vld [vmem:[%s0 + $0x8] sm:$0x1]
    %v186 = vld [vmem:[#allocation6] sm:$0x3f]
    %v188 = vlaneseq
    %v189 = vshrl.u32 %v188, 7
    %v190 = vsub.s32 0, %v189
    %v191 = vrot.slane %v186, %v190
    %v192 = vlaneseq
    %v193 = vshrl.u32 %v192, 7
    %v194 = vsub.s32 1, %v193
    %v195 = vrot.slane %v186, %v194
    %v196 = vlaneseq
    %v197 = vshrl.u32 %v196, 7
    %v198 = vsub.s32 2, %v197
    %v199 = vrot.slane %v186, %v198
    %v200 = vlaneseq
    %v201 = vshrl.u32 %v200, 7
    %v202 = vsub.s32 3, %v201
    %v203 = vrot.slane %v186, %v202
    %v204 = vlaneseq
    %v205 = vshrl.u32 %v204, 7
    %v206 = vsub.s32 4, %v205
    %v207 = vrot.slane %v186, %v206
    %v208 = vlaneseq
    %v209 = vshrl.u32 %v208, 7
    %v210 = vsub.s32 5, %v209
    %v211 = vrot.slane %v186, %v210
    %v221 = vunpack.c.l.b16 %v183
    %v222 = vunpack.c.l.b16 %v184
    %v223 = vunpack.c.l.b16 %v185
    %v224 = vpack.c.b16 %v222, %v221
    %v225 = vpack.c.b16 %v223, %v223
    %v276 = vunpack.c.l.b16 %v135
    %v277 = vunpack.c.h.b16 %v135
    %v278 = vunpack.c.l.b16 %v136
    %v279 = vunpack.c.h.b16 %v136
    %v280 = vunpack.c.l.b16 %v137
    %v281 = vunpack.c.h.b16 %v137
    %v282 = vunpack.c.l.b16 %v138
    %v283 = vunpack.c.h.b16 %v138
    %v284 = vunpack.c.l.b16 %v139
    %v285 = vunpack.c.h.b16 %v139
    %v286 = vunpack.c.l.b16 %v140
    %v287 = vunpack.c.h.b16 %v140
    %v288 = vunpack.c.l.b16 %v141
    %v289 = vunpack.c.h.b16 %v141
    %v290 = vunpack.c.l.b16 %v142
    %v291 = vunpack.c.h.b16 %v142
    %v292 = vunpack.c.l.b16 %v143
    %v293 = vunpack.c.h.b16 %v143
    %v294 = vunpack.c.l.b16 %v144
    %v295 = vunpack.c.h.b16 %v144
    %v296 = vunpack.c.l.b16 %v145
    %v297 = vunpack.c.h.b16 %v145
    %v298 = vunpack.c.l.b16 %v146
    %v299 = vunpack.c.h.b16 %v146
    %v300 = vunpack.c.l.b16 %v147
    %v301 = vunpack.c.h.b16 %v147
    %v302 = vunpack.c.l.b16 %v148
    %v303 = vunpack.c.h.b16 %v148
    %v304 = vunpack.c.l.b16 %v149
    %v305 = vunpack.c.h.b16 %v149
    %v306 = vunpack.c.l.b16 %v150
    %v307 = vunpack.c.h.b16 %v150
    %v308 = vunpack.c.l.b16 %v151
    %v309 = vunpack.c.h.b16 %v151
    %v310 = vunpack.c.l.b16 %v152
    %v311 = vunpack.c.h.b16 %v152
    %v312 = vunpack.c.l.b16 %v153
    %v313 = vunpack.c.h.b16 %v153
    %v314 = vunpack.c.l.b16 %v154
    %v315 = vunpack.c.h.b16 %v154
    %v316 = vunpack.c.l.b16 %v155
    %v317 = vunpack.c.h.b16 %v155
    %v318 = vunpack.c.l.b16 %v156
    %v319 = vunpack.c.h.b16 %v156
    %v320 = vunpack.c.l.b16 %v157
    %v321 = vunpack.c.h.b16 %v157
    %v322 = vunpack.c.l.b16 %v158
    %v323 = vunpack.c.h.b16 %v158
    %v324 = vunpack.c.l.b16 %v159
    %v325 = vunpack.c.h.b16 %v159
    %v326 = vunpack.c.l.b16 %v160
    %v327 = vunpack.c.h.b16 %v160
    %v328 = vunpack.c.l.b16 %v161
    %v329 = vunpack.c.h.b16 %v161
    %v330 = vunpack.c.l.b16 %v162
    %v331 = vunpack.c.h.b16 %v162
    %v332 = vunpack.c.l.b16 %v163
    %v333 = vunpack.c.h.b16 %v163
    %v334 = vunpack.c.l.b16 %v164
    %v335 = vunpack.c.h.b16 %v164
    %v336 = vunpack.c.l.b16 %v165
    %v337 = vunpack.c.h.b16 %v165
    %v338 = vunpack.c.l.b16 %v166
    %v339 = vunpack.c.h.b16 %v166
    %v340 = vunpack.c.l.b16 %v167
    %v341 = vunpack.c.h.b16 %v167
    %v342 = vunpack.c.l.b16 %v168
    %v343 = vunpack.c.h.b16 %v168
    %v344 = vunpack.c.l.b16 %v169
    %v345 = vunpack.c.h.b16 %v169
    %v346 = vunpack.c.l.b16 %v170
    %v347 = vunpack.c.h.b16 %v170
    %v348 = vunpack.c.l.b16 %v171
    %v349 = vunpack.c.h.b16 %v171
    %v350 = vunpack.c.l.b16 %v172
    %v351 = vunpack.c.h.b16 %v172
    %v352 = vunpack.c.l.b16 %v173
    %v353 = vunpack.c.h.b16 %v173
    %v354 = vunpack.c.l.b16 %v174
    %v355 = vunpack.c.h.b16 %v174
    %v356 = vunpack.c.l.b16 %v175
    %v357 = vunpack.c.h.b16 %v175
    %v358 = vunpack.c.l.b16 %v176
    %v359 = vunpack.c.h.b16 %v176
    %v360 = vunpack.c.l.b16 %v177
    %v361 = vunpack.c.h.b16 %v177
    %v362 = vunpack.c.l.b16 %v178
    %v363 = vunpack.c.h.b16 %v178
    %v364 = vunpack.c.l.b16 %v179
    %v365 = vunpack.c.h.b16 %v179
    %v366 = vunpack.c.l.b16 %v180
    %v367 = vunpack.c.h.b16 %v180
    %v368 = vunpack.c.l.b16 %v181
    %v369 = vunpack.c.h.b16 %v181
    %v370 = vunpack.c.l.b16 %v182
    %v371 = vunpack.c.h.b16 %v182
    %v372 = vpack.c.b16 %v282, %v276
    %v373 = vpack.c.b16 %v283, %v277
    %v374 = vpack.c.b16 %v284, %v278
    %v375 = vpack.c.b16 %v285, %v279
    %v376 = vpack.c.b16 %v286, %v280
    %v377 = vpack.c.b16 %v287, %v281
    %v378 = vpack.c.b16 %v294, %v288
    %v379 = vpack.c.b16 %v295, %v289
    %v380 = vpack.c.b16 %v296, %v290
    %v381 = vpack.c.b16 %v297, %v291
    %v382 = vpack.c.b16 %v298, %v292
    %v383 = vpack.c.b16 %v299, %v293
    %v384 = vpack.c.b16 %v306, %v300
    %v385 = vpack.c.b16 %v307, %v301
    %v386 = vpack.c.b16 %v308, %v302
    %v387 = vpack.c.b16 %v309, %v303
    %v388 = vpack.c.b16 %v310, %v304
    %v389 = vpack.c.b16 %v311, %v305
    %v390 = vpack.c.b16 %v318, %v312
    %v391 = vpack.c.b16 %v319, %v313
    %v392 = vpack.c.b16 %v320, %v314
    %v393 = vpack.c.b16 %v321, %v315
    %v394 = vpack.c.b16 %v322, %v316
    %v395 = vpack.c.b16 %v323, %v317
    %v396 = vpack.c.b16 %v330, %v324
    %v397 = vpack.c.b16 %v331, %v325
    %v398 = vpack.c.b16 %v332, %v326
    %v399 = vpack.c.b16 %v333, %v327
    %v400 = vpack.c.b16 %v334, %v328
    %v401 = vpack.c.b16 %v335, %v329
    %v402 = vpack.c.b16 %v342, %v336
    %v403 = vpack.c.b16 %v343, %v337
    %v404 = vpack.c.b16 %v344, %v338
    %v405 = vpack.c.b16 %v345, %v339
    %v406 = vpack.c.b16 %v346, %v340
    %v407 = vpack.c.b16 %v347, %v341
    %v408 = vpack.c.b16 %v354, %v348
    %v409 = vpack.c.b16 %v355, %v349
    %v410 = vpack.c.b16 %v356, %v350
    %v411 = vpack.c.b16 %v357, %v351
    %v412 = vpack.c.b16 %v358, %v352
    %v413 = vpack.c.b16 %v359, %v353
    %v414 = vpack.c.b16 %v366, %v360
    %v415 = vpack.c.b16 %v367, %v361
    %v416 = vpack.c.b16 %v368, %v362
    %v417 = vpack.c.b16 %v369, %v363
    %v418 = vpack.c.b16 %v370, %v364
    %v419 = vpack.c.b16 %v371, %v365
    %468 = vmatprep.subr.bf16.mxu0 %v415
    %469 = vmatpush1.bf16.msra.mxu0 %v414
    %470 = vmatprep.subr.bf16.mxu0 %v409
    %471 = vmatpush1.bf16.msra.mxu0 %v408
    %472 = vmatprep.subr.bf16.mxu0 %v403
    %473 = vmatpush1.bf16.msra.mxu0 %v402
    %474 = vmatprep.subr.bf16.mxu0 %v397
    %475 = vmatpush1.bf16.msra.mxu0 %v396
    %476 = vmatprep.subr.bf16.mxu0 %v391
    %477 = vmatpush1.bf16.msra.mxu0 %v390
    %478 = vmatprep.subr.bf16.mxu0 %v385
    %479 = vmatpush1.bf16.msra.mxu0 %v384
    %480 = vmatprep.subr.bf16.mxu0 %v379
    %481 = vmatpush1.bf16.msra.mxu0 %v378
    %482 = vmatprep.subr.bf16.mxu0 %v373
    %483 = vmatpush1.bf16.msra.mxu0 %v372
    %484 = vmatprep.subr.bf16.mxu0 0
    %485 = vmatpush2.bf16.msra.mxu0 0
    %486 = vmatprep.subr.bf16.mxu0 0
    %487 = vmatpush2.bf16.msra.mxu0 0
    %488 = vmatprep.subr.bf16.mxu0 0
    %489 = vmatpush2.bf16.msra.mxu0 0
    %490 = vmatprep.subr.bf16.mxu0 0
    %491 = vmatpush2.bf16.msra.mxu0 0
    %492 = vmatprep.subr.bf16.mxu0 0
    %493 = vmatpush2.bf16.msra.mxu0 0
    %494 = vmatprep.subr.bf16.mxu0 0
    %495 = vmatpush2.bf16.msra.mxu0 0
    %496 = vmatprep.subr.bf16.mxu0 0
    %497 = vmatpush2.bf16.msra.mxu0 0
    %498 = vmatprep.subr.bf16.mxu0 0
    %499 = vmatpush2.bf16.msra.mxu0 0
    %500 = vmatprep.mubr.bf16.mxu0 0
    %501 = vmatmul.mubr.bf16.gmra.mxu0 %v224
    %v502 = vpop.f32.mrf.mxu0
    %v503 = vadd.f32 %v191, %v502
    %v504 = vpop.f32.mrf.mxu0
    %v505 = vadd.f32 %v195, %v504
    %v506 = vpop.f32.mrf.mxu0
    %v507 = vadd.f32 %v191, %v506
    %v508 = vpop.f32.mrf.mxu0
    %v509 = vadd.f32 %v195, %v508
    %510 = vmatprep.mubr.bf16.mxu0 0
    %511 = vmatmul.mubr.bf16.gmra.mxu0 %v225
    %v512 = vpop.f32.mrf.mxu0
    %v513 = vadd.f32 %v191, %v512
    %v514 = vpop.f32.mrf.mxu0
    %v515 = vadd.f32 %v195, %v514
    %v516 = vpop.f32.mrf.mxu0
    %v517 = vpop.f32.mrf.mxu0
    %518 = vdwg.mxu0
    %519 = vmatprep.subr.bf16.mxu0 %v417
    %520 = vmatpush1.bf16.msra.mxu0 %v416
    %521 = vmatprep.subr.bf16.mxu0 %v411
    %522 = vmatpush1.bf16.msra.mxu0 %v410
    %523 = vmatprep.subr.bf16.mxu0 %v405
    %524 = vmatpush1.bf16.msra.mxu0 %v404
    %525 = vmatprep.subr.bf16.mxu0 %v399
    %526 = vmatpush1.bf16.msra.mxu0 %v398
    %527 = vmatprep.subr.bf16.mxu0 %v393
    %528 = vmatpush1.bf16.msra.mxu0 %v392
    %529 = vmatprep.subr.bf16.mxu0 %v387
    %530 = vmatpush1.bf16.msra.mxu0 %v386
    %531 = vmatprep.subr.bf16.mxu0 %v381
    %532 = vmatpush1.bf16.msra.mxu0 %v380
    %533 = vmatprep.subr.bf16.mxu0 %v375
    %534 = vmatpush1.bf16.msra.mxu0 %v374
    %535 = vmatprep.subr.bf16.mxu0 0
    %536 = vmatpush2.bf16.msra.mxu0 0
    %537 = vmatprep.subr.bf16.mxu0 0
    %538 = vmatpush2.bf16.msra.mxu0 0
    %539 = vmatprep.subr.bf16.mxu0 0
    %540 = vmatpush2.bf16.msra.mxu0 0
    %541 = vmatprep.subr.bf16.mxu0 0
    %542 = vmatpush2.bf16.msra.mxu0 0
    %543 = vmatprep.subr.bf16.mxu0 0
    %544 = vmatpush2.bf16.msra.mxu0 0
    %545 = vmatprep.subr.bf16.mxu0 0
    %546 = vmatpush2.bf16.msra.mxu0 0
    %547 = vmatprep.subr.bf16.mxu0 0
    %548 = vmatpush2.bf16.msra.mxu0 0
    %549 = vmatprep.subr.bf16.mxu0 0
    %550 = vmatpush2.bf16.msra.mxu0 0
    %551 = vmatprep.mubr.bf16.mxu0 0
    %552 = vmatmul.mubr.bf16.gmra.mxu0 %v224
    %v553 = vpop.f32.mrf.mxu0
    %v554 = vadd.f32 %v199, %v553
    %v555 = vpop.f32.mrf.mxu0
    %v556 = vadd.f32 %v203, %v555
    %v557 = vpop.f32.mrf.mxu0
    %v558 = vadd.f32 %v199, %v557
    %v559 = vpop.f32.mrf.mxu0
    %v560 = vadd.f32 %v203, %v559
    %561 = vmatprep.mubr.bf16.mxu0 0
    %562 = vmatmul.mubr.bf16.gmra.mxu0 %v225
    %v563 = vpop.f32.mrf.mxu0
    %v564 = vadd.f32 %v199, %v563
    %v565 = vpop.f32.mrf.mxu0
    %v566 = vadd.f32 %v203, %v565
    %v567 = vpop.f32.mrf.mxu0
    %v568 = vpop.f32.mrf.mxu0
    %569 = vdwg.mxu0
    %570 = vmatprep.subr.bf16.mxu0 %v419
    %571 = vmatpush1.bf16.msra.mxu0 %v418
    %572 = vmatprep.subr.bf16.mxu0 %v413
    %573 = vmatpush1.bf16.msra.mxu0 %v412
    %574 = vmatprep.subr.bf16.mxu0 %v407
    %575 = vmatpush1.bf16.msra.mxu0 %v406
    %576 = vmatprep.subr.bf16.mxu0 %v401
    %577 = vmatpush1.bf16.msra.mxu0 %v400
    %578 = vmatprep.subr.bf16.mxu0 %v395
    %579 = vmatpush1.bf16.msra.mxu0 %v394
    %580 = vmatprep.subr.bf16.mxu0 %v389
    %581 = vmatpush1.bf16.msra.mxu0 %v388
    %582 = vmatprep.subr.bf16.mxu0 %v383
    %583 = vmatpush1.bf16.msra.mxu0 %v382
    %584 = vmatprep.subr.bf16.mxu0 %v377
    %585 = vmatpush1.bf16.msra.mxu0 %v376
    %586 = vmatprep.subr.bf16.mxu0 0
    %587 = vmatpush2.bf16.msra.mxu0 0
    %588 = vmatprep.subr.bf16.mxu0 0
    %589 = vmatpush2.bf16.msra.mxu0 0
    %590 = vmatprep.subr.bf16.mxu0 0
    %591 = vmatpush2.bf16.msra.mxu0 0
    %592 = vmatprep.subr.bf16.mxu0 0
    %593 = vmatpush2.bf16.msra.mxu0 0
    %594 = vmatprep.subr.bf16.mxu0 0
    %595 = vmatpush2.bf16.msra.mxu0 0
    %596 = vmatprep.subr.bf16.mxu0 0
    %597 = vmatpush2.bf16.msra.mxu0 0
    %598 = vmatprep.subr.bf16.mxu0 0
    %599 = vmatpush2.bf16.msra.mxu0 0
    %600 = vmatprep.subr.bf16.mxu0 0
    %601 = vmatpush2.bf16.msra.mxu0 0
    %602 = vmatprep.mubr.bf16.mxu0 0
    %603 = vmatmul.mubr.bf16.gmra.mxu0 %v224
    %v604 = vpop.f32.mrf.mxu0
    %v605 = vadd.f32 %v207, %v604
    %v606 = vpop.f32.mrf.mxu0
    %v607 = vadd.f32 %v211, %v606
    %v608 = vpop.f32.mrf.mxu0
    %v609 = vadd.f32 %v207, %v608
    %v610 = vpop.f32.mrf.mxu0
    %v611 = vadd.f32 %v211, %v610
    %612 = vmatprep.mubr.bf16.mxu0 0
    %613 = vmatmul.mubr.bf16.gmra.mxu0 %v225
    %v614 = vpop.f32.mrf.mxu0
    %v615 = vadd.f32 %v207, %v614
    %v616 = vpop.f32.mrf.mxu0
    %v617 = vadd.f32 %v211, %v616
    %v618 = vpop.f32.mrf.mxu0
    %v619 = vpop.f32.mrf.mxu0
    %620 = vdwg.mxu0
    %v621 = vmax.f32 %v503, 0.0
    %v622 = vmax.f32 %v505, 0.0
    %v623 = vmax.f32 %v554, 0.0
    %v624 = vmax.f32 %v556, 0.0
    %v625 = vmax.f32 %v605, 0.0
    %v626 = vmax.f32 %v607, 0.0
    %v627 = vmax.f32 %v507, 0.0
    %v628 = vmax.f32 %v509, 0.0
    %v629 = vmax.f32 %v558, 0.0
    %v630 = vmax.f32 %v560, 0.0
    %v631 = vmax.f32 %v609, 0.0
    %v632 = vmax.f32 %v611, 0.0
    %v633 = vmax.f32 %v513, 0.0
    %v634 = vmax.f32 %v515, 0.0
    %v635 = vmax.f32 %v564, 0.0
    %v636 = vmax.f32 %v566, 0.0
    %v637 = vmax.f32 %v615, 0.0
    %v638 = vmax.f32 %v617, 0.0
    %s639 = scalar_lea.vmem %s0, 12
    %v640 = vld [vmem:[%s639] sm:$0xf]
    %v641 = vld [vmem:[%s639 + $0x4] sm:$0xf]
    %v642 = vld [vmem:[%s639 + $0x8] sm:$0x1]
    %v646 = vunpack.c.l.b16 %v640
    %v647 = vunpack.c.l.b16 %v641
    %v648 = vunpack.c.l.b16 %v642
    %v649 = vpack.c.b16 %v647, %v646
    %v650 = vpack.c.b16 %v648, %v648
    %653 = vmatprep.subr.bf16.mxu0 %v415
    %654 = vmatpush1.bf16.msra.mxu0 %v414
    %655 = vmatprep.subr.bf16.mxu0 %v409
    %656 = vmatpush1.bf16.msra.mxu0 %v408
    %657 = vmatprep.subr.bf16.mxu0 %v403
    %658 = vmatpush1.bf16.msra.mxu0 %v402
    %659 = vmatprep.subr.bf16.mxu0 %v397
    %660 = vmatpush1.bf16.msra.mxu0 %v396
    %661 = vmatprep.subr.bf16.mxu0 %v391
    %662 = vmatpush1.bf16.msra.mxu0 %v390
    %663 = vmatprep.subr.bf16.mxu0 %v385
    %664 = vmatpush1.bf16.msra.mxu0 %v384
    %665 = vmatprep.subr.bf16.mxu0 %v379
    %666 = vmatpush1.bf16.msra.mxu0 %v378
    %667 = vmatprep.subr.bf16.mxu0 %v373
    %668 = vmatpush1.bf16.msra.mxu0 %v372
    %669 = vmatprep.subr.bf16.mxu0 0
    %670 = vmatpush2.bf16.msra.mxu0 0
    %671 = vmatprep.subr.bf16.mxu0 0
    %672 = vmatpush2.bf16.msra.mxu0 0
    %673 = vmatprep.subr.bf16.mxu0 0
    %674 = vmatpush2.bf16.msra.mxu0 0
    %675 = vmatprep.subr.bf16.mxu0 0
    %676 = vmatpush2.bf16.msra.mxu0 0
    %677 = vmatprep.subr.bf16.mxu0 0
    %678 = vmatpush2.bf16.msra.mxu0 0
    %679 = vmatprep.subr.bf16.mxu0 0
    %680 = vmatpush2.bf16.msra.mxu0 0
    %681 = vmatprep.subr.bf16.mxu0 0
    %682 = vmatpush2.bf16.msra.mxu0 0
    %683 = vmatprep.subr.bf16.mxu0 0
    %684 = vmatpush2.bf16.msra.mxu0 0
    %685 = vmatprep.mubr.bf16.mxu0 0
    %686 = vmatmul.mubr.bf16.gmra.mxu0 %v649
    %v687 = vpop.f32.mrf.mxu0
    %v688 = vadd.f32 %v191, %v687
    %v689 = vpop.f32.mrf.mxu0
    %v690 = vadd.f32 %v195, %v689
    %v691 = vpop.f32.mrf.mxu0
    %v692 = vadd.f32 %v191, %v691
    %v693 = vpop.f32.mrf.mxu0
    %v694 = vadd.f32 %v195, %v693
    %695 = vmatprep.mubr.bf16.mxu0 0
    %696 = vmatmul.mubr.bf16.gmra.mxu0 %v650
    %v697 = vpop.f32.mrf.mxu0
    %v698 = vadd.f32 %v191, %v697
    %v699 = vpop.f32.mrf.mxu0
    %v700 = vadd.f32 %v195, %v699
    %v701 = vpop.f32.mrf.mxu0
    %v702 = vpop.f32.mrf.mxu0
    %703 = vdwg.mxu0
    %704 = vmatprep.subr.bf16.mxu0 %v417
    %705 = vmatpush1.bf16.msra.mxu0 %v416
    %706 = vmatprep.subr.bf16.mxu0 %v411
    %707 = vmatpush1.bf16.msra.mxu0 %v410
    %708 = vmatprep.subr.bf16.mxu0 %v405
    %709 = vmatpush1.bf16.msra.mxu0 %v404
    %710 = vmatprep.subr.bf16.mxu0 %v399
    %711 = vmatpush1.bf16.msra.mxu0 %v398
    %712 = vmatprep.subr.bf16.mxu0 %v393
    %713 = vmatpush1.bf16.msra.mxu0 %v392
    %714 = vmatprep.subr.bf16.mxu0 %v387
    %715 = vmatpush1.bf16.msra.mxu0 %v386
    %716 = vmatprep.subr.bf16.mxu0 %v381
    %717 = vmatpush1.bf16.msra.mxu0 %v380
    %718 = vmatprep.subr.bf16.mxu0 %v375
    %719 = vmatpush1.bf16.msra.mxu0 %v374
    %720 = vmatprep.subr.bf16.mxu0 0
    %721 = vmatpush2.bf16.msra.mxu0 0
    %722 = vmatprep.subr.bf16.mxu0 0
    %723 = vmatpush2.bf16.msra.mxu0 0
    %724 = vmatprep.subr.bf16.mxu0 0
    %725 = vmatpush2.bf16.msra.mxu0 0
    %726 = vmatprep.subr.bf16.mxu0 0
    %727 = vmatpush2.bf16.msra.mxu0 0
    %728 = vmatprep.subr.bf16.mxu0 0
    %729 = vmatpush2.bf16.msra.mxu0 0
    %730 = vmatprep.subr.bf16.mxu0 0
    %731 = vmatpush2.bf16.msra.mxu0 0
    %732 = vmatprep.subr.bf16.mxu0 0
    %733 = vmatpush2.bf16.msra.mxu0 0
    %734 = vmatprep.subr.bf16.mxu0 0
    %735 = vmatpush2.bf16.msra.mxu0 0
    %736 = vmatprep.mubr.bf16.mxu0 0
    %737 = vmatmul.mubr.bf16.gmra.mxu0 %v649
    %v738 = vpop.f32.mrf.mxu0
    %v739 = vadd.f32 %v199, %v738
    %v740 = vpop.f32.mrf.mxu0
    %v741 = vadd.f32 %v203, %v740
    %v742 = vpop.f32.mrf.mxu0
    %v743 = vadd.f32 %v199, %v742
    %v744 = vpop.f32.mrf.mxu0
    %v745 = vadd.f32 %v203, %v744
    %746 = vmatprep.mubr.bf16.mxu0 0
    %747 = vmatmul.mubr.bf16.gmra.mxu0 %v650
    %v748 = vpop.f32.mrf.mxu0
    %v749 = vadd.f32 %v199, %v748
    %v750 = vpop.f32.mrf.mxu0
    %v751 = vadd.f32 %v203, %v750
    %v752 = vpop.f32.mrf.mxu0
    %v753 = vpop.f32.mrf.mxu0
    %754 = vdwg.mxu0
    %755 = vmatprep.subr.bf16.mxu0 %v419
    %756 = vmatpush1.bf16.msra.mxu0 %v418
    %757 = vmatprep.subr.bf16.mxu0 %v413
    %758 = vmatpush1.bf16.msra.mxu0 %v412
    %759 = vmatprep.subr.bf16.mxu0 %v407
    %760 = vmatpush1.bf16.msra.mxu0 %v406
    %761 = vmatprep.subr.bf16.mxu0 %v401
    %762 = vmatpush1.bf16.msra.mxu0 %v400
    %763 = vmatprep.subr.bf16.mxu0 %v395
    %764 = vmatpush1.bf16.msra.mxu0 %v394
    %765 = vmatprep.subr.bf16.mxu0 %v389
    %766 = vmatpush1.bf16.msra.mxu0 %v388
    %767 = vmatprep.subr.bf16.mxu0 %v383
    %768 = vmatpush1.bf16.msra.mxu0 %v382
    %769 = vmatprep.subr.bf16.mxu0 %v377
    %770 = vmatpush1.bf16.msra.mxu0 %v376
    %771 = vmatprep.subr.bf16.mxu0 0
    %772 = vmatpush2.bf16.msra.mxu0 0
    %773 = vmatprep.subr.bf16.mxu0 0
    %774 = vmatpush2.bf16.msra.mxu0 0
    %775 = vmatprep.subr.bf16.mxu0 0
    %776 = vmatpush2.bf16.msra.mxu0 0
    %777 = vmatprep.subr.bf16.mxu0 0
    %778 = vmatpush2.bf16.msra.mxu0 0
    %779 = vmatprep.subr.bf16.mxu0 0
    %780 = vmatpush2.bf16.msra.mxu0 0
    %781 = vmatprep.subr.bf16.mxu0 0
    %782 = vmatpush2.bf16.msra.mxu0 0
    %783 = vmatprep.subr.bf16.mxu0 0
    %784 = vmatpush2.bf16.msra.mxu0 0
    %785 = vmatprep.subr.bf16.mxu0 0
    %786 = vmatpush2.bf16.msra.mxu0 0
    %787 = vmatprep.mubr.bf16.mxu0 0
    %788 = vmatmul.mubr.bf16.gmra.mxu0 %v649
    %v789 = vpop.f32.mrf.mxu0
    %v790 = vadd.f32 %v207, %v789
    %v791 = vpop.f32.mrf.mxu0
    %v792 = vadd.f32 %v211, %v791
    %v793 = vpop.f32.mrf.mxu0
    %v794 = vadd.f32 %v207, %v793
    %v795 = vpop.f32.mrf.mxu0
    %v796 = vadd.f32 %v211, %v795
    %797 = vmatprep.mubr.bf16.mxu0 0
    %798 = vmatmul.mubr.bf16.gmra.mxu0 %v650
    %v799 = vpop.f32.mrf.mxu0
    %v800 = vadd.f32 %v207, %v799
    %v801 = vpop.f32.mrf.mxu0
    %v802 = vadd.f32 %v211, %v801
    %v803 = vpop.f32.mrf.mxu0
    %v804 = vpop.f32.mrf.mxu0
    %805 = vdwg.mxu0
    %v806 = vmax.f32 %v688, 0.0
    %v807 = vmax.f32 %v690, 0.0
    %v808 = vmax.f32 %v739, 0.0
    %v809 = vmax.f32 %v741, 0.0
    %v810 = vmax.f32 %v790, 0.0
    %v811 = vmax.f32 %v792, 0.0
    %v812 = vmax.f32 %v692, 0.0
    %v813 = vmax.f32 %v694, 0.0
    %v814 = vmax.f32 %v743, 0.0
    %v815 = vmax.f32 %v745, 0.0
    %v816 = vmax.f32 %v794, 0.0
    %v817 = vmax.f32 %v796, 0.0
    %v818 = vmax.f32 %v698, 0.0
    %v819 = vmax.f32 %v700, 0.0
    %v820 = vmax.f32 %v749, 0.0
    %v821 = vmax.f32 %v751, 0.0
    %v822 = vmax.f32 %v800, 0.0
    %v823 = vmax.f32 %v802, 0.0
    %v824 = vmax.f32 %v621, %v624
    %v825 = vmax.f32 %v622, %v625
    %v826 = vmax.f32 %v623, %v626
    %v827 = vmax.f32 %v627, %v630
    %v828 = vmax.f32 %v628, %v631
    %v829 = vmax.f32 %v629, %v632
    %v830 = vmax.f32 %v633, %v636
    %v831 = vmax.f32 %v634, %v637
    %v832 = vmax.f32 %v635, %v638
    %v833 = vmax.f32 %v806, %v809
    %v834 = vmax.f32 %v807, %v810
    %v835 = vmax.f32 %v808, %v811
    %v836 = vmax.f32 %v812, %v815
    %v837 = vmax.f32 %v813, %v816
    %v838 = vmax.f32 %v814, %v817
    %v839 = vmax.f32 %v818, %v821
    %v840 = vmax.f32 %v819, %v822
    %v841 = vmax.f32 %v820, %v823
    %v842 = vmax.f32 %v824, %v833
    %v843 = vmax.f32 %v825, %v834
    %v844 = vmax.f32 %v826, %v835
    %v845 = vmax.f32 %v827, %v836
    %v846 = vmax.f32 %v828, %v837
    %v847 = vmax.f32 %v829, %v838
    %v848 = vmax.f32 %v830, %v839
    %v849 = vmax.f32 %v831, %v840
    %v850 = vmax.f32 %v832, %v841
    %851 = vst [vmem:[#allocation2] sm:$0xff] 0.0
    %852 = vst [vmem:[#allocation2 + $0x8] sm:$0xff] 0.0
    %853 = vst [vmem:[#allocation2 + $0x10] sm:$0xff] 0.0
    %854 = vst [vmem:[#allocation2 + $0x18] sm:$0xff] 0.0
    %855 = vst [vmem:[#allocation2 + $0x20] sm:$0xff] 0.0
    %856 = vst [vmem:[#allocation2 + $0x28] sm:$0xff] 0.0
    %857 = vst [vmem:[#allocation2 + $0x30] sm:$0x3f] 0.0
    %858 = vst [vmem:[#allocation2 + $0x38] sm:$0x3f] 0.0
    %859 = vst [vmem:[#allocation2 + $0x40] sm:$0x3f] 0.0
    %vm866 = vcmask 1040384
    %v867 = vrot.slane %v842, 7
    %v868 = vrot.slane %v843, 7
    %v869 = vrot.slane %v844, 7
    %v870 = vrot.slane %v845, 7
    %v871 = vsel %vm866, %v867, %v870
    %v872 = vrot.slane %v846, 7
    %v873 = vsel %vm866, %v868, %v872
    %v874 = vrot.slane %v847, 7
    %v875 = vsel %vm866, %v869, %v874
    %882 = vst [vmem:[#allocation2] sm:$0xfe] %v867
    %883 = vst [vmem:[#allocation2 + $0x8] sm:$0xfe] %v868
    %884 = vst [vmem:[#allocation2 + $0x10] sm:$0xfe] %v869
    %885 = vst [vmem:[#allocation2 + $0x18] sm:$0x3] %v871
    %886 = vst [vmem:[#allocation2 + $0x20] sm:$0x3] %v873
    %887 = vst [vmem:[#allocation2 + $0x28] sm:$0x3] %v875
    %vm891 = vcmask 1042432
    %v892 = vrot.slane %v845, 5
    %v893 = vrot.slane %v846, 5
    %v894 = vrot.slane %v847, 5
    %v895 = vrot.slane %v848, 5
    %v896 = vsel %vm891, %v892, %v895
    %v897 = vrot.slane %v849, 5
    %v898 = vsel %vm891, %v893, %v897
    %v899 = vrot.slane %v850, 5
    %v900 = vsel %vm891, %v894, %v899
    %907 = vst [vmem:[#allocation2 + $0x18] sm:$0xf0] %v892
    %908 = vst [vmem:[#allocation2 + $0x20] sm:$0xf0] %v893
    %909 = vst [vmem:[#allocation2 + $0x28] sm:$0xf0] %v894
    %910 = vst [vmem:[#allocation2 + $0x30] sm:$0x1f] %v896
    %911 = vst [vmem:[#allocation2 + $0x38] sm:$0x1f] %v898
    %912 = vst [vmem:[#allocation2 + $0x40] sm:$0x1f] %v900
    %v913 = vld [vmem:[#allocation2] sm:$0xff]
    %v914 = vld [vmem:[#allocation2 + $0x8] sm:$0xff]
    %v915 = vld [vmem:[#allocation2 + $0x10] sm:$0xff]
    %v916 = vld [vmem:[#allocation2 + $0x18] sm:$0xff]
    %v917 = vld [vmem:[#allocation2 + $0x20] sm:$0xff]
    %v918 = vld [vmem:[#allocation2 + $0x28] sm:$0xff]
    %v919 = vld [vmem:[#allocation2 + $0x30] sm:$0xf]
    %v920 = vld [vmem:[#allocation2 + $0x38] sm:$0xf]
    %v921 = vld [vmem:[#allocation2 + $0x40] sm:$0xf]
    %v922 = vpack.c.bf16 %v916, %v913
    %v923 = vpack.c.bf16 %v917, %v914
    %v924 = vpack.c.bf16 %v918, %v915
    %v925 = vpack.c.bf16 %v919, %v919
    %v926 = vpack.c.bf16 %v920, %v920
    %v927 = vpack.c.bf16 %v921, %v921
    %v928 = vld [vmem:[#allocation8] sm:$0xff]
    %v929 = vld [vmem:[#allocation8 + $0x8] sm:$0xff]
    %v930 = vld [vmem:[#allocation8 + $0x10] sm:$0xff]
    %v931 = vld [vmem:[#allocation8 + $0x18] sm:$0xff]
    %v932 = vld [vmem:[#allocation8 + $0x20] sm:$0xff]
    %v933 = vld [vmem:[#allocation8 + $0x28] sm:$0xff]
    %v934 = vld [vmem:[#allocation8 + $0x30] sm:$0xff]
    %v935 = vld [vmem:[#allocation8 + $0x38] sm:$0xff]
    %v936 = vld [vmem:[#allocation8 + $0x40] sm:$0xff]
    %v937 = vld [vmem:[#allocation8 + $0x48] sm:$0xff]
    %v938 = vld [vmem:[#allocation8 + $0x50] sm:$0xff]
    %v939 = vld [vmem:[#allocation8 + $0x58] sm:$0xff]
    %v940 = vld [vmem:[#allocation8 + $0x60] sm:$0xff]
    %v941 = vld [vmem:[#allocation8 + $0x68] sm:$0xff]
    %v942 = vld [vmem:[#allocation8 + $0x70] sm:$0xff]
    %v943 = vld [vmem:[#allocation8 + $0x78] sm:$0xff]
    %v944 = vld [vmem:[#allocation8 + $0x80] sm:$0xff]
    %v945 = vld [vmem:[#allocation8 + $0x88] sm:$0xff]
    %v946 = vld [vmem:[#allocation8 + $0x90] sm:$0xff]
    %v947 = vld [vmem:[#allocation8 + $0x98] sm:$0xff]
    %v948 = vld [vmem:[#allocation8 + $0xa0] sm:$0xff]
    %v949 = vld [vmem:[#allocation8 + $0xa8] sm:$0xff]
    %v950 = vld [vmem:[#allocation8 + $0xb0] sm:$0xff]
    %v951 = vld [vmem:[#allocation8 + $0xb8] sm:$0xff]
    %v952 = vld [vmem:[#allocation8 + $0xc0] sm:$0xff]
    %v953 = vld [vmem:[#allocation8 + $0xc8] sm:$0xff]
    %v954 = vld [vmem:[#allocation8 + $0xd0] sm:$0xff]
    %v955 = vld [vmem:[#allocation8 + $0xd8] sm:$0xff]
    %v956 = vld [vmem:[#allocation8 + $0xe0] sm:$0xff]
    %v957 = vld [vmem:[#allocation8 + $0xe8] sm:$0xff]
    %v958 = vld [vmem:[#allocation8 + $0xf0] sm:$0xff]
    %v959 = vld [vmem:[#allocation8 + $0xf8] sm:$0xff]
    %v960 = vld [vmem:[#allocation8 + $0x100] sm:$0xff]
    %v961 = vld [vmem:[#allocation8 + $0x108] sm:$0xff]
    %v962 = vld [vmem:[#allocation8 + $0x110] sm:$0xff]
    %v963 = vld [vmem:[#allocation8 + $0x118] sm:$0xff]
    %v964 = vld [vmem:[#allocation8 + $0x120] sm:$0xff]
    %v965 = vld [vmem:[#allocation8 + $0x128] sm:$0xff]
    %v966 = vld [vmem:[#allocation8 + $0x130] sm:$0xff]
    %v967 = vld [vmem:[#allocation8 + $0x138] sm:$0xff]
    %v968 = vld [vmem:[#allocation8 + $0x140] sm:$0xff]
    %v969 = vld [vmem:[#allocation8 + $0x148] sm:$0xff]
    %v970 = vld [vmem:[#allocation8 + $0x150] sm:$0xff]
    %v971 = vld [vmem:[#allocation8 + $0x158] sm:$0xff]
    %v972 = vld [vmem:[#allocation8 + $0x160] sm:$0xff]
    %v973 = vld [vmem:[#allocation8 + $0x168] sm:$0xff]
    %v974 = vld [vmem:[#allocation8 + $0x170] sm:$0xff]
    %v975 = vld [vmem:[#allocation8 + $0x178] sm:$0xff]
    %v976 = vld [vmem:[#allocation8 + $0x180] sm:$0xff]
    %v977 = vld [vmem:[#allocation8 + $0x188] sm:$0xff]
    %v978 = vld [vmem:[#allocation8 + $0x190] sm:$0xff]
    %v979 = vld [vmem:[#allocation8 + $0x198] sm:$0xff]
    %v980 = vld [vmem:[#allocation8 + $0x1a0] sm:$0xff]
    %v981 = vld [vmem:[#allocation8 + $0x1a8] sm:$0xff]
    %v982 = vld [vmem:[#allocation8 + $0x1b0] sm:$0xff]
    %v983 = vld [vmem:[#allocation8 + $0x1b8] sm:$0xff]
    %v984 = vld [vmem:[#allocation8 + $0x1c0] sm:$0xff]
    %v985 = vld [vmem:[#allocation8 + $0x1c8] sm:$0xff]
    %v986 = vld [vmem:[#allocation8 + $0x1d0] sm:$0xff]
    %v987 = vld [vmem:[#allocation8 + $0x1d8] sm:$0xff]
    %v988 = vld [vmem:[#allocation8 + $0x1e0] sm:$0xff]
    %v989 = vld [vmem:[#allocation8 + $0x1e8] sm:$0xff]
    %v990 = vld [vmem:[#allocation8 + $0x1f0] sm:$0xff]
    %v991 = vld [vmem:[#allocation8 + $0x1f8] sm:$0xff]
    %v992 = vld [vmem:[#allocation8 + $0x200] sm:$0xff]
    %v993 = vld [vmem:[#allocation8 + $0x208] sm:$0xff]
    %v994 = vld [vmem:[#allocation8 + $0x210] sm:$0xff]
    %v995 = vld [vmem:[#allocation8 + $0x218] sm:$0xff]
    %v996 = vld [vmem:[#allocation8 + $0x220] sm:$0xff]
    %v997 = vld [vmem:[#allocation8 + $0x228] sm:$0xff]
    %v998 = vld [vmem:[#allocation8 + $0x230] sm:$0xff]
    %v999 = vld [vmem:[#allocation8 + $0x238] sm:$0xff]
    %v1000 = vld [vmem:[#allocation8 + $0x240] sm:$0xff]
    %v1001 = vld [vmem:[#allocation8 + $0x248] sm:$0xff]
    %v1002 = vld [vmem:[#allocation8 + $0x250] sm:$0xff]
    %v1003 = vld [vmem:[#allocation8 + $0x258] sm:$0xff]
    %v1004 = vld [vmem:[#allocation8 + $0x260] sm:$0xff]
    %v1005 = vld [vmem:[#allocation8 + $0x268] sm:$0xff]
    %v1006 = vld [vmem:[#allocation8 + $0x270] sm:$0xff]
    %v1007 = vld [vmem:[#allocation8 + $0x278] sm:$0xff]
    %v1008 = vld [vmem:[#allocation8 + $0x280] sm:$0xff]
    %v1009 = vld [vmem:[#allocation8 + $0x288] sm:$0xff]
    %v1010 = vld [vmem:[#allocation8 + $0x290] sm:$0xff]
    %v1011 = vld [vmem:[#allocation8 + $0x298] sm:$0xff]
    %v1012 = vld [vmem:[#allocation8 + $0x2a0] sm:$0xff]
    %v1013 = vld [vmem:[#allocation8 + $0x2a8] sm:$0xff]
    %v1014 = vld [vmem:[#allocation8 + $0x2b0] sm:$0xff]
    %v1015 = vld [vmem:[#allocation8 + $0x2b8] sm:$0xff]
    %v1016 = vld [vmem:[#allocation8 + $0x2c0] sm:$0xff]
    %v1017 = vld [vmem:[#allocation8 + $0x2c8] sm:$0xff]
    %v1018 = vld [vmem:[#allocation8 + $0x2d0] sm:$0xff]
    %v1019 = vld [vmem:[#allocation8 + $0x2d8] sm:$0xff]
    %v1020 = vld [vmem:[#allocation8 + $0x2e0] sm:$0xff]
    %v1021 = vld [vmem:[#allocation8 + $0x2e8] sm:$0xff]
    %v1022 = vld [vmem:[#allocation8 + $0x2f0] sm:$0xff]
    %v1023 = vld [vmem:[#allocation8 + $0x2f8] sm:$0xff]
    %v1024 = vld [vmem:[#allocation8 + $0x300] sm:$0xff]
    %v1025 = vld [vmem:[#allocation8 + $0x308] sm:$0xff]
    %v1026 = vld [vmem:[#allocation8 + $0x310] sm:$0xff]
    %v1027 = vld [vmem:[#allocation8 + $0x318] sm:$0xff]
    %v1028 = vld [vmem:[#allocation8 + $0x320] sm:$0xff]
    %v1029 = vld [vmem:[#allocation8 + $0x328] sm:$0xff]
    %v1030 = vld [vmem:[#allocation8 + $0x330] sm:$0xff]
    %v1031 = vld [vmem:[#allocation8 + $0x338] sm:$0xff]
    %v1032 = vld [vmem:[#allocation8 + $0x340] sm:$0xff]
    %v1033 = vld [vmem:[#allocation8 + $0x348] sm:$0xff]
    %v1034 = vld [vmem:[#allocation8 + $0x350] sm:$0xff]
    %v1035 = vld [vmem:[#allocation8 + $0x358] sm:$0xff]
    %v1036 = vld [vmem:[#allocation8 + $0x360] sm:$0xff]
    %v1037 = vld [vmem:[#allocation8 + $0x368] sm:$0xff]
    %v1038 = vld [vmem:[#allocation8 + $0x370] sm:$0xff]
    %v1039 = vld [vmem:[#allocation8 + $0x378] sm:$0xff]
    %v1040 = vld [vmem:[#allocation8 + $0x380] sm:$0xff]
    %v1041 = vld [vmem:[#allocation8 + $0x388] sm:$0xff]
    %v1042 = vld [vmem:[#allocation8 + $0x390] sm:$0xff]
    %v1043 = vld [vmem:[#allocation8 + $0x398] sm:$0xff]
    %v1044 = vld [vmem:[#allocation8 + $0x3a0] sm:$0xff]
    %v1045 = vld [vmem:[#allocation8 + $0x3a8] sm:$0xff]
    %v1046 = vld [vmem:[#allocation8 + $0x3b0] sm:$0xff]
    %v1047 = vld [vmem:[#allocation8 + $0x3b8] sm:$0xff]
    %v1048 = vld [vmem:[#allocation8 + $0x3c0] sm:$0xff]
    %v1049 = vld [vmem:[#allocation8 + $0x3c8] sm:$0xff]
    %v1050 = vld [vmem:[#allocation8 + $0x3d0] sm:$0xff]
    %v1051 = vld [vmem:[#allocation8 + $0x3d8] sm:$0xff]
    %v1052 = vld [vmem:[#allocation8 + $0x3e0] sm:$0xff]
    %v1053 = vld [vmem:[#allocation8 + $0x3e8] sm:$0xff]
    %v1054 = vld [vmem:[#allocation8 + $0x3f0] sm:$0xff]
    %v1055 = vld [vmem:[#allocation8 + $0x3f8] sm:$0xff]
    %v1056 = vld [vmem:[#allocation8 + $0x400] sm:$0xff]
    %v1057 = vld [vmem:[#allocation8 + $0x408] sm:$0xff]
    %v1058 = vld [vmem:[#allocation8 + $0x410] sm:$0xff]
    %v1059 = vld [vmem:[#allocation8 + $0x418] sm:$0xff]
    %v1060 = vld [vmem:[#allocation8 + $0x420] sm:$0xff]
    %v1061 = vld [vmem:[#allocation8 + $0x428] sm:$0xff]
    %v1062 = vld [vmem:[#allocation8 + $0x430] sm:$0xff]
    %v1063 = vld [vmem:[#allocation8 + $0x438] sm:$0xff]
    %v1064 = vld [vmem:[#allocation8 + $0x440] sm:$0xff]
    %v1065 = vld [vmem:[#allocation8 + $0x448] sm:$0xff]
    %v1066 = vld [vmem:[#allocation8 + $0x450] sm:$0xff]
    %v1067 = vld [vmem:[#allocation8 + $0x458] sm:$0xff]
    %v1068 = vld [vmem:[#allocation8 + $0x460] sm:$0xff]
    %v1069 = vld [vmem:[#allocation8 + $0x468] sm:$0xff]
    %v1070 = vld [vmem:[#allocation8 + $0x470] sm:$0xff]
    %v1071 = vld [vmem:[#allocation8 + $0x478] sm:$0xff]
    %v1072 = vld [vmem:[#allocation2] sm:$0xfe]
    %v1073 = vld [vmem:[#allocation2 + $0x8] sm:$0xfe]
    %v1074 = vld [vmem:[#allocation2 + $0x10] sm:$0xfe]
    %v1075 = vld [vmem:[#allocation2 + $0x30] sm:$0x1f]
    %v1076 = vld [vmem:[#allocation2 + $0x38] sm:$0x1f]
    %v1077 = vld [vmem:[#allocation2 + $0x40] sm:$0x1f]
    %v1078 = vpack.c.bf16 %v916, %v1072
    %v1079 = vpack.c.bf16 %v917, %v1073
    %v1080 = vpack.c.bf16 %v918, %v1074
    %v1081 = vpack.c.bf16 %v1075, %v1075
    %v1082 = vpack.c.bf16 %v1076, %v1076
    %v1083 = vpack.c.bf16 %v1077, %v1077
    %s1084 = scalar_lea.vmem [#allocation8], 1152
    %v1085 = vld [vmem:[%s1084] sm:$0xff]
    %v1086 = vld [vmem:[%s1084 + $0x8] sm:$0xff]
    %v1087 = vld [vmem:[%s1084 + $0x10] sm:$0xff]
    %v1088 = vld [vmem:[%s1084 + $0x18] sm:$0xff]
    %v1089 = vld [vmem:[%s1084 + $0x20] sm:$0xff]
    %v1090 = vld [vmem:[%s1084 + $0x28] sm:$0xff]
    %v1091 = vld [vmem:[%s1084 + $0x30] sm:$0xff]
    %v1092 = vld [vmem:[%s1084 + $0x38] sm:$0xff]
    %v1093 = vld [vmem:[%s1084 + $0x40] sm:$0xff]
    %v1094 = vld [vmem:[%s1084 + $0x48] sm:$0xff]
    %v1095 = vld [vmem:[%s1084 + $0x50] sm:$0xff]
    %v1096 = vld [vmem:[%s1084 + $0x58] sm:$0xff]
    %v1097 = vld [vmem:[%s1084 + $0x60] sm:$0xff]
    %v1098 = vld [vmem:[%s1084 + $0x68] sm:$0xff]
    %v1099 = vld [vmem:[%s1084 + $0x70] sm:$0xff]
    %v1100 = vld [vmem:[%s1084 + $0x78] sm:$0xff]
    %v1101 = vld [vmem:[%s1084 + $0x80] sm:$0xff]
    %v1102 = vld [vmem:[%s1084 + $0x88] sm:$0xff]
    %v1103 = vld [vmem:[%s1084 + $0x90] sm:$0xff]
    %v1104 = vld [vmem:[%s1084 + $0x98] sm:$0xff]
    %v1105 = vld [vmem:[%s1084 + $0xa0] sm:$0xff]
    %v1106 = vld [vmem:[%s1084 + $0xa8] sm:$0xff]
    %v1107 = vld [vmem:[%s1084 + $0xb0] sm:$0xff]
    %v1108 = vld [vmem:[%s1084 + $0xb8] sm:$0xff]
    %v1109 = vld [vmem:[%s1084 + $0xc0] sm:$0xff]
    %v1110 = vld [vmem:[%s1084 + $0xc8] sm:$0xff]
    %v1111 = vld [vmem:[%s1084 + $0xd0] sm:$0xff]
    %v1112 = vld [vmem:[%s1084 + $0xd8] sm:$0xff]
    %v1113 = vld [vmem:[%s1084 + $0xe0] sm:$0xff]
    %v1114 = vld [vmem:[%s1084 + $0xe8] sm:$0xff]
    %v1115 = vld [vmem:[%s1084 + $0xf0] sm:$0xff]
    %v1116 = vld [vmem:[%s1084 + $0xf8] sm:$0xff]
    %v1117 = vld [vmem:[%s1084 + $0x100] sm:$0xff]
    %v1118 = vld [vmem:[%s1084 + $0x108] sm:$0xff]
    %v1119 = vld [vmem:[%s1084 + $0x110] sm:$0xff]
    %v1120 = vld [vmem:[%s1084 + $0x118] sm:$0xff]
    %v1121 = vld [vmem:[%s1084 + $0x120] sm:$0xff]
    %v1122 = vld [vmem:[%s1084 + $0x128] sm:$0xff]
    %v1123 = vld [vmem:[%s1084 + $0x130] sm:$0xff]
    %v1124 = vld [vmem:[%s1084 + $0x138] sm:$0xff]
    %v1125 = vld [vmem:[%s1084 + $0x140] sm:$0xff]
    %v1126 = vld [vmem:[%s1084 + $0x148] sm:$0xff]
    %v1127 = vld [vmem:[%s1084 + $0x150] sm:$0xff]
    %v1128 = vld [vmem:[%s1084 + $0x158] sm:$0xff]
    %v1129 = vld [vmem:[%s1084 + $0x160] sm:$0xff]
    %v1130 = vld [vmem:[%s1084 + $0x168] sm:$0xff]
    %v1131 = vld [vmem:[%s1084 + $0x170] sm:$0xff]
    %v1132 = vld [vmem:[%s1084 + $0x178] sm:$0xff]
    %v1133 = vld [vmem:[%s1084 + $0x180] sm:$0xff]
    %v1134 = vld [vmem:[%s1084 + $0x188] sm:$0xff]
    %v1135 = vld [vmem:[%s1084 + $0x190] sm:$0xff]
    %v1136 = vld [vmem:[%s1084 + $0x198] sm:$0xff]
    %v1137 = vld [vmem:[%s1084 + $0x1a0] sm:$0xff]
    %v1138 = vld [vmem:[%s1084 + $0x1a8] sm:$0xff]
    %v1139 = vld [vmem:[%s1084 + $0x1b0] sm:$0xff]
    %v1140 = vld [vmem:[%s1084 + $0x1b8] sm:$0xff]
    %v1141 = vld [vmem:[%s1084 + $0x1c0] sm:$0xff]
    %v1142 = vld [vmem:[%s1084 + $0x1c8] sm:$0xff]
    %v1143 = vld [vmem:[%s1084 + $0x1d0] sm:$0xff]
    %v1144 = vld [vmem:[%s1084 + $0x1d8] sm:$0xff]
    %v1145 = vld [vmem:[%s1084 + $0x1e0] sm:$0xff]
    %v1146 = vld [vmem:[%s1084 + $0x1e8] sm:$0xff]
    %v1147 = vld [vmem:[%s1084 + $0x1f0] sm:$0xff]
    %v1148 = vld [vmem:[%s1084 + $0x1f8] sm:$0xff]
    %v1149 = vld [vmem:[%s1084 + $0x200] sm:$0xff]
    %v1150 = vld [vmem:[%s1084 + $0x208] sm:$0xff]
    %v1151 = vld [vmem:[%s1084 + $0x210] sm:$0xff]
    %v1152 = vld [vmem:[%s1084 + $0x218] sm:$0xff]
    %v1153 = vld [vmem:[%s1084 + $0x220] sm:$0xff]
    %v1154 = vld [vmem:[%s1084 + $0x228] sm:$0xff]
    %v1155 = vld [vmem:[%s1084 + $0x230] sm:$0xff]
    %v1156 = vld [vmem:[%s1084 + $0x238] sm:$0xff]
    %v1157 = vld [vmem:[%s1084 + $0x240] sm:$0xff]
    %v1158 = vld [vmem:[%s1084 + $0x248] sm:$0xff]
    %v1159 = vld [vmem:[%s1084 + $0x250] sm:$0xff]
    %v1160 = vld [vmem:[%s1084 + $0x258] sm:$0xff]
    %v1161 = vld [vmem:[%s1084 + $0x260] sm:$0xff]
    %v1162 = vld [vmem:[%s1084 + $0x268] sm:$0xff]
    %v1163 = vld [vmem:[%s1084 + $0x270] sm:$0xff]
    %v1164 = vld [vmem:[%s1084 + $0x278] sm:$0xff]
    %v1165 = vld [vmem:[%s1084 + $0x280] sm:$0xff]
    %v1166 = vld [vmem:[%s1084 + $0x288] sm:$0xff]
    %v1167 = vld [vmem:[%s1084 + $0x290] sm:$0xff]
    %v1168 = vld [vmem:[%s1084 + $0x298] sm:$0xff]
    %v1169 = vld [vmem:[%s1084 + $0x2a0] sm:$0xff]
    %v1170 = vld [vmem:[%s1084 + $0x2a8] sm:$0xff]
    %v1171 = vld [vmem:[%s1084 + $0x2b0] sm:$0xff]
    %v1172 = vld [vmem:[%s1084 + $0x2b8] sm:$0xff]
    %v1173 = vld [vmem:[%s1084 + $0x2c0] sm:$0xff]
    %v1174 = vld [vmem:[%s1084 + $0x2c8] sm:$0xff]
    %v1175 = vld [vmem:[%s1084 + $0x2d0] sm:$0xff]
    %v1176 = vld [vmem:[%s1084 + $0x2d8] sm:$0xff]
    %v1177 = vld [vmem:[%s1084 + $0x2e0] sm:$0xff]
    %v1178 = vld [vmem:[%s1084 + $0x2e8] sm:$0xff]
    %v1179 = vld [vmem:[%s1084 + $0x2f0] sm:$0xff]
    %v1180 = vld [vmem:[%s1084 + $0x2f8] sm:$0xff]
    %v1181 = vld [vmem:[%s1084 + $0x300] sm:$0xff]
    %v1182 = vld [vmem:[%s1084 + $0x308] sm:$0xff]
    %v1183 = vld [vmem:[%s1084 + $0x310] sm:$0xff]
    %v1184 = vld [vmem:[%s1084 + $0x318] sm:$0xff]
    %v1185 = vld [vmem:[%s1084 + $0x320] sm:$0xff]
    %v1186 = vld [vmem:[%s1084 + $0x328] sm:$0xff]
    %v1187 = vld [vmem:[%s1084 + $0x330] sm:$0xff]
    %v1188 = vld [vmem:[%s1084 + $0x338] sm:$0xff]
    %v1189 = vld [vmem:[%s1084 + $0x340] sm:$0xff]
    %v1190 = vld [vmem:[%s1084 + $0x348] sm:$0xff]
    %v1191 = vld [vmem:[%s1084 + $0x350] sm:$0xff]
    %v1192 = vld [vmem:[%s1084 + $0x358] sm:$0xff]
    %v1193 = vld [vmem:[%s1084 + $0x360] sm:$0xff]
    %v1194 = vld [vmem:[%s1084 + $0x368] sm:$0xff]
    %v1195 = vld [vmem:[%s1084 + $0x370] sm:$0xff]
    %v1196 = vld [vmem:[%s1084 + $0x378] sm:$0xff]
    %v1197 = vld [vmem:[%s1084 + $0x380] sm:$0xff]
    %v1198 = vld [vmem:[%s1084 + $0x388] sm:$0xff]
    %v1199 = vld [vmem:[%s1084 + $0x390] sm:$0xff]
    %v1200 = vld [vmem:[%s1084 + $0x398] sm:$0xff]
    %v1201 = vld [vmem:[%s1084 + $0x3a0] sm:$0xff]
    %v1202 = vld [vmem:[%s1084 + $0x3a8] sm:$0xff]
    %v1203 = vld [vmem:[%s1084 + $0x3b0] sm:$0xff]
    %v1204 = vld [vmem:[%s1084 + $0x3b8] sm:$0xff]
    %v1205 = vld [vmem:[%s1084 + $0x3c0] sm:$0xff]
    %v1206 = vld [vmem:[%s1084 + $0x3c8] sm:$0xff]
    %v1207 = vld [vmem:[%s1084 + $0x3d0] sm:$0xff]
    %v1208 = vld [vmem:[%s1084 + $0x3d8] sm:$0xff]
    %v1209 = vld [vmem:[%s1084 + $0x3e0] sm:$0xff]
    %v1210 = vld [vmem:[%s1084 + $0x3e8] sm:$0xff]
    %v1211 = vld [vmem:[%s1084 + $0x3f0] sm:$0xff]
    %v1212 = vld [vmem:[%s1084 + $0x3f8] sm:$0xff]
    %v1213 = vld [vmem:[%s1084 + $0x400] sm:$0xff]
    %v1214 = vld [vmem:[%s1084 + $0x408] sm:$0xff]
    %v1215 = vld [vmem:[%s1084 + $0x410] sm:$0xff]
    %v1216 = vld [vmem:[%s1084 + $0x418] sm:$0xff]
    %v1217 = vld [vmem:[%s1084 + $0x420] sm:$0xff]
    %v1218 = vld [vmem:[%s1084 + $0x428] sm:$0xff]
    %v1219 = vld [vmem:[%s1084 + $0x430] sm:$0xff]
    %v1220 = vld [vmem:[%s1084 + $0x438] sm:$0xff]
    %v1221 = vld [vmem:[%s1084 + $0x440] sm:$0xff]
    %v1222 = vld [vmem:[%s1084 + $0x448] sm:$0xff]
    %v1223 = vld [vmem:[%s1084 + $0x450] sm:$0xff]
    %v1224 = vld [vmem:[%s1084 + $0x458] sm:$0xff]
    %v1225 = vld [vmem:[%s1084 + $0x460] sm:$0xff]
    %v1226 = vld [vmem:[%s1084 + $0x468] sm:$0xff]
    %v1227 = vld [vmem:[%s1084 + $0x470] sm:$0xff]
    %v1228 = vld [vmem:[%s1084 + $0x478] sm:$0xff]
    %vm1229 = vsmask.f32 7424
    %v1231 = vshrl.u32 %v1078, 16
    %v1233 = vshll.u32 %v1078, 16
    %v1235 = vrot.slane %v1233, 1
    %v1236 = vor.u32 %v1231, %v1235
    %v1238 = vshll.u32 %v1081, 16
    %v1240 = vrot.slane %v1238, 1
    %v1241 = vsel %vm1229, %v1236, %v1240
    %v1243 = vshrl.u32 %v1079, 16
    %v1245 = vshll.u32 %v1079, 16
    %v1247 = vrot.slane %v1245, 1
    %v1248 = vor.u32 %v1243, %v1247
    %v1250 = vshll.u32 %v1082, 16
    %v1252 = vrot.slane %v1250, 1
    %v1253 = vsel %vm1229, %v1248, %v1252
    %v1255 = vshrl.u32 %v1080, 16
    %v1257 = vshll.u32 %v1080, 16
    %v1259 = vrot.slane %v1257, 1
    %v1260 = vor.u32 %v1255, %v1259
    %v1262 = vshll.u32 %v1083, 16
    %v1264 = vrot.slane %v1262, 1
    %v1265 = vsel %vm1229, %v1260, %v1264
    %v1266 = vshrl.u32 %v1081, 16
    %v1268 = vor.u32 %v1266, %v1240
    %v1269 = vshrl.u32 %v1082, 16
    %v1271 = vor.u32 %v1269, %v1252
    %v1272 = vshrl.u32 %v1083, 16
    %v1274 = vor.u32 %v1272, %v1264
    %v1425 = vunpack.c.l.b16 %v1085
    %v1426 = vunpack.c.h.b16 %v1085
    %v1427 = vunpack.c.l.b16 %v1086
    %v1428 = vunpack.c.h.b16 %v1086
    %v1429 = vunpack.c.l.b16 %v1087
    %v1430 = vunpack.c.h.b16 %v1087
    %v1431 = vunpack.c.l.b16 %v1088
    %v1432 = vunpack.c.h.b16 %v1088
    %v1433 = vunpack.c.l.b16 %v1089
    %v1434 = vunpack.c.h.b16 %v1089
    %v1435 = vunpack.c.l.b16 %v1090
    %v1436 = vunpack.c.h.b16 %v1090
    %v1437 = vunpack.c.l.b16 %v1091
    %v1438 = vunpack.c.h.b16 %v1091
    %v1439 = vunpack.c.l.b16 %v1092
    %v1440 = vunpack.c.h.b16 %v1092
    %v1441 = vunpack.c.l.b16 %v1093
    %v1442 = vunpack.c.h.b16 %v1093
    %v1443 = vunpack.c.l.b16 %v1094
    %v1444 = vunpack.c.h.b16 %v1094
    %v1445 = vunpack.c.l.b16 %v1095
    %v1446 = vunpack.c.h.b16 %v1095
    %v1447 = vunpack.c.l.b16 %v1096
    %v1448 = vunpack.c.h.b16 %v1096
    %v1449 = vunpack.c.l.b16 %v1097
    %v1450 = vunpack.c.h.b16 %v1097
    %v1451 = vunpack.c.l.b16 %v1098
    %v1452 = vunpack.c.h.b16 %v1098
    %v1453 = vunpack.c.l.b16 %v1099
    %v1454 = vunpack.c.h.b16 %v1099
    %v1455 = vunpack.c.l.b16 %v1100
    %v1456 = vunpack.c.h.b16 %v1100
    %v1457 = vunpack.c.l.b16 %v1101
    %v1458 = vunpack.c.h.b16 %v1101
    %v1459 = vunpack.c.l.b16 %v1102
    %v1460 = vunpack.c.h.b16 %v1102
    %v1461 = vunpack.c.l.b16 %v1103
    %v1462 = vunpack.c.h.b16 %v1103
    %v1463 = vunpack.c.l.b16 %v1104
    %v1464 = vunpack.c.h.b16 %v1104
    %v1465 = vunpack.c.l.b16 %v1105
    %v1466 = vunpack.c.h.b16 %v1105
    %v1467 = vunpack.c.l.b16 %v1106
    %v1468 = vunpack.c.h.b16 %v1106
    %v1469 = vunpack.c.l.b16 %v1107
    %v1470 = vunpack.c.h.b16 %v1107
    %v1471 = vunpack.c.l.b16 %v1108
    %v1472 = vunpack.c.h.b16 %v1108
    %v1473 = vunpack.c.l.b16 %v1109
    %v1474 = vunpack.c.h.b16 %v1109
    %v1475 = vunpack.c.l.b16 %v1110
    %v1476 = vunpack.c.h.b16 %v1110
    %v1477 = vunpack.c.l.b16 %v1111
    %v1478 = vunpack.c.h.b16 %v1111
    %v1479 = vunpack.c.l.b16 %v1112
    %v1480 = vunpack.c.h.b16 %v1112
    %v1481 = vunpack.c.l.b16 %v1113
    %v1482 = vunpack.c.h.b16 %v1113
    %v1483 = vunpack.c.l.b16 %v1114
    %v1484 = vunpack.c.h.b16 %v1114
    %v1485 = vunpack.c.l.b16 %v1115
    %v1486 = vunpack.c.h.b16 %v1115
    %v1487 = vunpack.c.l.b16 %v1116
    %v1488 = vunpack.c.h.b16 %v1116
    %v1489 = vunpack.c.l.b16 %v1117
    %v1490 = vunpack.c.h.b16 %v1117
    %v1491 = vunpack.c.l.b16 %v1118
    %v1492 = vunpack.c.h.b16 %v1118
    %v1493 = vunpack.c.l.b16 %v1119
    %v1494 = vunpack.c.h.b16 %v1119
    %v1495 = vunpack.c.l.b16 %v1120
    %v1496 = vunpack.c.h.b16 %v1120
    %v1497 = vunpack.c.l.b16 %v1121
    %v1498 = vunpack.c.h.b16 %v1121
    %v1499 = vunpack.c.l.b16 %v1122
    %v1500 = vunpack.c.h.b16 %v1122
    %v1501 = vunpack.c.l.b16 %v1123
    %v1502 = vunpack.c.h.b16 %v1123
    %v1503 = vunpack.c.l.b16 %v1124
    %v1504 = vunpack.c.h.b16 %v1124
    %v1505 = vunpack.c.l.b16 %v1125
    %v1506 = vunpack.c.h.b16 %v1125
    %v1507 = vunpack.c.l.b16 %v1126
    %v1508 = vunpack.c.h.b16 %v1126
    %v1509 = vunpack.c.l.b16 %v1127
    %v1510 = vunpack.c.h.b16 %v1127
    %v1511 = vunpack.c.l.b16 %v1128
    %v1512 = vunpack.c.h.b16 %v1128
    %v1513 = vunpack.c.l.b16 %v1129
    %v1514 = vunpack.c.h.b16 %v1129
    %v1515 = vunpack.c.l.b16 %v1130
    %v1516 = vunpack.c.h.b16 %v1130
    %v1517 = vunpack.c.l.b16 %v1131
    %v1518 = vunpack.c.h.b16 %v1131
    %v1519 = vunpack.c.l.b16 %v1132
    %v1520 = vunpack.c.h.b16 %v1132
    %v1521 = vunpack.c.l.b16 %v1133
    %v1522 = vunpack.c.h.b16 %v1133
    %v1523 = vunpack.c.l.b16 %v1134
    %v1524 = vunpack.c.h.b16 %v1134
    %v1525 = vunpack.c.l.b16 %v1135
    %v1526 = vunpack.c.h.b16 %v1135
    %v1527 = vunpack.c.l.b16 %v1136
    %v1528 = vunpack.c.h.b16 %v1136
    %v1529 = vunpack.c.l.b16 %v1137
    %v1530 = vunpack.c.h.b16 %v1137
    %v1531 = vunpack.c.l.b16 %v1138
    %v1532 = vunpack.c.h.b16 %v1138
    %v1533 = vunpack.c.l.b16 %v1139
    %v1534 = vunpack.c.h.b16 %v1139
    %v1535 = vunpack.c.l.b16 %v1140
    %v1536 = vunpack.c.h.b16 %v1140
    %v1537 = vunpack.c.l.b16 %v1141
    %v1538 = vunpack.c.h.b16 %v1141
    %v1539 = vunpack.c.l.b16 %v1142
    %v1540 = vunpack.c.h.b16 %v1142
    %v1541 = vunpack.c.l.b16 %v1143
    %v1542 = vunpack.c.h.b16 %v1143
    %v1543 = vunpack.c.l.b16 %v1144
    %v1544 = vunpack.c.h.b16 %v1144
    %v1545 = vunpack.c.l.b16 %v1145
    %v1546 = vunpack.c.h.b16 %v1145
    %v1547 = vunpack.c.l.b16 %v1146
    %v1548 = vunpack.c.h.b16 %v1146
    %v1549 = vunpack.c.l.b16 %v1147
    %v1550 = vunpack.c.h.b16 %v1147
    %v1551 = vunpack.c.l.b16 %v1148
    %v1552 = vunpack.c.h.b16 %v1148
    %v1553 = vunpack.c.l.b16 %v1149
    %v1554 = vunpack.c.h.b16 %v1149
    %v1555 = vunpack.c.l.b16 %v1150
    %v1556 = vunpack.c.h.b16 %v1150
    %v1557 = vunpack.c.l.b16 %v1151
    %v1558 = vunpack.c.h.b16 %v1151
    %v1559 = vunpack.c.l.b16 %v1152
    %v1560 = vunpack.c.h.b16 %v1152
    %v1561 = vunpack.c.l.b16 %v1153
    %v1562 = vunpack.c.h.b16 %v1153
    %v1563 = vunpack.c.l.b16 %v1154
    %v1564 = vunpack.c.h.b16 %v1154
    %v1565 = vunpack.c.l.b16 %v1155
    %v1566 = vunpack.c.h.b16 %v1155
    %v1567 = vunpack.c.l.b16 %v1156
    %v1568 = vunpack.c.h.b16 %v1156
    %v1569 = vunpack.c.l.b16 %v1157
    %v1570 = vunpack.c.h.b16 %v1157
    %v1571 = vunpack.c.l.b16 %v1158
    %v1572 = vunpack.c.h.b16 %v1158
    %v1573 = vunpack.c.l.b16 %v1159
    %v1574 = vunpack.c.h.b16 %v1159
    %v1575 = vunpack.c.l.b16 %v1160
    %v1576 = vunpack.c.h.b16 %v1160
    %v1577 = vunpack.c.l.b16 %v1161
    %v1578 = vunpack.c.h.b16 %v1161
    %v1579 = vunpack.c.l.b16 %v1162
    %v1580 = vunpack.c.h.b16 %v1162
    %v1581 = vunpack.c.l.b16 %v1163
    %v1582 = vunpack.c.h.b16 %v1163
    %v1583 = vunpack.c.l.b16 %v1164
    %v1584 = vunpack.c.h.b16 %v1164
    %v1585 = vunpack.c.l.b16 %v1165
    %v1586 = vunpack.c.h.b16 %v1165
    %v1587 = vunpack.c.l.b16 %v1166
    %v1588 = vunpack.c.h.b16 %v1166
    %v1589 = vunpack.c.l.b16 %v1167
    %v1590 = vunpack.c.h.b16 %v1167
    %v1591 = vunpack.c.l.b16 %v1168
    %v1592 = vunpack.c.h.b16 %v1168
    %v1593 = vunpack.c.l.b16 %v1169
    %v1594 = vunpack.c.h.b16 %v1169
    %v1595 = vunpack.c.l.b16 %v1170
    %v1596 = vunpack.c.h.b16 %v1170
    %v1597 = vunpack.c.l.b16 %v1171
    %v1598 = vunpack.c.h.b16 %v1171
    %v1599 = vunpack.c.l.b16 %v1172
    %v1600 = vunpack.c.h.b16 %v1172
    %v1601 = vunpack.c.l.b16 %v1173
    %v1602 = vunpack.c.h.b16 %v1173
    %v1603 = vunpack.c.l.b16 %v1174
    %v1604 = vunpack.c.h.b16 %v1174
    %v1605 = vunpack.c.l.b16 %v1175
    %v1606 = vunpack.c.h.b16 %v1175
    %v1607 = vunpack.c.l.b16 %v1176
    %v1608 = vunpack.c.h.b16 %v1176
    %v1609 = vunpack.c.l.b16 %v1177
    %v1610 = vunpack.c.h.b16 %v1177
    %v1611 = vunpack.c.l.b16 %v1178
    %v1612 = vunpack.c.h.b16 %v1178
    %v1613 = vunpack.c.l.b16 %v1179
    %v1614 = vunpack.c.h.b16 %v1179
    %v1615 = vunpack.c.l.b16 %v1180
    %v1616 = vunpack.c.h.b16 %v1180
    %v1617 = vunpack.c.l.b16 %v1181
    %v1618 = vunpack.c.h.b16 %v1181
    %v1619 = vunpack.c.l.b16 %v1182
    %v1620 = vunpack.c.h.b16 %v1182
    %v1621 = vunpack.c.l.b16 %v1183
    %v1622 = vunpack.c.h.b16 %v1183
    %v1623 = vunpack.c.l.b16 %v1184
    %v1624 = vunpack.c.h.b16 %v1184
    %v1625 = vunpack.c.l.b16 %v1185
    %v1626 = vunpack.c.h.b16 %v1185
    %v1627 = vunpack.c.l.b16 %v1186
    %v1628 = vunpack.c.h.b16 %v1186
    %v1629 = vunpack.c.l.b16 %v1187
    %v1630 = vunpack.c.h.b16 %v1187
    %v1631 = vunpack.c.l.b16 %v1188
    %v1632 = vunpack.c.h.b16 %v1188
    %v1633 = vunpack.c.l.b16 %v1189
    %v1634 = vunpack.c.h.b16 %v1189
    %v1635 = vunpack.c.l.b16 %v1190
    %v1636 = vunpack.c.h.b16 %v1190
    %v1637 = vunpack.c.l.b16 %v1191
    %v1638 = vunpack.c.h.b16 %v1191
    %v1639 = vunpack.c.l.b16 %v1192
    %v1640 = vunpack.c.h.b16 %v1192
    %v1641 = vunpack.c.l.b16 %v1193
    %v1642 = vunpack.c.h.b16 %v1193
    %v1643 = vunpack.c.l.b16 %v1194
    %v1644 = vunpack.c.h.b16 %v1194
    %v1645 = vunpack.c.l.b16 %v1195
    %v1646 = vunpack.c.h.b16 %v1195
    %v1647 = vunpack.c.l.b16 %v1196
    %v1648 = vunpack.c.h.b16 %v1196
    %v1649 = vunpack.c.l.b16 %v1197
    %v1650 = vunpack.c.h.b16 %v1197
    %v1651 = vunpack.c.l.b16 %v1198
    %v1652 = vunpack.c.h.b16 %v1198
    %v1653 = vunpack.c.l.b16 %v1199
    %v1654 = vunpack.c.h.b16 %v1199
    %v1655 = vunpack.c.l.b16 %v1200
    %v1656 = vunpack.c.h.b16 %v1200
    %v1657 = vunpack.c.l.b16 %v1201
    %v1658 = vunpack.c.h.b16 %v1201
    %v1659 = vunpack.c.l.b16 %v1202
    %v1660 = vunpack.c.h.b16 %v1202
    %v1661 = vunpack.c.l.b16 %v1203
    %v1662 = vunpack.c.h.b16 %v1203
    %v1663 = vunpack.c.l.b16 %v1204
    %v1664 = vunpack.c.h.b16 %v1204
    %v1665 = vunpack.c.l.b16 %v1205
    %v1666 = vunpack.c.h.b16 %v1205
    %v1667 = vunpack.c.l.b16 %v1206
    %v1668 = vunpack.c.h.b16 %v1206
    %v1669 = vunpack.c.l.b16 %v1207
    %v1670 = vunpack.c.h.b16 %v1207
    %v1671 = vunpack.c.l.b16 %v1208
    %v1672 = vunpack.c.h.b16 %v1208
    %v1673 = vunpack.c.l.b16 %v1209
    %v1674 = vunpack.c.h.b16 %v1209
    %v1675 = vunpack.c.l.b16 %v1210
    %v1676 = vunpack.c.h.b16 %v1210
    %v1677 = vunpack.c.l.b16 %v1211
    %v1678 = vunpack.c.h.b16 %v1211
    %v1679 = vunpack.c.l.b16 %v1212
    %v1680 = vunpack.c.h.b16 %v1212
    %v1681 = vunpack.c.l.b16 %v1213
    %v1682 = vunpack.c.h.b16 %v1213
    %v1683 = vunpack.c.l.b16 %v1214
    %v1684 = vunpack.c.h.b16 %v1214
    %v1685 = vunpack.c.l.b16 %v1215
    %v1686 = vunpack.c.h.b16 %v1215
    %v1687 = vunpack.c.l.b16 %v1216
    %v1688 = vunpack.c.h.b16 %v1216
    %v1689 = vunpack.c.l.b16 %v1217
    %v1690 = vunpack.c.h.b16 %v1217
    %v1691 = vunpack.c.l.b16 %v1218
    %v1692 = vunpack.c.h.b16 %v1218
    %v1693 = vunpack.c.l.b16 %v1219
    %v1694 = vunpack.c.h.b16 %v1219
    %v1695 = vunpack.c.l.b16 %v1220
    %v1696 = vunpack.c.h.b16 %v1220
    %v1697 = vunpack.c.l.b16 %v1221
    %v1698 = vunpack.c.h.b16 %v1221
    %v1699 = vunpack.c.l.b16 %v1222
    %v1700 = vunpack.c.h.b16 %v1222
    %v1701 = vunpack.c.l.b16 %v1223
    %v1702 = vunpack.c.h.b16 %v1223
    %v1703 = vunpack.c.l.b16 %v1224
    %v1704 = vunpack.c.h.b16 %v1224
    %v1705 = vunpack.c.l.b16 %v1225
    %v1706 = vunpack.c.h.b16 %v1225
    %v1707 = vunpack.c.l.b16 %v1226
    %v1708 = vunpack.c.h.b16 %v1226
    %v1709 = vunpack.c.l.b16 %v1227
    %v1710 = vunpack.c.h.b16 %v1227
    %v1711 = vunpack.c.l.b16 %v1228
    %v1712 = vunpack.c.h.b16 %v1228
    %v1713 = vpack.c.b16 %v1431, %v1425
    %v1714 = vpack.c.b16 %v1432, %v1426
    %v1715 = vpack.c.b16 %v1433, %v1427
    %v1716 = vpack.c.b16 %v1434, %v1428
    %v1717 = vpack.c.b16 %v1435, %v1429
    %v1718 = vpack.c.b16 %v1436, %v1430
    %v1719 = vpack.c.b16 %v1443, %v1437
    %v1720 = vpack.c.b16 %v1444, %v1438
    %v1721 = vpack.c.b16 %v1445, %v1439
    %v1722 = vpack.c.b16 %v1446, %v1440
    %v1723 = vpack.c.b16 %v1447, %v1441
    %v1724 = vpack.c.b16 %v1448, %v1442
    %v1725 = vpack.c.b16 %v1455, %v1449
    %v1726 = vpack.c.b16 %v1456, %v1450
    %v1727 = vpack.c.b16 %v1457, %v1451
    %v1728 = vpack.c.b16 %v1458, %v1452
    %v1729 = vpack.c.b16 %v1459, %v1453
    %v1730 = vpack.c.b16 %v1460, %v1454
    %v1731 = vpack.c.b16 %v1467, %v1461
    %v1732 = vpack.c.b16 %v1468, %v1462
    %v1733 = vpack.c.b16 %v1469, %v1463
    %v1734 = vpack.c.b16 %v1470, %v1464
    %v1735 = vpack.c.b16 %v1471, %v1465
    %v1736 = vpack.c.b16 %v1472, %v1466
    %v1737 = vpack.c.b16 %v1479, %v1473
    %v1738 = vpack.c.b16 %v1480, %v1474
    %v1739 = vpack.c.b16 %v1481, %v1475
    %v1740 = vpack.c.b16 %v1482, %v1476
    %v1741 = vpack.c.b16 %v1483, %v1477
    %v1742 = vpack.c.b16 %v1484, %v1478
    %v1743 = vpack.c.b16 %v1491, %v1485
    %v1744 = vpack.c.b16 %v1492, %v1486
    %v1745 = vpack.c.b16 %v1493, %v1487
    %v1746 = vpack.c.b16 %v1494, %v1488
    %v1747 = vpack.c.b16 %v1495, %v1489
    %v1748 = vpack.c.b16 %v1496, %v1490
    %v1749 = vpack.c.b16 %v1503, %v1497
    %v1750 = vpack.c.b16 %v1504, %v1498
    %v1751 = vpack.c.b16 %v1505, %v1499
    %v1752 = vpack.c.b16 %v1506, %v1500
    %v1753 = vpack.c.b16 %v1507, %v1501
    %v1754 = vpack.c.b16 %v1508, %v1502
    %v1755 = vpack.c.b16 %v1515, %v1509
    %v1756 = vpack.c.b16 %v1516, %v1510
    %v1757 = vpack.c.b16 %v1517, %v1511
    %v1758 = vpack.c.b16 %v1518, %v1512
    %v1759 = vpack.c.b16 %v1519, %v1513
    %v1760 = vpack.c.b16 %v1520, %v1514
    %v1761 = vpack.c.b16 %v1527, %v1521
    %v1762 = vpack.c.b16 %v1528, %v1522
    %v1763 = vpack.c.b16 %v1529, %v1523
    %v1764 = vpack.c.b16 %v1530, %v1524
    %v1765 = vpack.c.b16 %v1531, %v1525
    %v1766 = vpack.c.b16 %v1532, %v1526
    %v1767 = vpack.c.b16 %v1539, %v1533
    %v1768 = vpack.c.b16 %v1540, %v1534
    %v1769 = vpack.c.b16 %v1541, %v1535
    %v1770 = vpack.c.b16 %v1542, %v1536
    %v1771 = vpack.c.b16 %v1543, %v1537
    %v1772 = vpack.c.b16 %v1544, %v1538
    %v1773 = vpack.c.b16 %v1551, %v1545
    %v1774 = vpack.c.b16 %v1552, %v1546
    %v1775 = vpack.c.b16 %v1553, %v1547
    %v1776 = vpack.c.b16 %v1554, %v1548
    %v1777 = vpack.c.b16 %v1555, %v1549
    %v1778 = vpack.c.b16 %v1556, %v1550
    %v1779 = vpack.c.b16 %v1563, %v1557
    %v1780 = vpack.c.b16 %v1564, %v1558
    %v1781 = vpack.c.b16 %v1565, %v1559
    %v1782 = vpack.c.b16 %v1566, %v1560
    %v1783 = vpack.c.b16 %v1567, %v1561
    %v1784 = vpack.c.b16 %v1568, %v1562
    %v1785 = vpack.c.b16 %v1575, %v1569
    %v1786 = vpack.c.b16 %v1576, %v1570
    %v1787 = vpack.c.b16 %v1577, %v1571
    %v1788 = vpack.c.b16 %v1578, %v1572
    %v1789 = vpack.c.b16 %v1579, %v1573
    %v1790 = vpack.c.b16 %v1580, %v1574
    %v1791 = vpack.c.b16 %v1587, %v1581
    %v1792 = vpack.c.b16 %v1588, %v1582
    %v1793 = vpack.c.b16 %v1589, %v1583
    %v1794 = vpack.c.b16 %v1590, %v1584
    %v1795 = vpack.c.b16 %v1591, %v1585
    %v1796 = vpack.c.b16 %v1592, %v1586
    %v1797 = vpack.c.b16 %v1599, %v1593
    %v1798 = vpack.c.b16 %v1600, %v1594
    %v1799 = vpack.c.b16 %v1601, %v1595
    %v1800 = vpack.c.b16 %v1602, %v1596
    %v1801 = vpack.c.b16 %v1603, %v1597
    %v1802 = vpack.c.b16 %v1604, %v1598
    %v1803 = vpack.c.b16 %v1611, %v1605
    %v1804 = vpack.c.b16 %v1612, %v1606
    %v1805 = vpack.c.b16 %v1613, %v1607
    %v1806 = vpack.c.b16 %v1614, %v1608
    %v1807 = vpack.c.b16 %v1615, %v1609
    %v1808 = vpack.c.b16 %v1616, %v1610
    %v1809 = vpack.c.b16 %v1623, %v1617
    %v1810 = vpack.c.b16 %v1624, %v1618
    %v1811 = vpack.c.b16 %v1625, %v1619
    %v1812 = vpack.c.b16 %v1626, %v1620
    %v1813 = vpack.c.b16 %v1627, %v1621
    %v1814 = vpack.c.b16 %v1628, %v1622
    %v1815 = vpack.c.b16 %v1635, %v1629
    %v1816 = vpack.c.b16 %v1636, %v1630
    %v1817 = vpack.c.b16 %v1637, %v1631
    %v1818 = vpack.c.b16 %v1638, %v1632
    %v1819 = vpack.c.b16 %v1639, %v1633
    %v1820 = vpack.c.b16 %v1640, %v1634
    %v1821 = vpack.c.b16 %v1647, %v1641
    %v1822 = vpack.c.b16 %v1648, %v1642
    %v1823 = vpack.c.b16 %v1649, %v1643
    %v1824 = vpack.c.b16 %v1650, %v1644
    %v1825 = vpack.c.b16 %v1651, %v1645
    %v1826 = vpack.c.b16 %v1652, %v1646
    %v1827 = vpack.c.b16 %v1659, %v1653
    %v1828 = vpack.c.b16 %v1660, %v1654
    %v1829 = vpack.c.b16 %v1661, %v1655
    %v1830 = vpack.c.b16 %v1662, %v1656
    %v1831 = vpack.c.b16 %v1663, %v1657
    %v1832 = vpack.c.b16 %v1664, %v1658
    %v1833 = vpack.c.b16 %v1671, %v1665
    %v1834 = vpack.c.b16 %v1672, %v1666
    %v1835 = vpack.c.b16 %v1673, %v1667
    %v1836 = vpack.c.b16 %v1674, %v1668
    %v1837 = vpack.c.b16 %v1675, %v1669
    %v1838 = vpack.c.b16 %v1676, %v1670
    %v1839 = vpack.c.b16 %v1683, %v1677
    %v1840 = vpack.c.b16 %v1684, %v1678
    %v1841 = vpack.c.b16 %v1685, %v1679
    %v1842 = vpack.c.b16 %v1686, %v1680
    %v1843 = vpack.c.b16 %v1687, %v1681
    %v1844 = vpack.c.b16 %v1688, %v1682
    %v1845 = vpack.c.b16 %v1695, %v1689
    %v1846 = vpack.c.b16 %v1696, %v1690
    %v1847 = vpack.c.b16 %v1697, %v1691
    %v1848 = vpack.c.b16 %v1698, %v1692
    %v1849 = vpack.c.b16 %v1699, %v1693
    %v1850 = vpack.c.b16 %v1700, %v1694
    %v1851 = vpack.c.b16 %v1707, %v1701
    %v1852 = vpack.c.b16 %v1708, %v1702
    %v1853 = vpack.c.b16 %v1709, %v1703
    %v1854 = vpack.c.b16 %v1710, %v1704
    %v1855 = vpack.c.b16 %v1711, %v1705
    %v1856 = vpack.c.b16 %v1712, %v1706
    %2001 = vmatprep.subr.bf16.mxu0 %v1756
    %2002 = vmatpush1.bf16.msra.mxu0 %v1755
    %2003 = vmatprep.subr.bf16.mxu0 %v1750
    %2004 = vmatpush1.bf16.msra.mxu0 %v1749
    %2005 = vmatprep.subr.bf16.mxu0 %v1744
    %2006 = vmatpush1.bf16.msra.mxu0 %v1743
    %2007 = vmatprep.subr.bf16.mxu0 %v1738
    %2008 = vmatpush1.bf16.msra.mxu0 %v1737
    %2009 = vmatprep.subr.bf16.mxu0 %v1732
    %2010 = vmatpush1.bf16.msra.mxu0 %v1731
    %2011 = vmatprep.subr.bf16.mxu0 %v1726
    %2012 = vmatpush1.bf16.msra.mxu0 %v1725
    %2013 = vmatprep.subr.bf16.mxu0 %v1720
    %2014 = vmatpush1.bf16.msra.mxu0 %v1719
    %2015 = vmatprep.subr.bf16.mxu0 %v1714
    %2016 = vmatpush1.bf16.msra.mxu0 %v1713
    %2017 = vmatprep.subr.bf16.mxu0 %v1804
    %2018 = vmatpush2.bf16.msra.mxu0 %v1803
    %2019 = vmatprep.subr.bf16.mxu0 %v1798
    %2020 = vmatpush2.bf16.msra.mxu0 %v1797
    %2021 = vmatprep.subr.bf16.mxu0 %v1792
    %2022 = vmatpush2.bf16.msra.mxu0 %v1791
    %2023 = vmatprep.subr.bf16.mxu0 %v1786
    %2024 = vmatpush2.bf16.msra.mxu0 %v1785
    %2025 = vmatprep.subr.bf16.mxu0 %v1780
    %2026 = vmatpush2.bf16.msra.mxu0 %v1779
    %2027 = vmatprep.subr.bf16.mxu0 %v1774
    %2028 = vmatpush2.bf16.msra.mxu0 %v1773
    %2029 = vmatprep.subr.bf16.mxu0 %v1768
    %2030 = vmatpush2.bf16.msra.mxu0 %v1767
    %2031 = vmatprep.subr.bf16.mxu0 %v1762
    %2032 = vmatpush2.bf16.msra.mxu0 %v1761
    %2033 = vmatprep.mubr.bf16.mxu0 %v1253
    %2034 = vmatmul.mubr.bf16.gmra.mxu0 %v1241
    %v2035 = vpop.f32.mrf.mxu0
    %v2036 = vadd.f32 0.0, %v2035
    %v2037 = vpop.f32.mrf.mxu0
    %v2038 = vadd.f32 0.0, %v2037
    %v2039 = vpop.f32.mrf.mxu0
    %v2040 = vadd.f32 0.0, %v2039
    %v2041 = vpop.f32.mrf.mxu0
    %v2042 = vadd.f32 0.0, %v2041
    %2043 = vmatprep.mubr.bf16.mxu0 %v1271
    %2044 = vmatmul.mubr.bf16.gmra.mxu0 %v1268
    %v2045 = vpop.f32.mrf.mxu0
    %v2046 = vadd.f32 0.0, %v2045
    %v2047 = vpop.f32.mrf.mxu0
    %v2048 = vadd.f32 0.0, %v2047
    %v2049 = vpop.f32.mrf.mxu0
    %v2050 = vpop.f32.mrf.mxu0
    %2051 = vdwg.mxu0
    %2052 = vmatprep.subr.bf16.mxu0 %v1852
    %2053 = vmatpush1.bf16.msra.mxu0 %v1851
    %2054 = vmatprep.subr.bf16.mxu0 %v1846
    %2055 = vmatpush1.bf16.msra.mxu0 %v1845
    %2056 = vmatprep.subr.bf16.mxu0 %v1840
    %2057 = vmatpush1.bf16.msra.mxu0 %v1839
    %2058 = vmatprep.subr.bf16.mxu0 %v1834
    %2059 = vmatpush1.bf16.msra.mxu0 %v1833
    %2060 = vmatprep.subr.bf16.mxu0 %v1828
    %2061 = vmatpush1.bf16.msra.mxu0 %v1827
    %2062 = vmatprep.subr.bf16.mxu0 %v1822
    %2063 = vmatpush1.bf16.msra.mxu0 %v1821
    %2064 = vmatprep.subr.bf16.mxu0 %v1816
    %2065 = vmatpush1.bf16.msra.mxu0 %v1815
    %2066 = vmatprep.subr.bf16.mxu0 %v1810
    %2067 = vmatpush1.bf16.msra.mxu0 %v1809
    %2068 = vmatprep.subr.bf16.mxu0 0
    %2069 = vmatpush2.bf16.msra.mxu0 0
    %2070 = vmatprep.subr.bf16.mxu0 0
    %2071 = vmatpush2.bf16.msra.mxu0 0
    %2072 = vmatprep.subr.bf16.mxu0 0
    %2073 = vmatpush2.bf16.msra.mxu0 0
    %2074 = vmatprep.subr.bf16.mxu0 0
    %2075 = vmatpush2.bf16.msra.mxu0 0
    %2076 = vmatprep.subr.bf16.mxu0 0
    %2077 = vmatpush2.bf16.msra.mxu0 0
    %2078 = vmatprep.subr.bf16.mxu0 0
    %2079 = vmatpush2.bf16.msra.mxu0 0
    %2080 = vmatprep.subr.bf16.mxu0 0
    %2081 = vmatpush2.bf16.msra.mxu0 0
    %2082 = vmatprep.subr.bf16.mxu0 0
    %2083 = vmatpush2.bf16.msra.mxu0 0
    %2084 = vmatprep.mubr.bf16.mxu0 0
    %2085 = vmatmul.mubr.bf16.gmra.mxu0 %v1265
    %v2086 = vpop.f32.mrf.mxu0
    %v2087 = vadd.f32 %v2036, %v2086
    %v2088 = vpop.f32.mrf.mxu0
    %v2089 = vadd.f32 %v2038, %v2088
    %v2090 = vpop.f32.mrf.mxu0
    %v2091 = vadd.f32 %v2040, %v2090
    %v2092 = vpop.f32.mrf.mxu0
    %v2093 = vadd.f32 %v2042, %v2092
    %2094 = vmatprep.mubr.bf16.mxu0 0
    %2095 = vmatmul.mubr.bf16.gmra.mxu0 %v1274
    %v2096 = vpop.f32.mrf.mxu0
    %v2097 = vadd.f32 %v2046, %v2096
    %v2098 = vpop.f32.mrf.mxu0
    %v2099 = vadd.f32 %v2048, %v2098
    %v2100 = vpop.f32.mrf.mxu0
    %v2101 = vpop.f32.mrf.mxu0
    %2102 = vdwg.mxu0
    %2103 = vmatprep.subr.bf16.mxu0 %v1758
    %2104 = vmatpush1.bf16.msra.mxu0 %v1757
    %2105 = vmatprep.subr.bf16.mxu0 %v1752
    %2106 = vmatpush1.bf16.msra.mxu0 %v1751
    %2107 = vmatprep.subr.bf16.mxu0 %v1746
    %2108 = vmatpush1.bf16.msra.mxu0 %v1745
    %2109 = vmatprep.subr.bf16.mxu0 %v1740
    %2110 = vmatpush1.bf16.msra.mxu0 %v1739
    %2111 = vmatprep.subr.bf16.mxu0 %v1734
    %2112 = vmatpush1.bf16.msra.mxu0 %v1733
    %2113 = vmatprep.subr.bf16.mxu0 %v1728
    %2114 = vmatpush1.bf16.msra.mxu0 %v1727
    %2115 = vmatprep.subr.bf16.mxu0 %v1722
    %2116 = vmatpush1.bf16.msra.mxu0 %v1721
    %2117 = vmatprep.subr.bf16.mxu0 %v1716
    %2118 = vmatpush1.bf16.msra.mxu0 %v1715
    %2119 = vmatprep.subr.bf16.mxu0 %v1806
    %2120 = vmatpush2.bf16.msra.mxu0 %v1805
    %2121 = vmatprep.subr.bf16.mxu0 %v1800
    %2122 = vmatpush2.bf16.msra.mxu0 %v1799
    %2123 = vmatprep.subr.bf16.mxu0 %v1794
    %2124 = vmatpush2.bf16.msra.mxu0 %v1793
    %2125 = vmatprep.subr.bf16.mxu0 %v1788
    %2126 = vmatpush2.bf16.msra.mxu0 %v1787
    %2127 = vmatprep.subr.bf16.mxu0 %v1782
    %2128 = vmatpush2.bf16.msra.mxu0 %v1781
    %2129 = vmatprep.subr.bf16.mxu0 %v1776
    %2130 = vmatpush2.bf16.msra.mxu0 %v1775
    %2131 = vmatprep.subr.bf16.mxu0 %v1770
    %2132 = vmatpush2.bf16.msra.mxu0 %v1769
    %2133 = vmatprep.subr.bf16.mxu0 %v1764
    %2134 = vmatpush2.bf16.msra.mxu0 %v1763
    %2135 = vmatprep.mubr.bf16.mxu0 %v1253
    %2136 = vmatmul.mubr.bf16.gmra.mxu0 %v1241
    %v2137 = vpop.f32.mrf.mxu0
    %v2138 = vadd.f32 0.0, %v2137
    %v2139 = vpop.f32.mrf.mxu0
    %v2140 = vadd.f32 0.0, %v2139
    %v2141 = vpop.f32.mrf.mxu0
    %v2142 = vadd.f32 0.0, %v2141
    %v2143 = vpop.f32.mrf.mxu0
    %v2144 = vadd.f32 0.0, %v2143
    %2145 = vmatprep.mubr.bf16.mxu0 %v1271
    %2146 = vmatmul.mubr.bf16.gmra.mxu0 %v1268
    %v2147 = vpop.f32.mrf.mxu0
    %v2148 = vadd.f32 0.0, %v2147
    %v2149 = vpop.f32.mrf.mxu0
    %v2150 = vadd.f32 0.0, %v2149
    %v2151 = vpop.f32.mrf.mxu0
    %v2152 = vpop.f32.mrf.mxu0
    %2153 = vdwg.mxu0
    %2154 = vmatprep.subr.bf16.mxu0 %v1854
    %2155 = vmatpush1.bf16.msra.mxu0 %v1853
    %2156 = vmatprep.subr.bf16.mxu0 %v1848
    %2157 = vmatpush1.bf16.msra.mxu0 %v1847
    %2158 = vmatprep.subr.bf16.mxu0 %v1842
    %2159 = vmatpush1.bf16.msra.mxu0 %v1841
    %2160 = vmatprep.subr.bf16.mxu0 %v1836
    %2161 = vmatpush1.bf16.msra.mxu0 %v1835
    %2162 = vmatprep.subr.bf16.mxu0 %v1830
    %2163 = vmatpush1.bf16.msra.mxu0 %v1829
    %2164 = vmatprep.subr.bf16.mxu0 %v1824
    %2165 = vmatpush1.bf16.msra.mxu0 %v1823
    %2166 = vmatprep.subr.bf16.mxu0 %v1818
    %2167 = vmatpush1.bf16.msra.mxu0 %v1817
    %2168 = vmatprep.subr.bf16.mxu0 %v1812
    %2169 = vmatpush1.bf16.msra.mxu0 %v1811
    %2170 = vmatprep.subr.bf16.mxu0 0
    %2171 = vmatpush2.bf16.msra.mxu0 0
    %2172 = vmatprep.subr.bf16.mxu0 0
    %2173 = vmatpush2.bf16.msra.mxu0 0
    %2174 = vmatprep.subr.bf16.mxu0 0
    %2175 = vmatpush2.bf16.msra.mxu0 0
    %2176 = vmatprep.subr.bf16.mxu0 0
    %2177 = vmatpush2.bf16.msra.mxu0 0
    %2178 = vmatprep.subr.bf16.mxu0 0
    %2179 = vmatpush2.bf16.msra.mxu0 0
    %2180 = vmatprep.subr.bf16.mxu0 0
    %2181 = vmatpush2.bf16.msra.mxu0 0
    %2182 = vmatprep.subr.bf16.mxu0 0
    %2183 = vmatpush2.bf16.msra.mxu0 0
    %2184 = vmatprep.subr.bf16.mxu0 0
    %2185 = vmatpush2.bf16.msra.mxu0 0
    %2186 = vmatprep.mubr.bf16.mxu0 0
    %2187 = vmatmul.mubr.bf16.gmra.mxu0 %v1265
    %v2188 = vpop.f32.mrf.mxu0
    %v2189 = vadd.f32 %v2138, %v2188
    %v2190 = vpop.f32.mrf.mxu0
    %v2191 = vadd.f32 %v2140, %v2190
    %v2192 = vpop.f32.mrf.mxu0
    %v2193 = vadd.f32 %v2142, %v2192
    %v2194 = vpop.f32.mrf.mxu0
    %v2195 = vadd.f32 %v2144, %v2194
    %2196 = vmatprep.mubr.bf16.mxu0 0
    %2197 = vmatmul.mubr.bf16.gmra.mxu0 %v1274
    %v2198 = vpop.f32.mrf.mxu0
    %v2199 = vadd.f32 %v2148, %v2198
    %v2200 = vpop.f32.mrf.mxu0
    %v2201 = vadd.f32 %v2150, %v2200
    %v2202 = vpop.f32.mrf.mxu0
    %v2203 = vpop.f32.mrf.mxu0
    %2204 = vdwg.mxu0
    %2205 = vmatprep.subr.bf16.mxu0 %v1760
    %2206 = vmatpush1.bf16.msra.mxu0 %v1759
    %2207 = vmatprep.subr.bf16.mxu0 %v1754
    %2208 = vmatpush1.bf16.msra.mxu0 %v1753
    %2209 = vmatprep.subr.bf16.mxu0 %v1748
    %2210 = vmatpush1.bf16.msra.mxu0 %v1747
    %2211 = vmatprep.subr.bf16.mxu0 %v1742
    %2212 = vmatpush1.bf16.msra.mxu0 %v1741
    %2213 = vmatprep.subr.bf16.mxu0 %v1736
    %2214 = vmatpush1.bf16.msra.mxu0 %v1735
    %2215 = vmatprep.subr.bf16.mxu0 %v1730
    %2216 = vmatpush1.bf16.msra.mxu0 %v1729
    %2217 = vmatprep.subr.bf16.mxu0 %v1724
    %2218 = vmatpush1.bf16.msra.mxu0 %v1723
    %2219 = vmatprep.subr.bf16.mxu0 %v1718
    %2220 = vmatpush1.bf16.msra.mxu0 %v1717
    %2221 = vmatprep.subr.bf16.mxu0 %v1808
    %2222 = vmatpush2.bf16.msra.mxu0 %v1807
    %2223 = vmatprep.subr.bf16.mxu0 %v1802
    %2224 = vmatpush2.bf16.msra.mxu0 %v1801
    %2225 = vmatprep.subr.bf16.mxu0 %v1796
    %2226 = vmatpush2.bf16.msra.mxu0 %v1795
    %2227 = vmatprep.subr.bf16.mxu0 %v1790
    %2228 = vmatpush2.bf16.msra.mxu0 %v1789
    %2229 = vmatprep.subr.bf16.mxu0 %v1784
    %2230 = vmatpush2.bf16.msra.mxu0 %v1783
    %2231 = vmatprep.subr.bf16.mxu0 %v1778
    %2232 = vmatpush2.bf16.msra.mxu0 %v1777
    %2233 = vmatprep.subr.bf16.mxu0 %v1772
    %2234 = vmatpush2.bf16.msra.mxu0 %v1771
    %2235 = vmatprep.subr.bf16.mxu0 %v1766
    %2236 = vmatpush2.bf16.msra.mxu0 %v1765
    %2237 = vmatprep.mubr.bf16.mxu0 %v1253
    %2238 = vmatmul.mubr.bf16.gmra.mxu0 %v1241
    %v2239 = vpop.f32.mrf.mxu0
    %v2240 = vadd.f32 0.0, %v2239
    %v2241 = vpop.f32.mrf.mxu0
    %v2242 = vadd.f32 0.0, %v2241
    %v2243 = vpop.f32.mrf.mxu0
    %v2244 = vadd.f32 0.0, %v2243
    %v2245 = vpop.f32.mrf.mxu0
    %v2246 = vadd.f32 0.0, %v2245
    %2247 = vmatprep.mubr.bf16.mxu0 %v1271
    %2248 = vmatmul.mubr.bf16.gmra.mxu0 %v1268
    %v2249 = vpop.f32.mrf.mxu0
    %v2250 = vadd.f32 0.0, %v2249
    %v2251 = vpop.f32.mrf.mxu0
    %v2252 = vadd.f32 0.0, %v2251
    %v2253 = vpop.f32.mrf.mxu0
    %v2254 = vpop.f32.mrf.mxu0
    %2255 = vdwg.mxu0
    %2256 = vmatprep.subr.bf16.mxu0 %v1856
    %2257 = vmatpush1.bf16.msra.mxu0 %v1855
    %2258 = vmatprep.subr.bf16.mxu0 %v1850
    %2259 = vmatpush1.bf16.msra.mxu0 %v1849
    %2260 = vmatprep.subr.bf16.mxu0 %v1844
    %2261 = vmatpush1.bf16.msra.mxu0 %v1843
    %2262 = vmatprep.subr.bf16.mxu0 %v1838
    %2263 = vmatpush1.bf16.msra.mxu0 %v1837
    %2264 = vmatprep.subr.bf16.mxu0 %v1832
    %2265 = vmatpush1.bf16.msra.mxu0 %v1831
    %2266 = vmatprep.subr.bf16.mxu0 %v1826
    %2267 = vmatpush1.bf16.msra.mxu0 %v1825
    %2268 = vmatprep.subr.bf16.mxu0 %v1820
    %2269 = vmatpush1.bf16.msra.mxu0 %v1819
    %2270 = vmatprep.subr.bf16.mxu0 %v1814
    %2271 = vmatpush1.bf16.msra.mxu0 %v1813
    %2272 = vmatprep.subr.bf16.mxu0 0
    %2273 = vmatpush2.bf16.msra.mxu0 0
    %2274 = vmatprep.subr.bf16.mxu0 0
    %2275 = vmatpush2.bf16.msra.mxu0 0
    %2276 = vmatprep.subr.bf16.mxu0 0
    %2277 = vmatpush2.bf16.msra.mxu0 0
    %2278 = vmatprep.subr.bf16.mxu0 0
    %2279 = vmatpush2.bf16.msra.mxu0 0
    %2280 = vmatprep.subr.bf16.mxu0 0
    %2281 = vmatpush2.bf16.msra.mxu0 0
    %2282 = vmatprep.subr.bf16.mxu0 0
    %2283 = vmatpush2.bf16.msra.mxu0 0
    %2284 = vmatprep.subr.bf16.mxu0 0
    %2285 = vmatpush2.bf16.msra.mxu0 0
    %2286 = vmatprep.subr.bf16.mxu0 0
    %2287 = vmatpush2.bf16.msra.mxu0 0
    %2288 = vmatprep.mubr.bf16.mxu0 0
    %2289 = vmatmul.mubr.bf16.gmra.mxu0 %v1265
    %v2290 = vpop.f32.mrf.mxu0
    %v2291 = vadd.f32 %v2240, %v2290
    %v2292 = vpop.f32.mrf.mxu0
    %v2293 = vadd.f32 %v2242, %v2292
    %v2294 = vpop.f32.mrf.mxu0
    %v2295 = vadd.f32 %v2244, %v2294
    %v2296 = vpop.f32.mrf.mxu0
    %v2297 = vadd.f32 %v2246, %v2296
    %2298 = vmatprep.mubr.bf16.mxu0 0
    %2299 = vmatmul.mubr.bf16.gmra.mxu0 %v1274
    %v2300 = vpop.f32.mrf.mxu0
    %v2301 = vadd.f32 %v2250, %v2300
    %v2302 = vpop.f32.mrf.mxu0
    %v2303 = vadd.f32 %v2252, %v2302
    %v2304 = vpop.f32.mrf.mxu0
    %v2305 = vpop.f32.mrf.mxu0
    %2306 = vdwg.mxu0
    %v2451 = vunpack.c.l.b16 %v928
    %v2452 = vunpack.c.h.b16 %v928
    %v2453 = vunpack.c.l.b16 %v929
    %v2454 = vunpack.c.h.b16 %v929
    %v2455 = vunpack.c.l.b16 %v930
    %v2456 = vunpack.c.h.b16 %v930
    %v2457 = vunpack.c.l.b16 %v931
    %v2458 = vunpack.c.h.b16 %v931
    %v2459 = vunpack.c.l.b16 %v932
    %v2460 = vunpack.c.h.b16 %v932
    %v2461 = vunpack.c.l.b16 %v933
    %v2462 = vunpack.c.h.b16 %v933
    %v2463 = vunpack.c.l.b16 %v934
    %v2464 = vunpack.c.h.b16 %v934
    %v2465 = vunpack.c.l.b16 %v935
    %v2466 = vunpack.c.h.b16 %v935
    %v2467 = vunpack.c.l.b16 %v936
    %v2468 = vunpack.c.h.b16 %v936
    %v2469 = vunpack.c.l.b16 %v937
    %v2470 = vunpack.c.h.b16 %v937
    %v2471 = vunpack.c.l.b16 %v938
    %v2472 = vunpack.c.h.b16 %v938
    %v2473 = vunpack.c.l.b16 %v939
    %v2474 = vunpack.c.h.b16 %v939
    %v2475 = vunpack.c.l.b16 %v940
    %v2476 = vunpack.c.h.b16 %v940
    %v2477 = vunpack.c.l.b16 %v941
    %v2478 = vunpack.c.h.b16 %v941
    %v2479 = vunpack.c.l.b16 %v942
    %v2480 = vunpack.c.h.b16 %v942
    %v2481 = vunpack.c.l.b16 %v943
    %v2482 = vunpack.c.h.b16 %v943
    %v2483 = vunpack.c.l.b16 %v944
    %v2484 = vunpack.c.h.b16 %v944
    %v2485 = vunpack.c.l.b16 %v945
    %v2486 = vunpack.c.h.b16 %v945
    %v2487 = vunpack.c.l.b16 %v946
    %v2488 = vunpack.c.h.b16 %v946
    %v2489 = vunpack.c.l.b16 %v947
    %v2490 = vunpack.c.h.b16 %v947
    %v2491 = vunpack.c.l.b16 %v948
    %v2492 = vunpack.c.h.b16 %v948
    %v2493 = vunpack.c.l.b16 %v949
    %v2494 = vunpack.c.h.b16 %v949
    %v2495 = vunpack.c.l.b16 %v950
    %v2496 = vunpack.c.h.b16 %v950
    %v2497 = vunpack.c.l.b16 %v951
    %v2498 = vunpack.c.h.b16 %v951
    %v2499 = vunpack.c.l.b16 %v952
    %v2500 = vunpack.c.h.b16 %v952
    %v2501 = vunpack.c.l.b16 %v953
    %v2502 = vunpack.c.h.b16 %v953
    %v2503 = vunpack.c.l.b16 %v954
    %v2504 = vunpack.c.h.b16 %v954
    %v2505 = vunpack.c.l.b16 %v955
    %v2506 = vunpack.c.h.b16 %v955
    %v2507 = vunpack.c.l.b16 %v956
    %v2508 = vunpack.c.h.b16 %v956
    %v2509 = vunpack.c.l.b16 %v957
    %v2510 = vunpack.c.h.b16 %v957
    %v2511 = vunpack.c.l.b16 %v958
    %v2512 = vunpack.c.h.b16 %v958
    %v2513 = vunpack.c.l.b16 %v959
    %v2514 = vunpack.c.h.b16 %v959
    %v2515 = vunpack.c.l.b16 %v960
    %v2516 = vunpack.c.h.b16 %v960
    %v2517 = vunpack.c.l.b16 %v961
    %v2518 = vunpack.c.h.b16 %v961
    %v2519 = vunpack.c.l.b16 %v962
    %v2520 = vunpack.c.h.b16 %v962
    %v2521 = vunpack.c.l.b16 %v963
    %v2522 = vunpack.c.h.b16 %v963
    %v2523 = vunpack.c.l.b16 %v964
    %v2524 = vunpack.c.h.b16 %v964
    %v2525 = vunpack.c.l.b16 %v965
    %v2526 = vunpack.c.h.b16 %v965
    %v2527 = vunpack.c.l.b16 %v966
    %v2528 = vunpack.c.h.b16 %v966
    %v2529 = vunpack.c.l.b16 %v967
    %v2530 = vunpack.c.h.b16 %v967
    %v2531 = vunpack.c.l.b16 %v968
    %v2532 = vunpack.c.h.b16 %v968
    %v2533 = vunpack.c.l.b16 %v969
    %v2534 = vunpack.c.h.b16 %v969
    %v2535 = vunpack.c.l.b16 %v970
    %v2536 = vunpack.c.h.b16 %v970
    %v2537 = vunpack.c.l.b16 %v971
    %v2538 = vunpack.c.h.b16 %v971
    %v2539 = vunpack.c.l.b16 %v972
    %v2540 = vunpack.c.h.b16 %v972
    %v2541 = vunpack.c.l.b16 %v973
    %v2542 = vunpack.c.h.b16 %v973
    %v2543 = vunpack.c.l.b16 %v974
    %v2544 = vunpack.c.h.b16 %v974
    %v2545 = vunpack.c.l.b16 %v975
    %v2546 = vunpack.c.h.b16 %v975
    %v2547 = vunpack.c.l.b16 %v976
    %v2548 = vunpack.c.h.b16 %v976
    %v2549 = vunpack.c.l.b16 %v977
    %v2550 = vunpack.c.h.b16 %v977
    %v2551 = vunpack.c.l.b16 %v978
    %v2552 = vunpack.c.h.b16 %v978
    %v2553 = vunpack.c.l.b16 %v979
    %v2554 = vunpack.c.h.b16 %v979
    %v2555 = vunpack.c.l.b16 %v980
    %v2556 = vunpack.c.h.b16 %v980
    %v2557 = vunpack.c.l.b16 %v981
    %v2558 = vunpack.c.h.b16 %v981
    %v2559 = vunpack.c.l.b16 %v982
    %v2560 = vunpack.c.h.b16 %v982
    %v2561 = vunpack.c.l.b16 %v983
    %v2562 = vunpack.c.h.b16 %v983
    %v2563 = vunpack.c.l.b16 %v984
    %v2564 = vunpack.c.h.b16 %v984
    %v2565 = vunpack.c.l.b16 %v985
    %v2566 = vunpack.c.h.b16 %v985
    %v2567 = vunpack.c.l.b16 %v986
    %v2568 = vunpack.c.h.b16 %v986
    %v2569 = vunpack.c.l.b16 %v987
    %v2570 = vunpack.c.h.b16 %v987
    %v2571 = vunpack.c.l.b16 %v988
    %v2572 = vunpack.c.h.b16 %v988
    %v2573 = vunpack.c.l.b16 %v989
    %v2574 = vunpack.c.h.b16 %v989
    %v2575 = vunpack.c.l.b16 %v990
    %v2576 = vunpack.c.h.b16 %v990
    %v2577 = vunpack.c.l.b16 %v991
    %v2578 = vunpack.c.h.b16 %v991
    %v2579 = vunpack.c.l.b16 %v992
    %v2580 = vunpack.c.h.b16 %v992
    %v2581 = vunpack.c.l.b16 %v993
    %v2582 = vunpack.c.h.b16 %v993
    %v2583 = vunpack.c.l.b16 %v994
    %v2584 = vunpack.c.h.b16 %v994
    %v2585 = vunpack.c.l.b16 %v995
    %v2586 = vunpack.c.h.b16 %v995
    %v2587 = vunpack.c.l.b16 %v996
    %v2588 = vunpack.c.h.b16 %v996
    %v2589 = vunpack.c.l.b16 %v997
    %v2590 = vunpack.c.h.b16 %v997
    %v2591 = vunpack.c.l.b16 %v998
    %v2592 = vunpack.c.h.b16 %v998
    %v2593 = vunpack.c.l.b16 %v999
    %v2594 = vunpack.c.h.b16 %v999
    %v2595 = vunpack.c.l.b16 %v1000
    %v2596 = vunpack.c.h.b16 %v1000
    %v2597 = vunpack.c.l.b16 %v1001
    %v2598 = vunpack.c.h.b16 %v1001
    %v2599 = vunpack.c.l.b16 %v1002
    %v2600 = vunpack.c.h.b16 %v1002
    %v2601 = vunpack.c.l.b16 %v1003
    %v2602 = vunpack.c.h.b16 %v1003
    %v2603 = vunpack.c.l.b16 %v1004
    %v2604 = vunpack.c.h.b16 %v1004
    %v2605 = vunpack.c.l.b16 %v1005
    %v2606 = vunpack.c.h.b16 %v1005
    %v2607 = vunpack.c.l.b16 %v1006
    %v2608 = vunpack.c.h.b16 %v1006
    %v2609 = vunpack.c.l.b16 %v1007
    %v2610 = vunpack.c.h.b16 %v1007
    %v2611 = vunpack.c.l.b16 %v1008
    %v2612 = vunpack.c.h.b16 %v1008
    %v2613 = vunpack.c.l.b16 %v1009
    %v2614 = vunpack.c.h.b16 %v1009
    %v2615 = vunpack.c.l.b16 %v1010
    %v2616 = vunpack.c.h.b16 %v1010
    %v2617 = vunpack.c.l.b16 %v1011
    %v2618 = vunpack.c.h.b16 %v1011
    %v2619 = vunpack.c.l.b16 %v1012
    %v2620 = vunpack.c.h.b16 %v1012
    %v2621 = vunpack.c.l.b16 %v1013
    %v2622 = vunpack.c.h.b16 %v1013
    %v2623 = vunpack.c.l.b16 %v1014
    %v2624 = vunpack.c.h.b16 %v1014
    %v2625 = vunpack.c.l.b16 %v1015
    %v2626 = vunpack.c.h.b16 %v1015
    %v2627 = vunpack.c.l.b16 %v1016
    %v2628 = vunpack.c.h.b16 %v1016
    %v2629 = vunpack.c.l.b16 %v1017
    %v2630 = vunpack.c.h.b16 %v1017
    %v2631 = vunpack.c.l.b16 %v1018
    %v2632 = vunpack.c.h.b16 %v1018
    %v2633 = vunpack.c.l.b16 %v1019
    %v2634 = vunpack.c.h.b16 %v1019
    %v2635 = vunpack.c.l.b16 %v1020
    %v2636 = vunpack.c.h.b16 %v1020
    %v2637 = vunpack.c.l.b16 %v1021
    %v2638 = vunpack.c.h.b16 %v1021
    %v2639 = vunpack.c.l.b16 %v1022
    %v2640 = vunpack.c.h.b16 %v1022
    %v2641 = vunpack.c.l.b16 %v1023
    %v2642 = vunpack.c.h.b16 %v1023
    %v2643 = vunpack.c.l.b16 %v1024
    %v2644 = vunpack.c.h.b16 %v1024
    %v2645 = vunpack.c.l.b16 %v1025
    %v2646 = vunpack.c.h.b16 %v1025
    %v2647 = vunpack.c.l.b16 %v1026
    %v2648 = vunpack.c.h.b16 %v1026
    %v2649 = vunpack.c.l.b16 %v1027
    %v2650 = vunpack.c.h.b16 %v1027
    %v2651 = vunpack.c.l.b16 %v1028
    %v2652 = vunpack.c.h.b16 %v1028
    %v2653 = vunpack.c.l.b16 %v1029
    %v2654 = vunpack.c.h.b16 %v1029
    %v2655 = vunpack.c.l.b16 %v1030
    %v2656 = vunpack.c.h.b16 %v1030
    %v2657 = vunpack.c.l.b16 %v1031
    %v2658 = vunpack.c.h.b16 %v1031
    %v2659 = vunpack.c.l.b16 %v1032
    %v2660 = vunpack.c.h.b16 %v1032
    %v2661 = vunpack.c.l.b16 %v1033
    %v2662 = vunpack.c.h.b16 %v1033
    %v2663 = vunpack.c.l.b16 %v1034
    %v2664 = vunpack.c.h.b16 %v1034
    %v2665 = vunpack.c.l.b16 %v1035
    %v2666 = vunpack.c.h.b16 %v1035
    %v2667 = vunpack.c.l.b16 %v1036
    %v2668 = vunpack.c.h.b16 %v1036
    %v2669 = vunpack.c.l.b16 %v1037
    %v2670 = vunpack.c.h.b16 %v1037
    %v2671 = vunpack.c.l.b16 %v1038
    %v2672 = vunpack.c.h.b16 %v1038
    %v2673 = vunpack.c.l.b16 %v1039
    %v2674 = vunpack.c.h.b16 %v1039
    %v2675 = vunpack.c.l.b16 %v1040
    %v2676 = vunpack.c.h.b16 %v1040
    %v2677 = vunpack.c.l.b16 %v1041
    %v2678 = vunpack.c.h.b16 %v1041
    %v2679 = vunpack.c.l.b16 %v1042
    %v2680 = vunpack.c.h.b16 %v1042
    %v2681 = vunpack.c.l.b16 %v1043
    %v2682 = vunpack.c.h.b16 %v1043
    %v2683 = vunpack.c.l.b16 %v1044
    %v2684 = vunpack.c.h.b16 %v1044
    %v2685 = vunpack.c.l.b16 %v1045
    %v2686 = vunpack.c.h.b16 %v1045
    %v2687 = vunpack.c.l.b16 %v1046
    %v2688 = vunpack.c.h.b16 %v1046
    %v2689 = vunpack.c.l.b16 %v1047
    %v2690 = vunpack.c.h.b16 %v1047
    %v2691 = vunpack.c.l.b16 %v1048
    %v2692 = vunpack.c.h.b16 %v1048
    %v2693 = vunpack.c.l.b16 %v1049
    %v2694 = vunpack.c.h.b16 %v1049
    %v2695 = vunpack.c.l.b16 %v1050
    %v2696 = vunpack.c.h.b16 %v1050
    %v2697 = vunpack.c.l.b16 %v1051
    %v2698 = vunpack.c.h.b16 %v1051
    %v2699 = vunpack.c.l.b16 %v1052
    %v2700 = vunpack.c.h.b16 %v1052
    %v2701 = vunpack.c.l.b16 %v1053
    %v2702 = vunpack.c.h.b16 %v1053
    %v2703 = vunpack.c.l.b16 %v1054
    %v2704 = vunpack.c.h.b16 %v1054
    %v2705 = vunpack.c.l.b16 %v1055
    %v2706 = vunpack.c.h.b16 %v1055
    %v2707 = vunpack.c.l.b16 %v1056
    %v2708 = vunpack.c.h.b16 %v1056
    %v2709 = vunpack.c.l.b16 %v1057
    %v2710 = vunpack.c.h.b16 %v1057
    %v2711 = vunpack.c.l.b16 %v1058
    %v2712 = vunpack.c.h.b16 %v1058
    %v2713 = vunpack.c.l.b16 %v1059
    %v2714 = vunpack.c.h.b16 %v1059
    %v2715 = vunpack.c.l.b16 %v1060
    %v2716 = vunpack.c.h.b16 %v1060
    %v2717 = vunpack.c.l.b16 %v1061
    %v2718 = vunpack.c.h.b16 %v1061
    %v2719 = vunpack.c.l.b16 %v1062
    %v2720 = vunpack.c.h.b16 %v1062
    %v2721 = vunpack.c.l.b16 %v1063
    %v2722 = vunpack.c.h.b16 %v1063
    %v2723 = vunpack.c.l.b16 %v1064
    %v2724 = vunpack.c.h.b16 %v1064
    %v2725 = vunpack.c.l.b16 %v1065
    %v2726 = vunpack.c.h.b16 %v1065
    %v2727 = vunpack.c.l.b16 %v1066
    %v2728 = vunpack.c.h.b16 %v1066
    %v2729 = vunpack.c.l.b16 %v1067
    %v2730 = vunpack.c.h.b16 %v1067
    %v2731 = vunpack.c.l.b16 %v1068
    %v2732 = vunpack.c.h.b16 %v1068
    %v2733 = vunpack.c.l.b16 %v1069
    %v2734 = vunpack.c.h.b16 %v1069
    %v2735 = vunpack.c.l.b16 %v1070
    %v2736 = vunpack.c.h.b16 %v1070
    %v2737 = vunpack.c.l.b16 %v1071
    %v2738 = vunpack.c.h.b16 %v1071
    %v2739 = vpack.c.b16 %v2457, %v2451
    %v2740 = vpack.c.b16 %v2458, %v2452
    %v2741 = vpack.c.b16 %v2459, %v2453
    %v2742 = vpack.c.b16 %v2460, %v2454
    %v2743 = vpack.c.b16 %v2461, %v2455
    %v2744 = vpack.c.b16 %v2462, %v2456
    %v2745 = vpack.c.b16 %v2469, %v2463
    %v2746 = vpack.c.b16 %v2470, %v2464
    %v2747 = vpack.c.b16 %v2471, %v2465
    %v2748 = vpack.c.b16 %v2472, %v2466
    %v2749 = vpack.c.b16 %v2473, %v2467
    %v2750 = vpack.c.b16 %v2474, %v2468
    %v2751 = vpack.c.b16 %v2481, %v2475
    %v2752 = vpack.c.b16 %v2482, %v2476
    %v2753 = vpack.c.b16 %v2483, %v2477
    %v2754 = vpack.c.b16 %v2484, %v2478
    %v2755 = vpack.c.b16 %v2485, %v2479
    %v2756 = vpack.c.b16 %v2486, %v2480
    %v2757 = vpack.c.b16 %v2493, %v2487
    %v2758 = vpack.c.b16 %v2494, %v2488
    %v2759 = vpack.c.b16 %v2495, %v2489
    %v2760 = vpack.c.b16 %v2496, %v2490
    %v2761 = vpack.c.b16 %v2497, %v2491
    %v2762 = vpack.c.b16 %v2498, %v2492
    %v2763 = vpack.c.b16 %v2505, %v2499
    %v2764 = vpack.c.b16 %v2506, %v2500
    %v2765 = vpack.c.b16 %v2507, %v2501
    %v2766 = vpack.c.b16 %v2508, %v2502
    %v2767 = vpack.c.b16 %v2509, %v2503
    %v2768 = vpack.c.b16 %v2510, %v2504
    %v2769 = vpack.c.b16 %v2517, %v2511
    %v2770 = vpack.c.b16 %v2518, %v2512
    %v2771 = vpack.c.b16 %v2519, %v2513
    %v2772 = vpack.c.b16 %v2520, %v2514
    %v2773 = vpack.c.b16 %v2521, %v2515
    %v2774 = vpack.c.b16 %v2522, %v2516
    %v2775 = vpack.c.b16 %v2529, %v2523
    %v2776 = vpack.c.b16 %v2530, %v2524
    %v2777 = vpack.c.b16 %v2531, %v2525
    %v2778 = vpack.c.b16 %v2532, %v2526
    %v2779 = vpack.c.b16 %v2533, %v2527
    %v2780 = vpack.c.b16 %v2534, %v2528
    %v2781 = vpack.c.b16 %v2541, %v2535
    %v2782 = vpack.c.b16 %v2542, %v2536
    %v2783 = vpack.c.b16 %v2543, %v2537
    %v2784 = vpack.c.b16 %v2544, %v2538
    %v2785 = vpack.c.b16 %v2545, %v2539
    %v2786 = vpack.c.b16 %v2546, %v2540
    %v2787 = vpack.c.b16 %v2553, %v2547
    %v2788 = vpack.c.b16 %v2554, %v2548
    %v2789 = vpack.c.b16 %v2555, %v2549
    %v2790 = vpack.c.b16 %v2556, %v2550
    %v2791 = vpack.c.b16 %v2557, %v2551
    %v2792 = vpack.c.b16 %v2558, %v2552
    %v2793 = vpack.c.b16 %v2565, %v2559
    %v2794 = vpack.c.b16 %v2566, %v2560
    %v2795 = vpack.c.b16 %v2567, %v2561
    %v2796 = vpack.c.b16 %v2568, %v2562
    %v2797 = vpack.c.b16 %v2569, %v2563
    %v2798 = vpack.c.b16 %v2570, %v2564
    %v2799 = vpack.c.b16 %v2577, %v2571
    %v2800 = vpack.c.b16 %v2578, %v2572
    %v2801 = vpack.c.b16 %v2579, %v2573
    %v2802 = vpack.c.b16 %v2580, %v2574
    %v2803 = vpack.c.b16 %v2581, %v2575
    %v2804 = vpack.c.b16 %v2582, %v2576
    %v2805 = vpack.c.b16 %v2589, %v2583
    %v2806 = vpack.c.b16 %v2590, %v2584
    %v2807 = vpack.c.b16 %v2591, %v2585
    %v2808 = vpack.c.b16 %v2592, %v2586
    %v2809 = vpack.c.b16 %v2593, %v2587
    %v2810 = vpack.c.b16 %v2594, %v2588
    %v2811 = vpack.c.b16 %v2601, %v2595
    %v2812 = vpack.c.b16 %v2602, %v2596
    %v2813 = vpack.c.b16 %v2603, %v2597
    %v2814 = vpack.c.b16 %v2604, %v2598
    %v2815 = vpack.c.b16 %v2605, %v2599
    %v2816 = vpack.c.b16 %v2606, %v2600
    %v2817 = vpack.c.b16 %v2613, %v2607
    %v2818 = vpack.c.b16 %v2614, %v2608
    %v2819 = vpack.c.b16 %v2615, %v2609
    %v2820 = vpack.c.b16 %v2616, %v2610
    %v2821 = vpack.c.b16 %v2617, %v2611
    %v2822 = vpack.c.b16 %v2618, %v2612
    %v2823 = vpack.c.b16 %v2625, %v2619
    %v2824 = vpack.c.b16 %v2626, %v2620
    %v2825 = vpack.c.b16 %v2627, %v2621
    %v2826 = vpack.c.b16 %v2628, %v2622
    %v2827 = vpack.c.b16 %v2629, %v2623
    %v2828 = vpack.c.b16 %v2630, %v2624
    %v2829 = vpack.c.b16 %v2637, %v2631
    %v2830 = vpack.c.b16 %v2638, %v2632
    %v2831 = vpack.c.b16 %v2639, %v2633
    %v2832 = vpack.c.b16 %v2640, %v2634
    %v2833 = vpack.c.b16 %v2641, %v2635
    %v2834 = vpack.c.b16 %v2642, %v2636
    %v2835 = vpack.c.b16 %v2649, %v2643
    %v2836 = vpack.c.b16 %v2650, %v2644
    %v2837 = vpack.c.b16 %v2651, %v2645
    %v2838 = vpack.c.b16 %v2652, %v2646
    %v2839 = vpack.c.b16 %v2653, %v2647
    %v2840 = vpack.c.b16 %v2654, %v2648
    %v2841 = vpack.c.b16 %v2661, %v2655
    %v2842 = vpack.c.b16 %v2662, %v2656
    %v2843 = vpack.c.b16 %v2663, %v2657
    %v2844 = vpack.c.b16 %v2664, %v2658
    %v2845 = vpack.c.b16 %v2665, %v2659
    %v2846 = vpack.c.b16 %v2666, %v2660
    %v2847 = vpack.c.b16 %v2673, %v2667
    %v2848 = vpack.c.b16 %v2674, %v2668
    %v2849 = vpack.c.b16 %v2675, %v2669
    %v2850 = vpack.c.b16 %v2676, %v2670
    %v2851 = vpack.c.b16 %v2677, %v2671
    %v2852 = vpack.c.b16 %v2678, %v2672
    %v2853 = vpack.c.b16 %v2685, %v2679
    %v2854 = vpack.c.b16 %v2686, %v2680
    %v2855 = vpack.c.b16 %v2687, %v2681
    %v2856 = vpack.c.b16 %v2688, %v2682
    %v2857 = vpack.c.b16 %v2689, %v2683
    %v2858 = vpack.c.b16 %v2690, %v2684
    %v2859 = vpack.c.b16 %v2697, %v2691
    %v2860 = vpack.c.b16 %v2698, %v2692
    %v2861 = vpack.c.b16 %v2699, %v2693
    %v2862 = vpack.c.b16 %v2700, %v2694
    %v2863 = vpack.c.b16 %v2701, %v2695
    %v2864 = vpack.c.b16 %v2702, %v2696
    %v2865 = vpack.c.b16 %v2709, %v2703
    %v2866 = vpack.c.b16 %v2710, %v2704
    %v2867 = vpack.c.b16 %v2711, %v2705
    %v2868 = vpack.c.b16 %v2712, %v2706
    %v2869 = vpack.c.b16 %v2713, %v2707
    %v2870 = vpack.c.b16 %v2714, %v2708
    %v2871 = vpack.c.b16 %v2721, %v2715
    %v2872 = vpack.c.b16 %v2722, %v2716
    %v2873 = vpack.c.b16 %v2723, %v2717
    %v2874 = vpack.c.b16 %v2724, %v2718
    %v2875 = vpack.c.b16 %v2725, %v2719
    %v2876 = vpack.c.b16 %v2726, %v2720
    %v2877 = vpack.c.b16 %v2733, %v2727
    %v2878 = vpack.c.b16 %v2734, %v2728
    %v2879 = vpack.c.b16 %v2735, %v2729
    %v2880 = vpack.c.b16 %v2736, %v2730
    %v2881 = vpack.c.b16 %v2737, %v2731
    %v2882 = vpack.c.b16 %v2738, %v2732
    %3027 = vmatprep.subr.bf16.mxu0 %v2782
    %3028 = vmatpush1.bf16.msra.mxu0 %v2781
    %3029 = vmatprep.subr.bf16.mxu0 %v2776
    %3030 = vmatpush1.bf16.msra.mxu0 %v2775
    %3031 = vmatprep.subr.bf16.mxu0 %v2770
    %3032 = vmatpush1.bf16.msra.mxu0 %v2769
    %3033 = vmatprep.subr.bf16.mxu0 %v2764
    %3034 = vmatpush1.bf16.msra.mxu0 %v2763
    %3035 = vmatprep.subr.bf16.mxu0 %v2758
    %3036 = vmatpush1.bf16.msra.mxu0 %v2757
    %3037 = vmatprep.subr.bf16.mxu0 %v2752
    %3038 = vmatpush1.bf16.msra.mxu0 %v2751
    %3039 = vmatprep.subr.bf16.mxu0 %v2746
    %3040 = vmatpush1.bf16.msra.mxu0 %v2745
    %3041 = vmatprep.subr.bf16.mxu0 %v2740
    %3042 = vmatpush1.bf16.msra.mxu0 %v2739
    %3043 = vmatprep.subr.bf16.mxu0 %v2830
    %3044 = vmatpush2.bf16.msra.mxu0 %v2829
    %3045 = vmatprep.subr.bf16.mxu0 %v2824
    %3046 = vmatpush2.bf16.msra.mxu0 %v2823
    %3047 = vmatprep.subr.bf16.mxu0 %v2818
    %3048 = vmatpush2.bf16.msra.mxu0 %v2817
    %3049 = vmatprep.subr.bf16.mxu0 %v2812
    %3050 = vmatpush2.bf16.msra.mxu0 %v2811
    %3051 = vmatprep.subr.bf16.mxu0 %v2806
    %3052 = vmatpush2.bf16.msra.mxu0 %v2805
    %3053 = vmatprep.subr.bf16.mxu0 %v2800
    %3054 = vmatpush2.bf16.msra.mxu0 %v2799
    %3055 = vmatprep.subr.bf16.mxu0 %v2794
    %3056 = vmatpush2.bf16.msra.mxu0 %v2793
    %3057 = vmatprep.subr.bf16.mxu0 %v2788
    %3058 = vmatpush2.bf16.msra.mxu0 %v2787
    %3059 = vmatprep.mubr.bf16.mxu0 %v923
    %3060 = vmatmul.mubr.bf16.gmra.mxu0 %v922
    %v3061 = vpop.f32.mrf.mxu0
    %v3062 = vadd.f32 %v2087, %v3061
    %v3063 = vpop.f32.mrf.mxu0
    %v3064 = vadd.f32 %v2089, %v3063
    %v3065 = vpop.f32.mrf.mxu0
    %v3066 = vadd.f32 %v2091, %v3065
    %v3067 = vpop.f32.mrf.mxu0
    %v3068 = vadd.f32 %v2093, %v3067
    %3069 = vmatprep.mubr.bf16.mxu0 %v926
    %3070 = vmatmul.mubr.bf16.gmra.mxu0 %v925
    %v3071 = vpop.f32.mrf.mxu0
    %v3072 = vadd.f32 %v2097, %v3071
    %v3073 = vpop.f32.mrf.mxu0
    %v3074 = vadd.f32 %v2099, %v3073
    %v3075 = vpop.f32.mrf.mxu0
    %v3076 = vpop.f32.mrf.mxu0
    %3077 = vdwg.mxu0
    %3078 = vmatprep.subr.bf16.mxu0 %v2878
    %3079 = vmatpush1.bf16.msra.mxu0 %v2877
    %3080 = vmatprep.subr.bf16.mxu0 %v2872
    %3081 = vmatpush1.bf16.msra.mxu0 %v2871
    %3082 = vmatprep.subr.bf16.mxu0 %v2866
    %3083 = vmatpush1.bf16.msra.mxu0 %v2865
    %3084 = vmatprep.subr.bf16.mxu0 %v2860
    %3085 = vmatpush1.bf16.msra.mxu0 %v2859
    %3086 = vmatprep.subr.bf16.mxu0 %v2854
    %3087 = vmatpush1.bf16.msra.mxu0 %v2853
    %3088 = vmatprep.subr.bf16.mxu0 %v2848
    %3089 = vmatpush1.bf16.msra.mxu0 %v2847
    %3090 = vmatprep.subr.bf16.mxu0 %v2842
    %3091 = vmatpush1.bf16.msra.mxu0 %v2841
    %3092 = vmatprep.subr.bf16.mxu0 %v2836
    %3093 = vmatpush1.bf16.msra.mxu0 %v2835
    %3094 = vmatprep.subr.bf16.mxu0 0
    %3095 = vmatpush2.bf16.msra.mxu0 0
    %3096 = vmatprep.subr.bf16.mxu0 0
    %3097 = vmatpush2.bf16.msra.mxu0 0
    %3098 = vmatprep.subr.bf16.mxu0 0
    %3099 = vmatpush2.bf16.msra.mxu0 0
    %3100 = vmatprep.subr.bf16.mxu0 0
    %3101 = vmatpush2.bf16.msra.mxu0 0
    %3102 = vmatprep.subr.bf16.mxu0 0
    %3103 = vmatpush2.bf16.msra.mxu0 0
    %3104 = vmatprep.subr.bf16.mxu0 0
    %3105 = vmatpush2.bf16.msra.mxu0 0
    %3106 = vmatprep.subr.bf16.mxu0 0
    %3107 = vmatpush2.bf16.msra.mxu0 0
    %3108 = vmatprep.subr.bf16.mxu0 0
    %3109 = vmatpush2.bf16.msra.mxu0 0
    %3110 = vmatprep.mubr.bf16.mxu0 0
    %3111 = vmatmul.mubr.bf16.gmra.mxu0 %v924
    %v3112 = vpop.f32.mrf.mxu0
    %v3113 = vadd.f32 %v3062, %v3112
    %v3114 = vpop.f32.mrf.mxu0
    %v3115 = vadd.f32 %v3064, %v3114
    %v3116 = vpop.f32.mrf.mxu0
    %v3117 = vadd.f32 %v3066, %v3116
    %v3118 = vpop.f32.mrf.mxu0
    %v3119 = vadd.f32 %v3068, %v3118
    %3120 = vmatprep.mubr.bf16.mxu0 0
    %3121 = vmatmul.mubr.bf16.gmra.mxu0 %v927
    %v3122 = vpop.f32.mrf.mxu0
    %v3123 = vadd.f32 %v3072, %v3122
    %v3124 = vpop.f32.mrf.mxu0
    %v3125 = vadd.f32 %v3074, %v3124
    %v3126 = vpop.f32.mrf.mxu0
    %v3127 = vpop.f32.mrf.mxu0
    %3128 = vdwg.mxu0
    %3129 = vmatprep.subr.bf16.mxu0 %v2784
    %3130 = vmatpush1.bf16.msra.mxu0 %v2783
    %3131 = vmatprep.subr.bf16.mxu0 %v2778
    %3132 = vmatpush1.bf16.msra.mxu0 %v2777
    %3133 = vmatprep.subr.bf16.mxu0 %v2772
    %3134 = vmatpush1.bf16.msra.mxu0 %v2771
    %3135 = vmatprep.subr.bf16.mxu0 %v2766
    %3136 = vmatpush1.bf16.msra.mxu0 %v2765
    %3137 = vmatprep.subr.bf16.mxu0 %v2760
    %3138 = vmatpush1.bf16.msra.mxu0 %v2759
    %3139 = vmatprep.subr.bf16.mxu0 %v2754
    %3140 = vmatpush1.bf16.msra.mxu0 %v2753
    %3141 = vmatprep.subr.bf16.mxu0 %v2748
    %3142 = vmatpush1.bf16.msra.mxu0 %v2747
    %3143 = vmatprep.subr.bf16.mxu0 %v2742
    %3144 = vmatpush1.bf16.msra.mxu0 %v2741
    %3145 = vmatprep.subr.bf16.mxu0 %v2832
    %3146 = vmatpush2.bf16.msra.mxu0 %v2831
    %3147 = vmatprep.subr.bf16.mxu0 %v2826
    %3148 = vmatpush2.bf16.msra.mxu0 %v2825
    %3149 = vmatprep.subr.bf16.mxu0 %v2820
    %3150 = vmatpush2.bf16.msra.mxu0 %v2819
    %3151 = vmatprep.subr.bf16.mxu0 %v2814
    %3152 = vmatpush2.bf16.msra.mxu0 %v2813
    %3153 = vmatprep.subr.bf16.mxu0 %v2808
    %3154 = vmatpush2.bf16.msra.mxu0 %v2807
    %3155 = vmatprep.subr.bf16.mxu0 %v2802
    %3156 = vmatpush2.bf16.msra.mxu0 %v2801
    %3157 = vmatprep.subr.bf16.mxu0 %v2796
    %3158 = vmatpush2.bf16.msra.mxu0 %v2795
    %3159 = vmatprep.subr.bf16.mxu0 %v2790
    %3160 = vmatpush2.bf16.msra.mxu0 %v2789
    %3161 = vmatprep.mubr.bf16.mxu0 %v923
    %3162 = vmatmul.mubr.bf16.gmra.mxu0 %v922
    %v3163 = vpop.f32.mrf.mxu0
    %v3164 = vadd.f32 %v2189, %v3163
    %v3165 = vpop.f32.mrf.mxu0
    %v3166 = vadd.f32 %v2191, %v3165
    %v3167 = vpop.f32.mrf.mxu0
    %v3168 = vadd.f32 %v2193, %v3167
    %v3169 = vpop.f32.mrf.mxu0
    %v3170 = vadd.f32 %v2195, %v3169
    %3171 = vmatprep.mubr.bf16.mxu0 %v926
    %3172 = vmatmul.mubr.bf16.gmra.mxu0 %v925
    %v3173 = vpop.f32.mrf.mxu0
    %v3174 = vadd.f32 %v2199, %v3173
    %v3175 = vpop.f32.mrf.mxu0
    %v3176 = vadd.f32 %v2201, %v3175
    %v3177 = vpop.f32.mrf.mxu0
    %v3178 = vpop.f32.mrf.mxu0
    %3179 = vdwg.mxu0
    %3180 = vmatprep.subr.bf16.mxu0 %v2880
    %3181 = vmatpush1.bf16.msra.mxu0 %v2879
    %3182 = vmatprep.subr.bf16.mxu0 %v2874
    %3183 = vmatpush1.bf16.msra.mxu0 %v2873
    %3184 = vmatprep.subr.bf16.mxu0 %v2868
    %3185 = vmatpush1.bf16.msra.mxu0 %v2867
    %3186 = vmatprep.subr.bf16.mxu0 %v2862
    %3187 = vmatpush1.bf16.msra.mxu0 %v2861
    %3188 = vmatprep.subr.bf16.mxu0 %v2856
    %3189 = vmatpush1.bf16.msra.mxu0 %v2855
    %3190 = vmatprep.subr.bf16.mxu0 %v2850
    %3191 = vmatpush1.bf16.msra.mxu0 %v2849
    %3192 = vmatprep.subr.bf16.mxu0 %v2844
    %3193 = vmatpush1.bf16.msra.mxu0 %v2843
    %3194 = vmatprep.subr.bf16.mxu0 %v2838
    %3195 = vmatpush1.bf16.msra.mxu0 %v2837
    %3196 = vmatprep.subr.bf16.mxu0 0
    %3197 = vmatpush2.bf16.msra.mxu0 0
    %3198 = vmatprep.subr.bf16.mxu0 0
    %3199 = vmatpush2.bf16.msra.mxu0 0
    %3200 = vmatprep.subr.bf16.mxu0 0
    %3201 = vmatpush2.bf16.msra.mxu0 0
    %3202 = vmatprep.subr.bf16.mxu0 0
    %3203 = vmatpush2.bf16.msra.mxu0 0
    %3204 = vmatprep.subr.bf16.mxu0 0
    %3205 = vmatpush2.bf16.msra.mxu0 0
    %3206 = vmatprep.subr.bf16.mxu0 0
    %3207 = vmatpush2.bf16.msra.mxu0 0
    %3208 = vmatprep.subr.bf16.mxu0 0
    %3209 = vmatpush2.bf16.msra.mxu0 0
    %3210 = vmatprep.subr.bf16.mxu0 0
    %3211 = vmatpush2.bf16.msra.mxu0 0
    %3212 = vmatprep.mubr.bf16.mxu0 0
    %3213 = vmatmul.mubr.bf16.gmra.mxu0 %v924
    %v3214 = vpop.f32.mrf.mxu0
    %v3215 = vadd.f32 %v3164, %v3214
    %v3216 = vpop.f32.mrf.mxu0
    %v3217 = vadd.f32 %v3166, %v3216
    %v3218 = vpop.f32.mrf.mxu0
    %v3219 = vadd.f32 %v3168, %v3218
    %v3220 = vpop.f32.mrf.mxu0
    %v3221 = vadd.f32 %v3170, %v3220
    %3222 = vmatprep.mubr.bf16.mxu0 0
    %3223 = vmatmul.mubr.bf16.gmra.mxu0 %v927
    %v3224 = vpop.f32.mrf.mxu0
    %v3225 = vadd.f32 %v3174, %v3224
    %v3226 = vpop.f32.mrf.mxu0
    %v3227 = vadd.f32 %v3176, %v3226
    %v3228 = vpop.f32.mrf.mxu0
    %v3229 = vpop.f32.mrf.mxu0
    %3230 = vdwg.mxu0
    %3231 = vmatprep.subr.bf16.mxu0 %v2786
    %3232 = vmatpush1.bf16.msra.mxu0 %v2785
    %3233 = vmatprep.subr.bf16.mxu0 %v2780
    %3234 = vmatpush1.bf16.msra.mxu0 %v2779
    %3235 = vmatprep.subr.bf16.mxu0 %v2774
    %3236 = vmatpush1.bf16.msra.mxu0 %v2773
    %3237 = vmatprep.subr.bf16.mxu0 %v2768
    %3238 = vmatpush1.bf16.msra.mxu0 %v2767
    %3239 = vmatprep.subr.bf16.mxu0 %v2762
    %3240 = vmatpush1.bf16.msra.mxu0 %v2761
    %3241 = vmatprep.subr.bf16.mxu0 %v2756
    %3242 = vmatpush1.bf16.msra.mxu0 %v2755
    %3243 = vmatprep.subr.bf16.mxu0 %v2750
    %3244 = vmatpush1.bf16.msra.mxu0 %v2749
    %3245 = vmatprep.subr.bf16.mxu0 %v2744
    %3246 = vmatpush1.bf16.msra.mxu0 %v2743
    %3247 = vmatprep.subr.bf16.mxu0 %v2834
    %3248 = vmatpush2.bf16.msra.mxu0 %v2833
    %3249 = vmatprep.subr.bf16.mxu0 %v2828
    %3250 = vmatpush2.bf16.msra.mxu0 %v2827
    %3251 = vmatprep.subr.bf16.mxu0 %v2822
    %3252 = vmatpush2.bf16.msra.mxu0 %v2821
    %3253 = vmatprep.subr.bf16.mxu0 %v2816
    %3254 = vmatpush2.bf16.msra.mxu0 %v2815
    %3255 = vmatprep.subr.bf16.mxu0 %v2810
    %3256 = vmatpush2.bf16.msra.mxu0 %v2809
    %3257 = vmatprep.subr.bf16.mxu0 %v2804
    %3258 = vmatpush2.bf16.msra.mxu0 %v2803
    %3259 = vmatprep.subr.bf16.mxu0 %v2798
    %3260 = vmatpush2.bf16.msra.mxu0 %v2797
    %3261 = vmatprep.subr.bf16.mxu0 %v2792
    %3262 = vmatpush2.bf16.msra.mxu0 %v2791
    %3263 = vmatprep.mubr.bf16.mxu0 %v923
    %3264 = vmatmul.mubr.bf16.gmra.mxu0 %v922
    %v3265 = vpop.f32.mrf.mxu0
    %v3266 = vadd.f32 %v2291, %v3265
    %v3267 = vpop.f32.mrf.mxu0
    %v3268 = vadd.f32 %v2293, %v3267
    %v3269 = vpop.f32.mrf.mxu0
    %v3270 = vadd.f32 %v2295, %v3269
    %v3271 = vpop.f32.mrf.mxu0
    %v3272 = vadd.f32 %v2297, %v3271
    %3273 = vmatprep.mubr.bf16.mxu0 %v926
    %3274 = vmatmul.mubr.bf16.gmra.mxu0 %v925
    %v3275 = vpop.f32.mrf.mxu0
    %v3276 = vadd.f32 %v2301, %v3275
    %v3277 = vpop.f32.mrf.mxu0
    %v3278 = vadd.f32 %v2303, %v3277
    %v3279 = vpop.f32.mrf.mxu0
    %v3280 = vpop.f32.mrf.mxu0
    %3281 = vdwg.mxu0
    %3282 = vmatprep.subr.bf16.mxu0 %v2882
    %3283 = vmatpush1.bf16.msra.mxu0 %v2881
    %3284 = vmatprep.subr.bf16.mxu0 %v2876
    %3285 = vmatpush1.bf16.msra.mxu0 %v2875
    %3286 = vmatprep.subr.bf16.mxu0 %v2870
    %3287 = vmatpush1.bf16.msra.mxu0 %v2869
    %3288 = vmatprep.subr.bf16.mxu0 %v2864
    %3289 = vmatpush1.bf16.msra.mxu0 %v2863
    %3290 = vmatprep.subr.bf16.mxu0 %v2858
    %3291 = vmatpush1.bf16.msra.mxu0 %v2857
    %3292 = vmatprep.subr.bf16.mxu0 %v2852
    %3293 = vmatpush1.bf16.msra.mxu0 %v2851
    %3294 = vmatprep.subr.bf16.mxu0 %v2846
    %3295 = vmatpush1.bf16.msra.mxu0 %v2845
    %3296 = vmatprep.subr.bf16.mxu0 %v2840
    %3297 = vmatpush1.bf16.msra.mxu0 %v2839
    %3298 = vmatprep.subr.bf16.mxu0 0
    %3299 = vmatpush2.bf16.msra.mxu0 0
    %3300 = vmatprep.subr.bf16.mxu0 0
    %3301 = vmatpush2.bf16.msra.mxu0 0
    %3302 = vmatprep.subr.bf16.mxu0 0
    %3303 = vmatpush2.bf16.msra.mxu0 0
    %3304 = vmatprep.subr.bf16.mxu0 0
    %3305 = vmatpush2.bf16.msra.mxu0 0
    %3306 = vmatprep.subr.bf16.mxu0 0
    %3307 = vmatpush2.bf16.msra.mxu0 0
    %3308 = vmatprep.subr.bf16.mxu0 0
    %3309 = vmatpush2.bf16.msra.mxu0 0
    %3310 = vmatprep.subr.bf16.mxu0 0
    %3311 = vmatpush2.bf16.msra.mxu0 0
    %3312 = vmatprep.subr.bf16.mxu0 0
    %3313 = vmatpush2.bf16.msra.mxu0 0
    %3314 = vmatprep.mubr.bf16.mxu0 0
    %3315 = vmatmul.mubr.bf16.gmra.mxu0 %v924
    %v3316 = vpop.f32.mrf.mxu0
    %v3317 = vadd.f32 %v3266, %v3316
    %v3318 = vpop.f32.mrf.mxu0
    %v3319 = vadd.f32 %v3268, %v3318
    %v3320 = vpop.f32.mrf.mxu0
    %v3321 = vadd.f32 %v3270, %v3320
    %v3322 = vpop.f32.mrf.mxu0
    %v3323 = vadd.f32 %v3272, %v3322
    %3324 = vmatprep.mubr.bf16.mxu0 0
    %3325 = vmatmul.mubr.bf16.gmra.mxu0 %v927
    %v3326 = vpop.f32.mrf.mxu0
    %v3327 = vadd.f32 %v3276, %v3326
    %v3328 = vpop.f32.mrf.mxu0
    %v3329 = vadd.f32 %v3278, %v3328
    %v3330 = vpop.f32.mrf.mxu0
    %v3331 = vpop.f32.mrf.mxu0
    %3332 = vdwg.mxu0
    %v3333 = vld [vmem:[#allocation2] sm:$0xfc]
    %v3334 = vld [vmem:[#allocation2 + $0x8] sm:$0xfc]
    %v3335 = vld [vmem:[#allocation2 + $0x10] sm:$0xfc]
    %v3336 = vld [vmem:[#allocation2 + $0x30] sm:$0x3f]
    %v3337 = vld [vmem:[#allocation2 + $0x38] sm:$0x3f]
    %v3338 = vld [vmem:[#allocation2 + $0x40] sm:$0x3f]
    %v3339 = vpack.c.bf16 %v916, %v3333
    %v3340 = vpack.c.bf16 %v917, %v3334
    %v3341 = vpack.c.bf16 %v918, %v3335
    %v3342 = vpack.c.bf16 %v3336, %v3336
    %v3343 = vpack.c.bf16 %v3337, %v3337
    %v3344 = vpack.c.bf16 %v3338, %v3338
    %s3345 = scalar_lea.vmem [#allocation8], 2304
    %v3346 = vld [vmem:[%s3345] sm:$0xff]
    %v3347 = vld [vmem:[%s3345 + $0x8] sm:$0xff]
    %v3348 = vld [vmem:[%s3345 + $0x10] sm:$0xff]
    %v3349 = vld [vmem:[%s3345 + $0x18] sm:$0xff]
    %v3350 = vld [vmem:[%s3345 + $0x20] sm:$0xff]
    %v3351 = vld [vmem:[%s3345 + $0x28] sm:$0xff]
    %v3352 = vld [vmem:[%s3345 + $0x30] sm:$0xff]
    %v3353 = vld [vmem:[%s3345 + $0x38] sm:$0xff]
    %v3354 = vld [vmem:[%s3345 + $0x40] sm:$0xff]
    %v3355 = vld [vmem:[%s3345 + $0x48] sm:$0xff]
    %v3356 = vld [vmem:[%s3345 + $0x50] sm:$0xff]
    %v3357 = vld [vmem:[%s3345 + $0x58] sm:$0xff]
    %v3358 = vld [vmem:[%s3345 + $0x60] sm:$0xff]
    %v3359 = vld [vmem:[%s3345 + $0x68] sm:$0xff]
    %v3360 = vld [vmem:[%s3345 + $0x70] sm:$0xff]
    %v3361 = vld [vmem:[%s3345 + $0x78] sm:$0xff]
    %v3362 = vld [vmem:[%s3345 + $0x80] sm:$0xff]
    %v3363 = vld [vmem:[%s3345 + $0x88] sm:$0xff]
    %v3364 = vld [vmem:[%s3345 + $0x90] sm:$0xff]
    %v3365 = vld [vmem:[%s3345 + $0x98] sm:$0xff]
    %v3366 = vld [vmem:[%s3345 + $0xa0] sm:$0xff]
    %v3367 = vld [vmem:[%s3345 + $0xa8] sm:$0xff]
    %v3368 = vld [vmem:[%s3345 + $0xb0] sm:$0xff]
    %v3369 = vld [vmem:[%s3345 + $0xb8] sm:$0xff]
    %v3370 = vld [vmem:[%s3345 + $0xc0] sm:$0xff]
    %v3371 = vld [vmem:[%s3345 + $0xc8] sm:$0xff]
    %v3372 = vld [vmem:[%s3345 + $0xd0] sm:$0xff]
    %v3373 = vld [vmem:[%s3345 + $0xd8] sm:$0xff]
    %v3374 = vld [vmem:[%s3345 + $0xe0] sm:$0xff]
    %v3375 = vld [vmem:[%s3345 + $0xe8] sm:$0xff]
    %v3376 = vld [vmem:[%s3345 + $0xf0] sm:$0xff]
    %v3377 = vld [vmem:[%s3345 + $0xf8] sm:$0xff]
    %v3378 = vld [vmem:[%s3345 + $0x100] sm:$0xff]
    %v3379 = vld [vmem:[%s3345 + $0x108] sm:$0xff]
    %v3380 = vld [vmem:[%s3345 + $0x110] sm:$0xff]
    %v3381 = vld [vmem:[%s3345 + $0x118] sm:$0xff]
    %v3382 = vld [vmem:[%s3345 + $0x120] sm:$0xff]
    %v3383 = vld [vmem:[%s3345 + $0x128] sm:$0xff]
    %v3384 = vld [vmem:[%s3345 + $0x130] sm:$0xff]
    %v3385 = vld [vmem:[%s3345 + $0x138] sm:$0xff]
    %v3386 = vld [vmem:[%s3345 + $0x140] sm:$0xff]
    %v3387 = vld [vmem:[%s3345 + $0x148] sm:$0xff]
    %v3388 = vld [vmem:[%s3345 + $0x150] sm:$0xff]
    %v3389 = vld [vmem:[%s3345 + $0x158] sm:$0xff]
    %v3390 = vld [vmem:[%s3345 + $0x160] sm:$0xff]
    %v3391 = vld [vmem:[%s3345 + $0x168] sm:$0xff]
    %v3392 = vld [vmem:[%s3345 + $0x170] sm:$0xff]
    %v3393 = vld [vmem:[%s3345 + $0x178] sm:$0xff]
    %v3394 = vld [vmem:[%s3345 + $0x180] sm:$0xff]
    %v3395 = vld [vmem:[%s3345 + $0x188] sm:$0xff]
    %v3396 = vld [vmem:[%s3345 + $0x190] sm:$0xff]
    %v3397 = vld [vmem:[%s3345 + $0x198] sm:$0xff]
    %v3398 = vld [vmem:[%s3345 + $0x1a0] sm:$0xff]
    %v3399 = vld [vmem:[%s3345 + $0x1a8] sm:$0xff]
    %v3400 = vld [vmem:[%s3345 + $0x1b0] sm:$0xff]
    %v3401 = vld [vmem:[%s3345 + $0x1b8] sm:$0xff]
    %v3402 = vld [vmem:[%s3345 + $0x1c0] sm:$0xff]
    %v3403 = vld [vmem:[%s3345 + $0x1c8] sm:$0xff]
    %v3404 = vld [vmem:[%s3345 + $0x1d0] sm:$0xff]
    %v3405 = vld [vmem:[%s3345 + $0x1d8] sm:$0xff]
    %v3406 = vld [vmem:[%s3345 + $0x1e0] sm:$0xff]
    %v3407 = vld [vmem:[%s3345 + $0x1e8] sm:$0xff]
    %v3408 = vld [vmem:[%s3345 + $0x1f0] sm:$0xff]
    %v3409 = vld [vmem:[%s3345 + $0x1f8] sm:$0xff]
    %v3410 = vld [vmem:[%s3345 + $0x200] sm:$0xff]
    %v3411 = vld [vmem:[%s3345 + $0x208] sm:$0xff]
    %v3412 = vld [vmem:[%s3345 + $0x210] sm:$0xff]
    %v3413 = vld [vmem:[%s3345 + $0x218] sm:$0xff]
    %v3414 = vld [vmem:[%s3345 + $0x220] sm:$0xff]
    %v3415 = vld [vmem:[%s3345 + $0x228] sm:$0xff]
    %v3416 = vld [vmem:[%s3345 + $0x230] sm:$0xff]
    %v3417 = vld [vmem:[%s3345 + $0x238] sm:$0xff]
    %v3418 = vld [vmem:[%s3345 + $0x240] sm:$0xff]
    %v3419 = vld [vmem:[%s3345 + $0x248] sm:$0xff]
    %v3420 = vld [vmem:[%s3345 + $0x250] sm:$0xff]
    %v3421 = vld [vmem:[%s3345 + $0x258] sm:$0xff]
    %v3422 = vld [vmem:[%s3345 + $0x260] sm:$0xff]
    %v3423 = vld [vmem:[%s3345 + $0x268] sm:$0xff]
    %v3424 = vld [vmem:[%s3345 + $0x270] sm:$0xff]
    %v3425 = vld [vmem:[%s3345 + $0x278] sm:$0xff]
    %v3426 = vld [vmem:[%s3345 + $0x280] sm:$0xff]
    %v3427 = vld [vmem:[%s3345 + $0x288] sm:$0xff]
    %v3428 = vld [vmem:[%s3345 + $0x290] sm:$0xff]
    %v3429 = vld [vmem:[%s3345 + $0x298] sm:$0xff]
    %v3430 = vld [vmem:[%s3345 + $0x2a0] sm:$0xff]
    %v3431 = vld [vmem:[%s3345 + $0x2a8] sm:$0xff]
    %v3432 = vld [vmem:[%s3345 + $0x2b0] sm:$0xff]
    %v3433 = vld [vmem:[%s3345 + $0x2b8] sm:$0xff]
    %v3434 = vld [vmem:[%s3345 + $0x2c0] sm:$0xff]
    %v3435 = vld [vmem:[%s3345 + $0x2c8] sm:$0xff]
    %v3436 = vld [vmem:[%s3345 + $0x2d0] sm:$0xff]
    %v3437 = vld [vmem:[%s3345 + $0x2d8] sm:$0xff]
    %v3438 = vld [vmem:[%s3345 + $0x2e0] sm:$0xff]
    %v3439 = vld [vmem:[%s3345 + $0x2e8] sm:$0xff]
    %v3440 = vld [vmem:[%s3345 + $0x2f0] sm:$0xff]
    %v3441 = vld [vmem:[%s3345 + $0x2f8] sm:$0xff]
    %v3442 = vld [vmem:[%s3345 + $0x300] sm:$0xff]
    %v3443 = vld [vmem:[%s3345 + $0x308] sm:$0xff]
    %v3444 = vld [vmem:[%s3345 + $0x310] sm:$0xff]
    %v3445 = vld [vmem:[%s3345 + $0x318] sm:$0xff]
    %v3446 = vld [vmem:[%s3345 + $0x320] sm:$0xff]
    %v3447 = vld [vmem:[%s3345 + $0x328] sm:$0xff]
    %v3448 = vld [vmem:[%s3345 + $0x330] sm:$0xff]
    %v3449 = vld [vmem:[%s3345 + $0x338] sm:$0xff]
    %v3450 = vld [vmem:[%s3345 + $0x340] sm:$0xff]
    %v3451 = vld [vmem:[%s3345 + $0x348] sm:$0xff]
    %v3452 = vld [vmem:[%s3345 + $0x350] sm:$0xff]
    %v3453 = vld [vmem:[%s3345 + $0x358] sm:$0xff]
    %v3454 = vld [vmem:[%s3345 + $0x360] sm:$0xff]
    %v3455 = vld [vmem:[%s3345 + $0x368] sm:$0xff]
    %v3456 = vld [vmem:[%s3345 + $0x370] sm:$0xff]
    %v3457 = vld [vmem:[%s3345 + $0x378] sm:$0xff]
    %v3458 = vld [vmem:[%s3345 + $0x380] sm:$0xff]
    %v3459 = vld [vmem:[%s3345 + $0x388] sm:$0xff]
    %v3460 = vld [vmem:[%s3345 + $0x390] sm:$0xff]
    %v3461 = vld [vmem:[%s3345 + $0x398] sm:$0xff]
    %v3462 = vld [vmem:[%s3345 + $0x3a0] sm:$0xff]
    %v3463 = vld [vmem:[%s3345 + $0x3a8] sm:$0xff]
    %v3464 = vld [vmem:[%s3345 + $0x3b0] sm:$0xff]
    %v3465 = vld [vmem:[%s3345 + $0x3b8] sm:$0xff]
    %v3466 = vld [vmem:[%s3345 + $0x3c0] sm:$0xff]
    %v3467 = vld [vmem:[%s3345 + $0x3c8] sm:$0xff]
    %v3468 = vld [vmem:[%s3345 + $0x3d0] sm:$0xff]
    %v3469 = vld [vmem:[%s3345 + $0x3d8] sm:$0xff]
    %v3470 = vld [vmem:[%s3345 + $0x3e0] sm:$0xff]
    %v3471 = vld [vmem:[%s3345 + $0x3e8] sm:$0xff]
    %v3472 = vld [vmem:[%s3345 + $0x3f0] sm:$0xff]
    %v3473 = vld [vmem:[%s3345 + $0x3f8] sm:$0xff]
    %v3474 = vld [vmem:[%s3345 + $0x400] sm:$0xff]
    %v3475 = vld [vmem:[%s3345 + $0x408] sm:$0xff]
    %v3476 = vld [vmem:[%s3345 + $0x410] sm:$0xff]
    %v3477 = vld [vmem:[%s3345 + $0x418] sm:$0xff]
    %v3478 = vld [vmem:[%s3345 + $0x420] sm:$0xff]
    %v3479 = vld [vmem:[%s3345 + $0x428] sm:$0xff]
    %v3480 = vld [vmem:[%s3345 + $0x430] sm:$0xff]
    %v3481 = vld [vmem:[%s3345 + $0x438] sm:$0xff]
    %v3482 = vld [vmem:[%s3345 + $0x440] sm:$0xff]
    %v3483 = vld [vmem:[%s3345 + $0x448] sm:$0xff]
    %v3484 = vld [vmem:[%s3345 + $0x450] sm:$0xff]
    %v3485 = vld [vmem:[%s3345 + $0x458] sm:$0xff]
    %v3486 = vld [vmem:[%s3345 + $0x460] sm:$0xff]
    %v3487 = vld [vmem:[%s3345 + $0x468] sm:$0xff]
    %v3488 = vld [vmem:[%s3345 + $0x470] sm:$0xff]
    %v3489 = vld [vmem:[%s3345 + $0x478] sm:$0xff]
    %vm3496 = vcmask 1046528
    %v3497 = vrot.slane %v3339, 1
    %v3498 = vrot.slane %v3342, 1
    %v3499 = vsel %vm3496, %v3497, %v3498
    %v3500 = vrot.slane %v3340, 1
    %v3501 = vrot.slane %v3343, 1
    %v3502 = vsel %vm3496, %v3500, %v3501
    %v3503 = vrot.slane %v3341, 1
    %v3504 = vrot.slane %v3344, 1
    %v3505 = vsel %vm3496, %v3503, %v3504
    %v3656 = vunpack.c.l.b16 %v3346
    %v3657 = vunpack.c.h.b16 %v3346
    %v3658 = vunpack.c.l.b16 %v3347
    %v3659 = vunpack.c.h.b16 %v3347
    %v3660 = vunpack.c.l.b16 %v3348
    %v3661 = vunpack.c.h.b16 %v3348
    %v3662 = vunpack.c.l.b16 %v3349
    %v3663 = vunpack.c.h.b16 %v3349
    %v3664 = vunpack.c.l.b16 %v3350
    %v3665 = vunpack.c.h.b16 %v3350
    %v3666 = vunpack.c.l.b16 %v3351
    %v3667 = vunpack.c.h.b16 %v3351
    %v3668 = vunpack.c.l.b16 %v3352
    %v3669 = vunpack.c.h.b16 %v3352
    %v3670 = vunpack.c.l.b16 %v3353
    %v3671 = vunpack.c.h.b16 %v3353
    %v3672 = vunpack.c.l.b16 %v3354
    %v3673 = vunpack.c.h.b16 %v3354
    %v3674 = vunpack.c.l.b16 %v3355
    %v3675 = vunpack.c.h.b16 %v3355
    %v3676 = vunpack.c.l.b16 %v3356
    %v3677 = vunpack.c.h.b16 %v3356
    %v3678 = vunpack.c.l.b16 %v3357
    %v3679 = vunpack.c.h.b16 %v3357
    %v3680 = vunpack.c.l.b16 %v3358
    %v3681 = vunpack.c.h.b16 %v3358
    %v3682 = vunpack.c.l.b16 %v3359
    %v3683 = vunpack.c.h.b16 %v3359
    %v3684 = vunpack.c.l.b16 %v3360
    %v3685 = vunpack.c.h.b16 %v3360
    %v3686 = vunpack.c.l.b16 %v3361
    %v3687 = vunpack.c.h.b16 %v3361
    %v3688 = vunpack.c.l.b16 %v3362
    %v3689 = vunpack.c.h.b16 %v3362
    %v3690 = vunpack.c.l.b16 %v3363
    %v3691 = vunpack.c.h.b16 %v3363
    %v3692 = vunpack.c.l.b16 %v3364
    %v3693 = vunpack.c.h.b16 %v3364
    %v3694 = vunpack.c.l.b16 %v3365
    %v3695 = vunpack.c.h.b16 %v3365
    %v3696 = vunpack.c.l.b16 %v3366
    %v3697 = vunpack.c.h.b16 %v3366
    %v3698 = vunpack.c.l.b16 %v3367
    %v3699 = vunpack.c.h.b16 %v3367
    %v3700 = vunpack.c.l.b16 %v3368
    %v3701 = vunpack.c.h.b16 %v3368
    %v3702 = vunpack.c.l.b16 %v3369
    %v3703 = vunpack.c.h.b16 %v3369
    %v3704 = vunpack.c.l.b16 %v3370
    %v3705 = vunpack.c.h.b16 %v3370
    %v3706 = vunpack.c.l.b16 %v3371
    %v3707 = vunpack.c.h.b16 %v3371
    %v3708 = vunpack.c.l.b16 %v3372
    %v3709 = vunpack.c.h.b16 %v3372
    %v3710 = vunpack.c.l.b16 %v3373
    %v3711 = vunpack.c.h.b16 %v3373
    %v3712 = vunpack.c.l.b16 %v3374
    %v3713 = vunpack.c.h.b16 %v3374
    %v3714 = vunpack.c.l.b16 %v3375
    %v3715 = vunpack.c.h.b16 %v3375
    %v3716 = vunpack.c.l.b16 %v3376
    %v3717 = vunpack.c.h.b16 %v3376
    %v3718 = vunpack.c.l.b16 %v3377
    %v3719 = vunpack.c.h.b16 %v3377
    %v3720 = vunpack.c.l.b16 %v3378
    %v3721 = vunpack.c.h.b16 %v3378
    %v3722 = vunpack.c.l.b16 %v3379
    %v3723 = vunpack.c.h.b16 %v3379
    %v3724 = vunpack.c.l.b16 %v3380
    %v3725 = vunpack.c.h.b16 %v3380
    %v3726 = vunpack.c.l.b16 %v3381
    %v3727 = vunpack.c.h.b16 %v3381
    %v3728 = vunpack.c.l.b16 %v3382
    %v3729 = vunpack.c.h.b16 %v3382
    %v3730 = vunpack.c.l.b16 %v3383
    %v3731 = vunpack.c.h.b16 %v3383
    %v3732 = vunpack.c.l.b16 %v3384
    %v3733 = vunpack.c.h.b16 %v3384
    %v3734 = vunpack.c.l.b16 %v3385
    %v3735 = vunpack.c.h.b16 %v3385
    %v3736 = vunpack.c.l.b16 %v3386
    %v3737 = vunpack.c.h.b16 %v3386
    %v3738 = vunpack.c.l.b16 %v3387
    %v3739 = vunpack.c.h.b16 %v3387
    %v3740 = vunpack.c.l.b16 %v3388
    %v3741 = vunpack.c.h.b16 %v3388
    %v3742 = vunpack.c.l.b16 %v3389
    %v3743 = vunpack.c.h.b16 %v3389
    %v3744 = vunpack.c.l.b16 %v3390
    %v3745 = vunpack.c.h.b16 %v3390
    %v3746 = vunpack.c.l.b16 %v3391
    %v3747 = vunpack.c.h.b16 %v3391
    %v3748 = vunpack.c.l.b16 %v3392
    %v3749 = vunpack.c.h.b16 %v3392
    %v3750 = vunpack.c.l.b16 %v3393
    %v3751 = vunpack.c.h.b16 %v3393
    %v3752 = vunpack.c.l.b16 %v3394
    %v3753 = vunpack.c.h.b16 %v3394
    %v3754 = vunpack.c.l.b16 %v3395
    %v3755 = vunpack.c.h.b16 %v3395
    %v3756 = vunpack.c.l.b16 %v3396
    %v3757 = vunpack.c.h.b16 %v3396
    %v3758 = vunpack.c.l.b16 %v3397
    %v3759 = vunpack.c.h.b16 %v3397
    %v3760 = vunpack.c.l.b16 %v3398
    %v3761 = vunpack.c.h.b16 %v3398
    %v3762 = vunpack.c.l.b16 %v3399
    %v3763 = vunpack.c.h.b16 %v3399
    %v3764 = vunpack.c.l.b16 %v3400
    %v3765 = vunpack.c.h.b16 %v3400
    %v3766 = vunpack.c.l.b16 %v3401
    %v3767 = vunpack.c.h.b16 %v3401
    %v3768 = vunpack.c.l.b16 %v3402
    %v3769 = vunpack.c.h.b16 %v3402
    %v3770 = vunpack.c.l.b16 %v3403
    %v3771 = vunpack.c.h.b16 %v3403
    %v3772 = vunpack.c.l.b16 %v3404
    %v3773 = vunpack.c.h.b16 %v3404
    %v3774 = vunpack.c.l.b16 %v3405
    %v3775 = vunpack.c.h.b16 %v3405
    %v3776 = vunpack.c.l.b16 %v3406
    %v3777 = vunpack.c.h.b16 %v3406
    %v3778 = vunpack.c.l.b16 %v3407
    %v3779 = vunpack.c.h.b16 %v3407
    %v3780 = vunpack.c.l.b16 %v3408
    %v3781 = vunpack.c.h.b16 %v3408
    %v3782 = vunpack.c.l.b16 %v3409
    %v3783 = vunpack.c.h.b16 %v3409
    %v3784 = vunpack.c.l.b16 %v3410
    %v3785 = vunpack.c.h.b16 %v3410
    %v3786 = vunpack.c.l.b16 %v3411
    %v3787 = vunpack.c.h.b16 %v3411
    %v3788 = vunpack.c.l.b16 %v3412
    %v3789 = vunpack.c.h.b16 %v3412
    %v3790 = vunpack.c.l.b16 %v3413
    %v3791 = vunpack.c.h.b16 %v3413
    %v3792 = vunpack.c.l.b16 %v3414
    %v3793 = vunpack.c.h.b16 %v3414
    %v3794 = vunpack.c.l.b16 %v3415
    %v3795 = vunpack.c.h.b16 %v3415
    %v3796 = vunpack.c.l.b16 %v3416
    %v3797 = vunpack.c.h.b16 %v3416
    %v3798 = vunpack.c.l.b16 %v3417
    %v3799 = vunpack.c.h.b16 %v3417
    %v3800 = vunpack.c.l.b16 %v3418
    %v3801 = vunpack.c.h.b16 %v3418
    %v3802 = vunpack.c.l.b16 %v3419
    %v3803 = vunpack.c.h.b16 %v3419
    %v3804 = vunpack.c.l.b16 %v3420
    %v3805 = vunpack.c.h.b16 %v3420
    %v3806 = vunpack.c.l.b16 %v3421
    %v3807 = vunpack.c.h.b16 %v3421
    %v3808 = vunpack.c.l.b16 %v3422
    %v3809 = vunpack.c.h.b16 %v3422
    %v3810 = vunpack.c.l.b16 %v3423
    %v3811 = vunpack.c.h.b16 %v3423
    %v3812 = vunpack.c.l.b16 %v3424
    %v3813 = vunpack.c.h.b16 %v3424
    %v3814 = vunpack.c.l.b16 %v3425
    %v3815 = vunpack.c.h.b16 %v3425
    %v3816 = vunpack.c.l.b16 %v3426
    %v3817 = vunpack.c.h.b16 %v3426
    %v3818 = vunpack.c.l.b16 %v3427
    %v3819 = vunpack.c.h.b16 %v3427
    %v3820 = vunpack.c.l.b16 %v3428
    %v3821 = vunpack.c.h.b16 %v3428
    %v3822 = vunpack.c.l.b16 %v3429
    %v3823 = vunpack.c.h.b16 %v3429
    %v3824 = vunpack.c.l.b16 %v3430
    %v3825 = vunpack.c.h.b16 %v3430
    %v3826 = vunpack.c.l.b16 %v3431
    %v3827 = vunpack.c.h.b16 %v3431
    %v3828 = vunpack.c.l.b16 %v3432
    %v3829 = vunpack.c.h.b16 %v3432
    %v3830 = vunpack.c.l.b16 %v3433
    %v3831 = vunpack.c.h.b16 %v3433
    %v3832 = vunpack.c.l.b16 %v3434
    %v3833 = vunpack.c.h.b16 %v3434
    %v3834 = vunpack.c.l.b16 %v3435
    %v3835 = vunpack.c.h.b16 %v3435
    %v3836 = vunpack.c.l.b16 %v3436
    %v3837 = vunpack.c.h.b16 %v3436
    %v3838 = vunpack.c.l.b16 %v3437
    %v3839 = vunpack.c.h.b16 %v3437
    %v3840 = vunpack.c.l.b16 %v3438
    %v3841 = vunpack.c.h.b16 %v3438
    %v3842 = vunpack.c.l.b16 %v3439
    %v3843 = vunpack.c.h.b16 %v3439
    %v3844 = vunpack.c.l.b16 %v3440
    %v3845 = vunpack.c.h.b16 %v3440
    %v3846 = vunpack.c.l.b16 %v3441
    %v3847 = vunpack.c.h.b16 %v3441
    %v3848 = vunpack.c.l.b16 %v3442
    %v3849 = vunpack.c.h.b16 %v3442
    %v3850 = vunpack.c.l.b16 %v3443
    %v3851 = vunpack.c.h.b16 %v3443
    %v3852 = vunpack.c.l.b16 %v3444
    %v3853 = vunpack.c.h.b16 %v3444
    %v3854 = vunpack.c.l.b16 %v3445
    %v3855 = vunpack.c.h.b16 %v3445
    %v3856 = vunpack.c.l.b16 %v3446
    %v3857 = vunpack.c.h.b16 %v3446
    %v3858 = vunpack.c.l.b16 %v3447
    %v3859 = vunpack.c.h.b16 %v3447
    %v3860 = vunpack.c.l.b16 %v3448
    %v3861 = vunpack.c.h.b16 %v3448
    %v3862 = vunpack.c.l.b16 %v3449
    %v3863 = vunpack.c.h.b16 %v3449
    %v3864 = vunpack.c.l.b16 %v3450
    %v3865 = vunpack.c.h.b16 %v3450
    %v3866 = vunpack.c.l.b16 %v3451
    %v3867 = vunpack.c.h.b16 %v3451
    %v3868 = vunpack.c.l.b16 %v3452
    %v3869 = vunpack.c.h.b16 %v3452
    %v3870 = vunpack.c.l.b16 %v3453
    %v3871 = vunpack.c.h.b16 %v3453
    %v3872 = vunpack.c.l.b16 %v3454
    %v3873 = vunpack.c.h.b16 %v3454
    %v3874 = vunpack.c.l.b16 %v3455
    %v3875 = vunpack.c.h.b16 %v3455
    %v3876 = vunpack.c.l.b16 %v3456
    %v3877 = vunpack.c.h.b16 %v3456
    %v3878 = vunpack.c.l.b16 %v3457
    %v3879 = vunpack.c.h.b16 %v3457
    %v3880 = vunpack.c.l.b16 %v3458
    %v3881 = vunpack.c.h.b16 %v3458
    %v3882 = vunpack.c.l.b16 %v3459
    %v3883 = vunpack.c.h.b16 %v3459
    %v3884 = vunpack.c.l.b16 %v3460
    %v3885 = vunpack.c.h.b16 %v3460
    %v3886 = vunpack.c.l.b16 %v3461
    %v3887 = vunpack.c.h.b16 %v3461
    %v3888 = vunpack.c.l.b16 %v3462
    %v3889 = vunpack.c.h.b16 %v3462
    %v3890 = vunpack.c.l.b16 %v3463
    %v3891 = vunpack.c.h.b16 %v3463
    %v3892 = vunpack.c.l.b16 %v3464
    %v3893 = vunpack.c.h.b16 %v3464
    %v3894 = vunpack.c.l.b16 %v3465
    %v3895 = vunpack.c.h.b16 %v3465
    %v3896 = vunpack.c.l.b16 %v3466
    %v3897 = vunpack.c.h.b16 %v3466
    %v3898 = vunpack.c.l.b16 %v3467
    %v3899 = vunpack.c.h.b16 %v3467
    %v3900 = vunpack.c.l.b16 %v3468
    %v3901 = vunpack.c.h.b16 %v3468
    %v3902 = vunpack.c.l.b16 %v3469
    %v3903 = vunpack.c.h.b16 %v3469
    %v3904 = vunpack.c.l.b16 %v3470
    %v3905 = vunpack.c.h.b16 %v3470
    %v3906 = vunpack.c.l.b16 %v3471
    %v3907 = vunpack.c.h.b16 %v3471
    %v3908 = vunpack.c.l.b16 %v3472
    %v3909 = vunpack.c.h.b16 %v3472
    %v3910 = vunpack.c.l.b16 %v3473
    %v3911 = vunpack.c.h.b16 %v3473
    %v3912 = vunpack.c.l.b16 %v3474
    %v3913 = vunpack.c.h.b16 %v3474
    %v3914 = vunpack.c.l.b16 %v3475
    %v3915 = vunpack.c.h.b16 %v3475
    %v3916 = vunpack.c.l.b16 %v3476
    %v3917 = vunpack.c.h.b16 %v3476
    %v3918 = vunpack.c.l.b16 %v3477
    %v3919 = vunpack.c.h.b16 %v3477
    %v3920 = vunpack.c.l.b16 %v3478
    %v3921 = vunpack.c.h.b16 %v3478
    %v3922 = vunpack.c.l.b16 %v3479
    %v3923 = vunpack.c.h.b16 %v3479
    %v3924 = vunpack.c.l.b16 %v3480
    %v3925 = vunpack.c.h.b16 %v3480
    %v3926 = vunpack.c.l.b16 %v3481
    %v3927 = vunpack.c.h.b16 %v3481
    %v3928 = vunpack.c.l.b16 %v3482
    %v3929 = vunpack.c.h.b16 %v3482
    %v3930 = vunpack.c.l.b16 %v3483
    %v3931 = vunpack.c.h.b16 %v3483
    %v3932 = vunpack.c.l.b16 %v3484
    %v3933 = vunpack.c.h.b16 %v3484
    %v3934 = vunpack.c.l.b16 %v3485
    %v3935 = vunpack.c.h.b16 %v3485
    %v3936 = vunpack.c.l.b16 %v3486
    %v3937 = vunpack.c.h.b16 %v3486
    %v3938 = vunpack.c.l.b16 %v3487
    %v3939 = vunpack.c.h.b16 %v3487
    %v3940 = vunpack.c.l.b16 %v3488
    %v3941 = vunpack.c.h.b16 %v3488
    %v3942 = vunpack.c.l.b16 %v3489
    %v3943 = vunpack.c.h.b16 %v3489
    %v3944 = vpack.c.b16 %v3662, %v3656
    %v3945 = vpack.c.b16 %v3663, %v3657
    %v3946 = vpack.c.b16 %v3664, %v3658
    %v3947 = vpack.c.b16 %v3665, %v3659
    %v3948 = vpack.c.b16 %v3666, %v3660
    %v3949 = vpack.c.b16 %v3667, %v3661
    %v3950 = vpack.c.b16 %v3674, %v3668
    %v3951 = vpack.c.b16 %v3675, %v3669
    %v3952 = vpack.c.b16 %v3676, %v3670
    %v3953 = vpack.c.b16 %v3677, %v3671
    %v3954 = vpack.c.b16 %v3678, %v3672
    %v3955 = vpack.c.b16 %v3679, %v3673
    %v3956 = vpack.c.b16 %v3686, %v3680
    %v3957 = vpack.c.b16 %v3687, %v3681
    %v3958 = vpack.c.b16 %v3688, %v3682
    %v3959 = vpack.c.b16 %v3689, %v3683
    %v3960 = vpack.c.b16 %v3690, %v3684
    %v3961 = vpack.c.b16 %v3691, %v3685
    %v3962 = vpack.c.b16 %v3698, %v3692
    %v3963 = vpack.c.b16 %v3699, %v3693
    %v3964 = vpack.c.b16 %v3700, %v3694
    %v3965 = vpack.c.b16 %v3701, %v3695
    %v3966 = vpack.c.b16 %v3702, %v3696
    %v3967 = vpack.c.b16 %v3703, %v3697
    %v3968 = vpack.c.b16 %v3710, %v3704
    %v3969 = vpack.c.b16 %v3711, %v3705
    %v3970 = vpack.c.b16 %v3712, %v3706
    %v3971 = vpack.c.b16 %v3713, %v3707
    %v3972 = vpack.c.b16 %v3714, %v3708
    %v3973 = vpack.c.b16 %v3715, %v3709
    %v3974 = vpack.c.b16 %v3722, %v3716
    %v3975 = vpack.c.b16 %v3723, %v3717
    %v3976 = vpack.c.b16 %v3724, %v3718
    %v3977 = vpack.c.b16 %v3725, %v3719
    %v3978 = vpack.c.b16 %v3726, %v3720
    %v3979 = vpack.c.b16 %v3727, %v3721
    %v3980 = vpack.c.b16 %v3734, %v3728
    %v3981 = vpack.c.b16 %v3735, %v3729
    %v3982 = vpack.c.b16 %v3736, %v3730
    %v3983 = vpack.c.b16 %v3737, %v3731
    %v3984 = vpack.c.b16 %v3738, %v3732
    %v3985 = vpack.c.b16 %v3739, %v3733
    %v3986 = vpack.c.b16 %v3746, %v3740
    %v3987 = vpack.c.b16 %v3747, %v3741
    %v3988 = vpack.c.b16 %v3748, %v3742
    %v3989 = vpack.c.b16 %v3749, %v3743
    %v3990 = vpack.c.b16 %v3750, %v3744
    %v3991 = vpack.c.b16 %v3751, %v3745
    %v3992 = vpack.c.b16 %v3758, %v3752
    %v3993 = vpack.c.b16 %v3759, %v3753
    %v3994 = vpack.c.b16 %v3760, %v3754
    %v3995 = vpack.c.b16 %v3761, %v3755
    %v3996 = vpack.c.b16 %v3762, %v3756
    %v3997 = vpack.c.b16 %v3763, %v3757
    %v3998 = vpack.c.b16 %v3770, %v3764
    %v3999 = vpack.c.b16 %v3771, %v3765
    %v4000 = vpack.c.b16 %v3772, %v3766
    %v4001 = vpack.c.b16 %v3773, %v3767
    %v4002 = vpack.c.b16 %v3774, %v3768
    %v4003 = vpack.c.b16 %v3775, %v3769
    %v4004 = vpack.c.b16 %v3782, %v3776
    %v4005 = vpack.c.b16 %v3783, %v3777
    %v4006 = vpack.c.b16 %v3784, %v3778
    %v4007 = vpack.c.b16 %v3785, %v3779
    %v4008 = vpack.c.b16 %v3786, %v3780
    %v4009 = vpack.c.b16 %v3787, %v3781
    %v4010 = vpack.c.b16 %v3794, %v3788
    %v4011 = vpack.c.b16 %v3795, %v3789
    %v4012 = vpack.c.b16 %v3796, %v3790
    %v4013 = vpack.c.b16 %v3797, %v3791
    %v4014 = vpack.c.b16 %v3798, %v3792
    %v4015 = vpack.c.b16 %v3799, %v3793
    %v4016 = vpack.c.b16 %v3806, %v3800
    %v4017 = vpack.c.b16 %v3807, %v3801
    %v4018 = vpack.c.b16 %v3808, %v3802
    %v4019 = vpack.c.b16 %v3809, %v3803
    %v4020 = vpack.c.b16 %v3810, %v3804
    %v4021 = vpack.c.b16 %v3811, %v3805
    %v4022 = vpack.c.b16 %v3818, %v3812
    %v4023 = vpack.c.b16 %v3819, %v3813
    %v4024 = vpack.c.b16 %v3820, %v3814
    %v4025 = vpack.c.b16 %v3821, %v3815
    %v4026 = vpack.c.b16 %v3822, %v3816
    %v4027 = vpack.c.b16 %v3823, %v3817
    %v4028 = vpack.c.b16 %v3830, %v3824
    %v4029 = vpack.c.b16 %v3831, %v3825
    %v4030 = vpack.c.b16 %v3832, %v3826
    %v4031 = vpack.c.b16 %v3833, %v3827
    %v4032 = vpack.c.b16 %v3834, %v3828
    %v4033 = vpack.c.b16 %v3835, %v3829
    %v4034 = vpack.c.b16 %v3842, %v3836
    %v4035 = vpack.c.b16 %v3843, %v3837
    %v4036 = vpack.c.b16 %v3844, %v3838
    %v4037 = vpack.c.b16 %v3845, %v3839
    %v4038 = vpack.c.b16 %v3846, %v3840
    %v4039 = vpack.c.b16 %v3847, %v3841
    %v4040 = vpack.c.b16 %v3854, %v3848
    %v4041 = vpack.c.b16 %v3855, %v3849
    %v4042 = vpack.c.b16 %v3856, %v3850
    %v4043 = vpack.c.b16 %v3857, %v3851
    %v4044 = vpack.c.b16 %v3858, %v3852
    %v4045 = vpack.c.b16 %v3859, %v3853
    %v4046 = vpack.c.b16 %v3866, %v3860
    %v4047 = vpack.c.b16 %v3867, %v3861
    %v4048 = vpack.c.b16 %v3868, %v3862
    %v4049 = vpack.c.b16 %v3869, %v3863
    %v4050 = vpack.c.b16 %v3870, %v3864
    %v4051 = vpack.c.b16 %v3871, %v3865
    %v4052 = vpack.c.b16 %v3878, %v3872
    %v4053 = vpack.c.b16 %v3879, %v3873
    %v4054 = vpack.c.b16 %v3880, %v3874
    %v4055 = vpack.c.b16 %v3881, %v3875
    %v4056 = vpack.c.b16 %v3882, %v3876
    %v4057 = vpack.c.b16 %v3883, %v3877
    %v4058 = vpack.c.b16 %v3890, %v3884
    %v4059 = vpack.c.b16 %v3891, %v3885
    %v4060 = vpack.c.b16 %v3892, %v3886
    %v4061 = vpack.c.b16 %v3893, %v3887
    %v4062 = vpack.c.b16 %v3894, %v3888
    %v4063 = vpack.c.b16 %v3895, %v3889
    %v4064 = vpack.c.b16 %v3902, %v3896
    %v4065 = vpack.c.b16 %v3903, %v3897
    %v4066 = vpack.c.b16 %v3904, %v3898
    %v4067 = vpack.c.b16 %v3905, %v3899
    %v4068 = vpack.c.b16 %v3906, %v3900
    %v4069 = vpack.c.b16 %v3907, %v3901
    %v4070 = vpack.c.b16 %v3914, %v3908
    %v4071 = vpack.c.b16 %v3915, %v3909
    %v4072 = vpack.c.b16 %v3916, %v3910
    %v4073 = vpack.c.b16 %v3917, %v3911
    %v4074 = vpack.c.b16 %v3918, %v3912
    %v4075 = vpack.c.b16 %v3919, %v3913
    %v4076 = vpack.c.b16 %v3926, %v3920
    %v4077 = vpack.c.b16 %v3927, %v3921
    %v4078 = vpack.c.b16 %v3928, %v3922
    %v4079 = vpack.c.b16 %v3929, %v3923
    %v4080 = vpack.c.b16 %v3930, %v3924
    %v4081 = vpack.c.b16 %v3931, %v3925
    %v4082 = vpack.c.b16 %v3938, %v3932
    %v4083 = vpack.c.b16 %v3939, %v3933
    %v4084 = vpack.c.b16 %v3940, %v3934
    %v4085 = vpack.c.b16 %v3941, %v3935
    %v4086 = vpack.c.b16 %v3942, %v3936
    %v4087 = vpack.c.b16 %v3943, %v3937
    %4232 = vmatprep.subr.bf16.mxu0 %v3987
    %4233 = vmatpush1.bf16.msra.mxu0 %v3986
    %4234 = vmatprep.subr.bf16.mxu0 %v3981
    %4235 = vmatpush1.bf16.msra.mxu0 %v3980
    %4236 = vmatprep.subr.bf16.mxu0 %v3975
    %4237 = vmatpush1.bf16.msra.mxu0 %v3974
    %4238 = vmatprep.subr.bf16.mxu0 %v3969
    %4239 = vmatpush1.bf16.msra.mxu0 %v3968
    %4240 = vmatprep.subr.bf16.mxu0 %v3963
    %4241 = vmatpush1.bf16.msra.mxu0 %v3962
    %4242 = vmatprep.subr.bf16.mxu0 %v3957
    %4243 = vmatpush1.bf16.msra.mxu0 %v3956
    %4244 = vmatprep.subr.bf16.mxu0 %v3951
    %4245 = vmatpush1.bf16.msra.mxu0 %v3950
    %4246 = vmatprep.subr.bf16.mxu0 %v3945
    %4247 = vmatpush1.bf16.msra.mxu0 %v3944
    %4248 = vmatprep.subr.bf16.mxu0 %v4035
    %4249 = vmatpush2.bf16.msra.mxu0 %v4034
    %4250 = vmatprep.subr.bf16.mxu0 %v4029
    %4251 = vmatpush2.bf16.msra.mxu0 %v4028
    %4252 = vmatprep.subr.bf16.mxu0 %v4023
    %4253 = vmatpush2.bf16.msra.mxu0 %v4022
    %4254 = vmatprep.subr.bf16.mxu0 %v4017
    %4255 = vmatpush2.bf16.msra.mxu0 %v4016
    %4256 = vmatprep.subr.bf16.mxu0 %v4011
    %4257 = vmatpush2.bf16.msra.mxu0 %v4010
    %4258 = vmatprep.subr.bf16.mxu0 %v4005
    %4259 = vmatpush2.bf16.msra.mxu0 %v4004
    %4260 = vmatprep.subr.bf16.mxu0 %v3999
    %4261 = vmatpush2.bf16.msra.mxu0 %v3998
    %4262 = vmatprep.subr.bf16.mxu0 %v3993
    %4263 = vmatpush2.bf16.msra.mxu0 %v3992
    %4264 = vmatprep.mubr.bf16.mxu0 %v3502
    %4265 = vmatmul.mubr.bf16.gmra.mxu0 %v3499
    %v4266 = vpop.f32.mrf.mxu0
    %v4267 = vadd.f32 0.0, %v4266
    %v4268 = vpop.f32.mrf.mxu0
    %v4269 = vadd.f32 0.0, %v4268
    %v4270 = vpop.f32.mrf.mxu0
    %v4271 = vadd.f32 0.0, %v4270
    %v4272 = vpop.f32.mrf.mxu0
    %v4273 = vadd.f32 0.0, %v4272
    %4274 = vmatprep.mubr.bf16.mxu0 %v3501
    %4275 = vmatmul.mubr.bf16.gmra.mxu0 %v3498
    %v4276 = vpop.f32.mrf.mxu0
    %v4277 = vadd.f32 0.0, %v4276
    %v4278 = vpop.f32.mrf.mxu0
    %v4279 = vadd.f32 0.0, %v4278
    %v4280 = vpop.f32.mrf.mxu0
    %v4281 = vpop.f32.mrf.mxu0
    %4282 = vdwg.mxu0
    %4283 = vmatprep.subr.bf16.mxu0 %v4083
    %4284 = vmatpush1.bf16.msra.mxu0 %v4082
    %4285 = vmatprep.subr.bf16.mxu0 %v4077
    %4286 = vmatpush1.bf16.msra.mxu0 %v4076
    %4287 = vmatprep.subr.bf16.mxu0 %v4071
    %4288 = vmatpush1.bf16.msra.mxu0 %v4070
    %4289 = vmatprep.subr.bf16.mxu0 %v4065
    %4290 = vmatpush1.bf16.msra.mxu0 %v4064
    %4291 = vmatprep.subr.bf16.mxu0 %v4059
    %4292 = vmatpush1.bf16.msra.mxu0 %v4058
    %4293 = vmatprep.subr.bf16.mxu0 %v4053
    %4294 = vmatpush1.bf16.msra.mxu0 %v4052
    %4295 = vmatprep.subr.bf16.mxu0 %v4047
    %4296 = vmatpush1.bf16.msra.mxu0 %v4046
    %4297 = vmatprep.subr.bf16.mxu0 %v4041
    %4298 = vmatpush1.bf16.msra.mxu0 %v4040
    %4299 = vmatprep.subr.bf16.mxu0 0
    %4300 = vmatpush2.bf16.msra.mxu0 0
    %4301 = vmatprep.subr.bf16.mxu0 0
    %4302 = vmatpush2.bf16.msra.mxu0 0
    %4303 = vmatprep.subr.bf16.mxu0 0
    %4304 = vmatpush2.bf16.msra.mxu0 0
    %4305 = vmatprep.subr.bf16.mxu0 0
    %4306 = vmatpush2.bf16.msra.mxu0 0
    %4307 = vmatprep.subr.bf16.mxu0 0
    %4308 = vmatpush2.bf16.msra.mxu0 0
    %4309 = vmatprep.subr.bf16.mxu0 0
    %4310 = vmatpush2.bf16.msra.mxu0 0
    %4311 = vmatprep.subr.bf16.mxu0 0
    %4312 = vmatpush2.bf16.msra.mxu0 0
    %4313 = vmatprep.subr.bf16.mxu0 0
    %4314 = vmatpush2.bf16.msra.mxu0 0
    %4315 = vmatprep.mubr.bf16.mxu0 0
    %4316 = vmatmul.mubr.bf16.gmra.mxu0 %v3505
    %v4317 = vpop.f32.mrf.mxu0
    %v4318 = vadd.f32 %v4267, %v4317
    %v4319 = vpop.f32.mrf.mxu0
    %v4320 = vadd.f32 %v4269, %v4319
    %v4321 = vpop.f32.mrf.mxu0
    %v4322 = vadd.f32 %v4271, %v4321
    %v4323 = vpop.f32.mrf.mxu0
    %v4324 = vadd.f32 %v4273, %v4323
    %4325 = vmatprep.mubr.bf16.mxu0 0
    %4326 = vmatmul.mubr.bf16.gmra.mxu0 %v3504
    %v4327 = vpop.f32.mrf.mxu0
    %v4328 = vadd.f32 %v4277, %v4327
    %v4329 = vpop.f32.mrf.mxu0
    %v4330 = vadd.f32 %v4279, %v4329
    %v4331 = vpop.f32.mrf.mxu0
    %v4332 = vpop.f32.mrf.mxu0
    %4333 = vdwg.mxu0
    %4334 = vmatprep.subr.bf16.mxu0 %v3989
    %4335 = vmatpush1.bf16.msra.mxu0 %v3988
    %4336 = vmatprep.subr.bf16.mxu0 %v3983
    %4337 = vmatpush1.bf16.msra.mxu0 %v3982
    %4338 = vmatprep.subr.bf16.mxu0 %v3977
    %4339 = vmatpush1.bf16.msra.mxu0 %v3976
    %4340 = vmatprep.subr.bf16.mxu0 %v3971
    %4341 = vmatpush1.bf16.msra.mxu0 %v3970
    %4342 = vmatprep.subr.bf16.mxu0 %v3965
    %4343 = vmatpush1.bf16.msra.mxu0 %v3964
    %4344 = vmatprep.subr.bf16.mxu0 %v3959
    %4345 = vmatpush1.bf16.msra.mxu0 %v3958
    %4346 = vmatprep.subr.bf16.mxu0 %v3953
    %4347 = vmatpush1.bf16.msra.mxu0 %v3952
    %4348 = vmatprep.subr.bf16.mxu0 %v3947
    %4349 = vmatpush1.bf16.msra.mxu0 %v3946
    %4350 = vmatprep.subr.bf16.mxu0 %v4037
    %4351 = vmatpush2.bf16.msra.mxu0 %v4036
    %4352 = vmatprep.subr.bf16.mxu0 %v4031
    %4353 = vmatpush2.bf16.msra.mxu0 %v4030
    %4354 = vmatprep.subr.bf16.mxu0 %v4025
    %4355 = vmatpush2.bf16.msra.mxu0 %v4024
    %4356 = vmatprep.subr.bf16.mxu0 %v4019
    %4357 = vmatpush2.bf16.msra.mxu0 %v4018
    %4358 = vmatprep.subr.bf16.mxu0 %v4013
    %4359 = vmatpush2.bf16.msra.mxu0 %v4012
    %4360 = vmatprep.subr.bf16.mxu0 %v4007
    %4361 = vmatpush2.bf16.msra.mxu0 %v4006
    %4362 = vmatprep.subr.bf16.mxu0 %v4001
    %4363 = vmatpush2.bf16.msra.mxu0 %v4000
    %4364 = vmatprep.subr.bf16.mxu0 %v3995
    %4365 = vmatpush2.bf16.msra.mxu0 %v3994
    %4366 = vmatprep.mubr.bf16.mxu0 %v3502
    %4367 = vmatmul.mubr.bf16.gmra.mxu0 %v3499
    %v4368 = vpop.f32.mrf.mxu0
    %v4369 = vadd.f32 0.0, %v4368
    %v4370 = vpop.f32.mrf.mxu0
    %v4371 = vadd.f32 0.0, %v4370
    %v4372 = vpop.f32.mrf.mxu0
    %v4373 = vadd.f32 0.0, %v4372
    %v4374 = vpop.f32.mrf.mxu0
    %v4375 = vadd.f32 0.0, %v4374
    %4376 = vmatprep.mubr.bf16.mxu0 %v3501
    %4377 = vmatmul.mubr.bf16.gmra.mxu0 %v3498
    %v4378 = vpop.f32.mrf.mxu0
    %v4379 = vadd.f32 0.0, %v4378
    %v4380 = vpop.f32.mrf.mxu0
    %v4381 = vadd.f32 0.0, %v4380
    %v4382 = vpop.f32.mrf.mxu0
    %v4383 = vpop.f32.mrf.mxu0
    %4384 = vdwg.mxu0
    %4385 = vmatprep.subr.bf16.mxu0 %v4085
    %4386 = vmatpush1.bf16.msra.mxu0 %v4084
    %4387 = vmatprep.subr.bf16.mxu0 %v4079
    %4388 = vmatpush1.bf16.msra.mxu0 %v4078
    %4389 = vmatprep.subr.bf16.mxu0 %v4073
    %4390 = vmatpush1.bf16.msra.mxu0 %v4072
    %4391 = vmatprep.subr.bf16.mxu0 %v4067
    %4392 = vmatpush1.bf16.msra.mxu0 %v4066
    %4393 = vmatprep.subr.bf16.mxu0 %v4061
    %4394 = vmatpush1.bf16.msra.mxu0 %v4060
    %4395 = vmatprep.subr.bf16.mxu0 %v4055
    %4396 = vmatpush1.bf16.msra.mxu0 %v4054
    %4397 = vmatprep.subr.bf16.mxu0 %v4049
    %4398 = vmatpush1.bf16.msra.mxu0 %v4048
    %4399 = vmatprep.subr.bf16.mxu0 %v4043
    %4400 = vmatpush1.bf16.msra.mxu0 %v4042
    %4401 = vmatprep.subr.bf16.mxu0 0
    %4402 = vmatpush2.bf16.msra.mxu0 0
    %4403 = vmatprep.subr.bf16.mxu0 0
    %4404 = vmatpush2.bf16.msra.mxu0 0
    %4405 = vmatprep.subr.bf16.mxu0 0
    %4406 = vmatpush2.bf16.msra.mxu0 0
    %4407 = vmatprep.subr.bf16.mxu0 0
    %4408 = vmatpush2.bf16.msra.mxu0 0
    %4409 = vmatprep.subr.bf16.mxu0 0
    %4410 = vmatpush2.bf16.msra.mxu0 0
    %4411 = vmatprep.subr.bf16.mxu0 0
    %4412 = vmatpush2.bf16.msra.mxu0 0
    %4413 = vmatprep.subr.bf16.mxu0 0
    %4414 = vmatpush2.bf16.msra.mxu0 0
    %4415 = vmatprep.subr.bf16.mxu0 0
    %4416 = vmatpush2.bf16.msra.mxu0 0
    %4417 = vmatprep.mubr.bf16.mxu0 0
    %4418 = vmatmul.mubr.bf16.gmra.mxu0 %v3505
    %v4419 = vpop.f32.mrf.mxu0
    %v4420 = vadd.f32 %v4369, %v4419
    %v4421 = vpop.f32.mrf.mxu0
    %v4422 = vadd.f32 %v4371, %v4421
    %v4423 = vpop.f32.mrf.mxu0
    %v4424 = vadd.f32 %v4373, %v4423
    %v4425 = vpop.f32.mrf.mxu0
    %v4426 = vadd.f32 %v4375, %v4425
    %4427 = vmatprep.mubr.bf16.mxu0 0
    %4428 = vmatmul.mubr.bf16.gmra.mxu0 %v3504
    %v4429 = vpop.f32.mrf.mxu0
    %v4430 = vadd.f32 %v4379, %v4429
    %v4431 = vpop.f32.mrf.mxu0
    %v4432 = vadd.f32 %v4381, %v4431
    %v4433 = vpop.f32.mrf.mxu0
    %v4434 = vpop.f32.mrf.mxu0
    %4435 = vdwg.mxu0
    %4436 = vmatprep.subr.bf16.mxu0 %v3991
    %4437 = vmatpush1.bf16.msra.mxu0 %v3990
    %4438 = vmatprep.subr.bf16.mxu0 %v3985
    %4439 = vmatpush1.bf16.msra.mxu0 %v3984
    %4440 = vmatprep.subr.bf16.mxu0 %v3979
    %4441 = vmatpush1.bf16.msra.mxu0 %v3978
    %4442 = vmatprep.subr.bf16.mxu0 %v3973
    %4443 = vmatpush1.bf16.msra.mxu0 %v3972
    %4444 = vmatprep.subr.bf16.mxu0 %v3967
    %4445 = vmatpush1.bf16.msra.mxu0 %v3966
    %4446 = vmatprep.subr.bf16.mxu0 %v3961
    %4447 = vmatpush1.bf16.msra.mxu0 %v3960
    %4448 = vmatprep.subr.bf16.mxu0 %v3955
    %4449 = vmatpush1.bf16.msra.mxu0 %v3954
    %4450 = vmatprep.subr.bf16.mxu0 %v3949
    %4451 = vmatpush1.bf16.msra.mxu0 %v3948
    %4452 = vmatprep.subr.bf16.mxu0 %v4039
    %4453 = vmatpush2.bf16.msra.mxu0 %v4038
    %4454 = vmatprep.subr.bf16.mxu0 %v4033
    %4455 = vmatpush2.bf16.msra.mxu0 %v4032
    %4456 = vmatprep.subr.bf16.mxu0 %v4027
    %4457 = vmatpush2.bf16.msra.mxu0 %v4026
    %4458 = vmatprep.subr.bf16.mxu0 %v4021
    %4459 = vmatpush2.bf16.msra.mxu0 %v4020
    %4460 = vmatprep.subr.bf16.mxu0 %v4015
    %4461 = vmatpush2.bf16.msra.mxu0 %v4014
    %4462 = vmatprep.subr.bf16.mxu0 %v4009
    %4463 = vmatpush2.bf16.msra.mxu0 %v4008
    %4464 = vmatprep.subr.bf16.mxu0 %v4003
    %4465 = vmatpush2.bf16.msra.mxu0 %v4002
    %4466 = vmatprep.subr.bf16.mxu0 %v3997
    %4467 = vmatpush2.bf16.msra.mxu0 %v3996
    %4468 = vmatprep.mubr.bf16.mxu0 %v3502
    %4469 = vmatmul.mubr.bf16.gmra.mxu0 %v3499
    %v4470 = vpop.f32.mrf.mxu0
    %v4471 = vadd.f32 0.0, %v4470
    %v4472 = vpop.f32.mrf.mxu0
    %v4473 = vadd.f32 0.0, %v4472
    %v4474 = vpop.f32.mrf.mxu0
    %v4475 = vadd.f32 0.0, %v4474
    %v4476 = vpop.f32.mrf.mxu0
    %v4477 = vadd.f32 0.0, %v4476
    %4478 = vmatprep.mubr.bf16.mxu0 %v3501
    %4479 = vmatmul.mubr.bf16.gmra.mxu0 %v3498
    %v4480 = vpop.f32.mrf.mxu0
    %v4481 = vadd.f32 0.0, %v4480
    %v4482 = vpop.f32.mrf.mxu0
    %v4483 = vadd.f32 0.0, %v4482
    %v4484 = vpop.f32.mrf.mxu0
    %v4485 = vpop.f32.mrf.mxu0
    %4486 = vdwg.mxu0
    %4487 = vmatprep.subr.bf16.mxu0 %v4087
    %4488 = vmatpush1.bf16.msra.mxu0 %v4086
    %4489 = vmatprep.subr.bf16.mxu0 %v4081
    %4490 = vmatpush1.bf16.msra.mxu0 %v4080
    %4491 = vmatprep.subr.bf16.mxu0 %v4075
    %4492 = vmatpush1.bf16.msra.mxu0 %v4074
    %4493 = vmatprep.subr.bf16.mxu0 %v4069
    %4494 = vmatpush1.bf16.msra.mxu0 %v4068
    %4495 = vmatprep.subr.bf16.mxu0 %v4063
    %4496 = vmatpush1.bf16.msra.mxu0 %v4062
    %4497 = vmatprep.subr.bf16.mxu0 %v4057
    %4498 = vmatpush1.bf16.msra.mxu0 %v4056
    %4499 = vmatprep.subr.bf16.mxu0 %v4051
    %4500 = vmatpush1.bf16.msra.mxu0 %v4050
    %4501 = vmatprep.subr.bf16.mxu0 %v4045
    %4502 = vmatpush1.bf16.msra.mxu0 %v4044
    %4503 = vmatprep.subr.bf16.mxu0 0
    %4504 = vmatpush2.bf16.msra.mxu0 0
    %4505 = vmatprep.subr.bf16.mxu0 0
    %4506 = vmatpush2.bf16.msra.mxu0 0
    %4507 = vmatprep.subr.bf16.mxu0 0
    %4508 = vmatpush2.bf16.msra.mxu0 0
    %4509 = vmatprep.subr.bf16.mxu0 0
    %4510 = vmatpush2.bf16.msra.mxu0 0
    %4511 = vmatprep.subr.bf16.mxu0 0
    %4512 = vmatpush2.bf16.msra.mxu0 0
    %4513 = vmatprep.subr.bf16.mxu0 0
    %4514 = vmatpush2.bf16.msra.mxu0 0
    %4515 = vmatprep.subr.bf16.mxu0 0
    %4516 = vmatpush2.bf16.msra.mxu0 0
    %4517 = vmatprep.subr.bf16.mxu0 0
    %4518 = vmatpush2.bf16.msra.mxu0 0
    %4519 = vmatprep.mubr.bf16.mxu0 0
    %4520 = vmatmul.mubr.bf16.gmra.mxu0 %v3505
    %v4521 = vpop.f32.mrf.mxu0
    %v4522 = vadd.f32 %v4471, %v4521
    %v4523 = vpop.f32.mrf.mxu0
    %v4524 = vadd.f32 %v4473, %v4523
    %v4525 = vpop.f32.mrf.mxu0
    %v4526 = vadd.f32 %v4475, %v4525
    %v4527 = vpop.f32.mrf.mxu0
    %v4528 = vadd.f32 %v4477, %v4527
    %4529 = vmatprep.mubr.bf16.mxu0 0
    %4530 = vmatmul.mubr.bf16.gmra.mxu0 %v3504
    %v4531 = vpop.f32.mrf.mxu0
    %v4532 = vadd.f32 %v4481, %v4531
    %v4533 = vpop.f32.mrf.mxu0
    %v4534 = vadd.f32 %v4483, %v4533
    %v4535 = vpop.f32.mrf.mxu0
    %v4536 = vpop.f32.mrf.mxu0
    %4537 = vdwg.mxu0
    %v4538 = vadd.f32 %v3113, %v4318
    %v4539 = vadd.f32 %v3115, %v4320
    %v4540 = vadd.f32 %v3215, %v4420
    %v4541 = vadd.f32 %v3217, %v4422
    %v4542 = vadd.f32 %v3317, %v4522
    %v4543 = vadd.f32 %v3319, %v4524
    %v4544 = vadd.f32 %v3117, %v4322
    %v4545 = vadd.f32 %v3119, %v4324
    %v4546 = vadd.f32 %v3219, %v4424
    %v4547 = vadd.f32 %v3221, %v4426
    %v4548 = vadd.f32 %v3321, %v4526
    %v4549 = vadd.f32 %v3323, %v4528
    %v4550 = vadd.f32 %v3123, %v4328
    %v4551 = vadd.f32 %v3125, %v4330
    %v4552 = vadd.f32 %v3225, %v4430
    %v4553 = vadd.f32 %v3227, %v4432
    %v4554 = vadd.f32 %v3327, %v4532
    %v4555 = vadd.f32 %v3329, %v4534
    %v4556 = vld [vmem:[#allocation9] sm:$0x3f]
    %v4558 = vlaneseq
    %v4559 = vshrl.u32 %v4558, 7
    %v4560 = vsub.s32 0, %v4559
    %v4561 = vrot.slane %v4556, %v4560
    %v4562 = vlaneseq
    %v4563 = vshrl.u32 %v4562, 7
    %v4564 = vsub.s32 1, %v4563
    %v4565 = vrot.slane %v4556, %v4564
    %v4566 = vlaneseq
    %v4567 = vshrl.u32 %v4566, 7
    %v4568 = vsub.s32 2, %v4567
    %v4569 = vrot.slane %v4556, %v4568
    %v4570 = vlaneseq
    %v4571 = vshrl.u32 %v4570, 7
    %v4572 = vsub.s32 3, %v4571
    %v4573 = vrot.slane %v4556, %v4572
    %v4574 = vlaneseq
    %v4575 = vshrl.u32 %v4574, 7
    %v4576 = vsub.s32 4, %v4575
    %v4577 = vrot.slane %v4556, %v4576
    %v4578 = vlaneseq
    %v4579 = vshrl.u32 %v4578, 7
    %v4580 = vsub.s32 5, %v4579
    %v4581 = vrot.slane %v4556, %v4580
    %v4588 = vadd.f32 %v4538, %v4561
    %v4589 = vadd.f32 %v4539, %v4565
    %v4590 = vadd.f32 %v4540, %v4569
    %v4591 = vadd.f32 %v4541, %v4573
    %v4592 = vadd.f32 %v4542, %v4577
    %v4593 = vadd.f32 %v4543, %v4581
    %v4594 = vadd.f32 %v4544, %v4561
    %v4595 = vadd.f32 %v4545, %v4565
    %v4596 = vadd.f32 %v4546, %v4569
    %v4597 = vadd.f32 %v4547, %v4573
    %v4598 = vadd.f32 %v4548, %v4577
    %v4599 = vadd.f32 %v4549, %v4581
    %v4600 = vadd.f32 %v4550, %v4561
    %v4601 = vadd.f32 %v4551, %v4565
    %v4602 = vadd.f32 %v4552, %v4569
    %v4603 = vadd.f32 %v4553, %v4573
    %v4604 = vadd.f32 %v4554, %v4577
    %v4605 = vadd.f32 %v4555, %v4581
    %v4606 = vmax.f32 %v4588, 0.0
    %v4607 = vmax.f32 %v4589, 0.0
    %v4608 = vmax.f32 %v4590, 0.0
    %v4609 = vmax.f32 %v4591, 0.0
    %v4610 = vmax.f32 %v4592, 0.0
    %v4611 = vmax.f32 %v4593, 0.0
    %v4612 = vmax.f32 %v4594, 0.0
    %v4613 = vmax.f32 %v4595, 0.0
    %v4614 = vmax.f32 %v4596, 0.0
    %v4615 = vmax.f32 %v4597, 0.0
    %v4616 = vmax.f32 %v4598, 0.0
    %v4617 = vmax.f32 %v4599, 0.0
    %v4618 = vmax.f32 %v4600, 0.0
    %v4619 = vmax.f32 %v4601, 0.0
    %v4620 = vmax.f32 %v4602, 0.0
    %v4621 = vmax.f32 %v4603, 0.0
    %v4622 = vmax.f32 %v4604, 0.0
    %v4623 = vmax.f32 %v4605, 0.0
    %v4624 = vmax.f32 %v4606, %v4609
    %v4625 = vmax.f32 %v4607, %v4610
    %v4626 = vmax.f32 %v4608, %v4611
    %v4627 = vmax.f32 %v4612, %v4615
    %v4628 = vmax.f32 %v4613, %v4616
    %v4629 = vmax.f32 %v4614, %v4617
    %v4630 = vmax.f32 %v4618, %v4621
    %v4631 = vmax.f32 %v4619, %v4622
    %v4632 = vmax.f32 %v4620, %v4623
    %v4636 = vrot.slane %v4624, 1
    %v4637 = vrot.slane %v4625, 1
    %v4638 = vrot.slane %v4626, 1
    %v4642 = vmax.f32 %v4624, %v4636
    %v4643 = vmax.f32 %v4625, %v4637
    %v4644 = vmax.f32 %v4626, %v4638
    %v4648 = vrot.slane %v4642, 2
    %v4649 = vrot.slane %v4643, 2
    %v4650 = vrot.slane %v4644, 2
    %v4654 = vrot.slane %v4642, 4
    %v4655 = vrot.slane %v4643, 4
    %v4656 = vrot.slane %v4644, 4
    %v4660 = vrot.slane %v4642, 6
    %v4661 = vrot.slane %v4643, 6
    %v4662 = vrot.slane %v4644, 6
    %v4669 = vrot.slane %v4627, 1
    %v4670 = vrot.slane %v4628, 1
    %v4671 = vrot.slane %v4629, 1
    %v4675 = vmax.f32 %v4627, %v4669
    %v4676 = vmax.f32 %v4628, %v4670
    %v4677 = vmax.f32 %v4629, %v4671
    %v4681 = vrot.slane %v4630, 1
    %v4682 = vrot.slane %v4631, 1
    %v4683 = vrot.slane %v4632, 1
    %v4687 = vmax.f32 %v4627, %v4681
    %v4688 = vmax.f32 %v4628, %v4682
    %v4689 = vmax.f32 %v4629, %v4683
    %v4690 = vmax.f32 %v4630, %v4681
    %v4691 = vmax.f32 %v4631, %v4682
    %v4692 = vmax.f32 %v4632, %v4683
    %v4696 = vrot.slane %v4675, 2
    %v4697 = vrot.slane %v4676, 2
    %v4698 = vrot.slane %v4677, 2
    %v4702 = vrot.slane %v4687, 4
    %v4703 = vrot.slane %v4688, 4
    %v4704 = vrot.slane %v4689, 4
    %v4708 = vrot.slane %v4690, 6
    %v4709 = vrot.slane %v4691, 6
    %v4710 = vrot.slane %v4692, 6
    %v4711 = vrot.slane %v4696, 2
    %v4712 = vrot.slane %v4697, 2
    %v4713 = vrot.slane %v4698, 2
    %v4714 = vrot.slane %v4702, 2
    %v4715 = vrot.slane %v4703, 2
    %v4716 = vrot.slane %v4704, 2
    %v4717 = vrot.slane %v4708, 2
    %v4718 = vrot.slane %v4709, 2
    %v4719 = vrot.slane %v4710, 2
    %v4732 = vsel %vm866, %v4642, %v4696
    %v4733 = vsel %vm866, %v4643, %v4697
    %v4734 = vsel %vm866, %v4644, %v4698
    %v4735 = vsel %vm866, %v4648, %v4711
    %v4736 = vsel %vm866, %v4649, %v4712
    %v4737 = vsel %vm866, %v4650, %v4713
    %v4738 = vsel %vm866, %v4654, %v4714
    %v4739 = vsel %vm866, %v4655, %v4715
    %v4740 = vsel %vm866, %v4656, %v4716
    %v4741 = vsel %vm866, %v4660, %v4717
    %v4742 = vsel %vm866, %v4661, %v4718
    %v4743 = vsel %vm866, %v4662, %v4719
    %v4744 = vpack.c.bf16 %v4732, %v4732
    %v4745 = vpack.c.bf16 %v4733, %v4733
    %v4746 = vpack.c.bf16 %v4734, %v4734
    %v4747 = vpack.c.bf16 %v4735, %v4735
    %v4748 = vpack.c.bf16 %v4736, %v4736
    %v4749 = vpack.c.bf16 %v4737, %v4737
    %v4750 = vpack.c.bf16 %v4738, %v4738
    %v4751 = vpack.c.bf16 %v4739, %v4739
    %v4752 = vpack.c.bf16 %v4740, %v4740
    %v4753 = vpack.c.bf16 %v4741, %v4741
    %v4754 = vpack.c.bf16 %v4742, %v4742
    %v4755 = vpack.c.bf16 %v4743, %v4743
    %v4756 = vld [vmem:[#allocation11] sm:$0xf]
    %v4757 = vld [vmem:[#allocation11 + $0x4] sm:$0xf]
    %v4758 = vld [vmem:[#allocation11 + $0x8] sm:$0xf]
    %v4759 = vld [vmem:[#allocation11 + $0xc] sm:$0xf]
    %v4760 = vld [vmem:[#allocation11 + $0x10] sm:$0xf]
    %v4761 = vld [vmem:[#allocation11 + $0x14] sm:$0xf]
    %v4762 = vld [vmem:[#allocation11 + $0x18] sm:$0xf]
    %v4763 = vld [vmem:[#allocation11 + $0x1c] sm:$0xf]
    %v4764 = vld [vmem:[#allocation11 + $0x20] sm:$0xf]
    %v4765 = vld [vmem:[#allocation11 + $0x24] sm:$0xf]
    %v4766 = vld [vmem:[#allocation11 + $0x28] sm:$0xf]
    %v4767 = vld [vmem:[#allocation11 + $0x2c] sm:$0xf]
    %v4768 = vld [vmem:[#allocation11 + $0x30] sm:$0xf]
    %v4769 = vld [vmem:[#allocation11 + $0x34] sm:$0xf]
    %v4770 = vld [vmem:[#allocation11 + $0x38] sm:$0xf]
    %v4771 = vld [vmem:[#allocation11 + $0x3c] sm:$0xf]
    %v4772 = vld [vmem:[#allocation11 + $0x40] sm:$0xf]
    %v4773 = vld [vmem:[#allocation11 + $0x44] sm:$0xf]
    %v4774 = vld [vmem:[#allocation11 + $0x48] sm:$0xf]
    %v4775 = vld [vmem:[#allocation11 + $0x4c] sm:$0xf]
    %v4776 = vld [vmem:[#allocation11 + $0x50] sm:$0xf]
    %v4777 = vld [vmem:[#allocation11 + $0x54] sm:$0xf]
    %v4778 = vld [vmem:[#allocation11 + $0x58] sm:$0xf]
    %v4779 = vld [vmem:[#allocation11 + $0x5c] sm:$0xf]
    %v4780 = vld [vmem:[#allocation11 + $0x60] sm:$0xf]
    %v4781 = vld [vmem:[#allocation11 + $0x64] sm:$0xf]
    %v4782 = vld [vmem:[#allocation11 + $0x68] sm:$0xf]
    %v4783 = vld [vmem:[#allocation11 + $0x6c] sm:$0xf]
    %v4784 = vld [vmem:[#allocation11 + $0x70] sm:$0xf]
    %v4785 = vld [vmem:[#allocation11 + $0x74] sm:$0xf]
    %v4786 = vld [vmem:[#allocation11 + $0x78] sm:$0xf]
    %v4787 = vld [vmem:[#allocation11 + $0x7c] sm:$0xf]
    %v4788 = vld [vmem:[#allocation11 + $0x80] sm:$0xf]
    %v4789 = vld [vmem:[#allocation11 + $0x84] sm:$0xf]
    %v4790 = vld [vmem:[#allocation11 + $0x88] sm:$0xf]
    %v4791 = vld [vmem:[#allocation11 + $0x8c] sm:$0xf]
    %v4792 = vld [vmem:[#allocation11 + $0x90] sm:$0xf]
    %v4793 = vld [vmem:[#allocation11 + $0x94] sm:$0xf]
    %v4794 = vld [vmem:[#allocation11 + $0x98] sm:$0xf]
    %v4795 = vld [vmem:[#allocation11 + $0x9c] sm:$0xf]
    %v4796 = vld [vmem:[#allocation11 + $0xa0] sm:$0xf]
    %v4797 = vld [vmem:[#allocation11 + $0xa4] sm:$0xf]
    %v4798 = vld [vmem:[#allocation11 + $0xa8] sm:$0xf]
    %v4799 = vld [vmem:[#allocation11 + $0xac] sm:$0xf]
    %v4800 = vld [vmem:[#allocation11 + $0xb0] sm:$0xf]
    %v4801 = vld [vmem:[#allocation11 + $0xb4] sm:$0xf]
    %v4802 = vld [vmem:[#allocation11 + $0xb8] sm:$0xf]
    %v4803 = vld [vmem:[#allocation11 + $0xbc] sm:$0xf]
    %v4804 = vld [vmem:[#allocation11 + $0xc0] sm:$0xf]
    %v4805 = vld [vmem:[#allocation11 + $0xc4] sm:$0xf]
    %v4806 = vld [vmem:[#allocation11 + $0xc8] sm:$0xf]
    %v4807 = vld [vmem:[#allocation11 + $0xcc] sm:$0xf]
    %v4808 = vld [vmem:[#allocation11 + $0xd0] sm:$0xf]
    %v4809 = vld [vmem:[#allocation11 + $0xd4] sm:$0xf]
    %v4810 = vld [vmem:[#allocation11 + $0xd8] sm:$0xf]
    %v4811 = vld [vmem:[#allocation11 + $0xdc] sm:$0xf]
    %v4812 = vld [vmem:[#allocation11 + $0xe0] sm:$0xf]
    %v4813 = vld [vmem:[#allocation11 + $0xe4] sm:$0xf]
    %v4814 = vld [vmem:[#allocation11 + $0xe8] sm:$0xf]
    %v4815 = vld [vmem:[#allocation11 + $0xec] sm:$0xf]
    %v4816 = vld [vmem:[#allocation11 + $0xf0] sm:$0xf]
    %v4817 = vld [vmem:[#allocation11 + $0xf4] sm:$0xf]
    %v4818 = vld [vmem:[#allocation11 + $0xf8] sm:$0xf]
    %v4819 = vld [vmem:[#allocation11 + $0xfc] sm:$0xf]
    %v4820 = vld [vmem:[#allocation11 + $0x100] sm:$0xf]
    %v4821 = vld [vmem:[#allocation11 + $0x104] sm:$0xf]
    %v4822 = vld [vmem:[#allocation11 + $0x108] sm:$0xf]
    %v4823 = vld [vmem:[#allocation11 + $0x10c] sm:$0xf]
    %v4824 = vld [vmem:[#allocation11 + $0x110] sm:$0xf]
    %v4825 = vld [vmem:[#allocation11 + $0x114] sm:$0xf]
    %v4826 = vld [vmem:[#allocation11 + $0x118] sm:$0xf]
    %v4827 = vld [vmem:[#allocation11 + $0x11c] sm:$0xf]
    %v4828 = vld [vmem:[#allocation11 + $0x120] sm:$0xf]
    %v4829 = vld [vmem:[#allocation11 + $0x124] sm:$0xf]
    %v4830 = vld [vmem:[#allocation11 + $0x128] sm:$0xf]
    %v4831 = vld [vmem:[#allocation11 + $0x12c] sm:$0xf]
    %v4832 = vld [vmem:[#allocation11 + $0x130] sm:$0xf]
    %v4833 = vld [vmem:[#allocation11 + $0x134] sm:$0xf]
    %v4834 = vld [vmem:[#allocation11 + $0x138] sm:$0xf]
    %v4835 = vld [vmem:[#allocation11 + $0x13c] sm:$0xf]
    %v4836 = vld [vmem:[#allocation11 + $0x140] sm:$0xf]
    %v4837 = vld [vmem:[#allocation11 + $0x144] sm:$0xf]
    %v4838 = vld [vmem:[#allocation11 + $0x148] sm:$0xf]
    %v4839 = vld [vmem:[#allocation11 + $0x14c] sm:$0xf]
    %v4840 = vld [vmem:[#allocation11 + $0x150] sm:$0xf]
    %v4841 = vld [vmem:[#allocation11 + $0x154] sm:$0xf]
    %v4842 = vld [vmem:[#allocation11 + $0x158] sm:$0xf]
    %v4843 = vld [vmem:[#allocation11 + $0x15c] sm:$0xf]
    %v4844 = vld [vmem:[#allocation11 + $0x160] sm:$0xf]
    %v4845 = vld [vmem:[#allocation11 + $0x164] sm:$0xf]
    %v4846 = vld [vmem:[#allocation11 + $0x168] sm:$0xf]
    %v4847 = vld [vmem:[#allocation11 + $0x16c] sm:$0xf]
    %v4848 = vld [vmem:[#allocation11 + $0x170] sm:$0xf]
    %v4849 = vld [vmem:[#allocation11 + $0x174] sm:$0xf]
    %v4850 = vld [vmem:[#allocation11 + $0x178] sm:$0xf]
    %v4851 = vld [vmem:[#allocation11 + $0x17c] sm:$0xf]
    %v4852 = vld [vmem:[#allocation11 + $0x180] sm:$0xf]
    %v4853 = vld [vmem:[#allocation11 + $0x184] sm:$0xf]
    %v4854 = vld [vmem:[#allocation11 + $0x188] sm:$0xf]
    %v4855 = vld [vmem:[#allocation11 + $0x18c] sm:$0xf]
    %v4856 = vld [vmem:[#allocation11 + $0x190] sm:$0xf]
    %v4857 = vld [vmem:[#allocation11 + $0x194] sm:$0xf]
    %v4858 = vld [vmem:[#allocation11 + $0x198] sm:$0xf]
    %v4859 = vld [vmem:[#allocation11 + $0x19c] sm:$0xf]
    %v4860 = vld [vmem:[#allocation11 + $0x1a0] sm:$0xf]
    %v4861 = vld [vmem:[#allocation11 + $0x1a4] sm:$0xf]
    %v4862 = vld [vmem:[#allocation11 + $0x1a8] sm:$0xf]
    %v4863 = vld [vmem:[#allocation11 + $0x1ac] sm:$0xf]
    %v4864 = vld [vmem:[#allocation11 + $0x1b0] sm:$0xf]
    %v4865 = vld [vmem:[#allocation11 + $0x1b4] sm:$0xf]
    %v4866 = vld [vmem:[#allocation11 + $0x1b8] sm:$0xf]
    %v4867 = vld [vmem:[#allocation11 + $0x1bc] sm:$0xf]
    %v4868 = vld [vmem:[#allocation11 + $0x1c0] sm:$0xf]
    %v4869 = vld [vmem:[#allocation11 + $0x1c4] sm:$0xf]
    %v4870 = vld [vmem:[#allocation11 + $0x1c8] sm:$0xf]
    %v4871 = vld [vmem:[#allocation11 + $0x1cc] sm:$0xf]
    %v4872 = vld [vmem:[#allocation11 + $0x1d0] sm:$0xf]
    %v4873 = vld [vmem:[#allocation11 + $0x1d4] sm:$0xf]
    %v4874 = vld [vmem:[#allocation11 + $0x1d8] sm:$0xf]
    %v4875 = vld [vmem:[#allocation11 + $0x1dc] sm:$0xf]
    %v4876 = vld [vmem:[#allocation11 + $0x1e0] sm:$0xf]
    %v4877 = vld [vmem:[#allocation11 + $0x1e4] sm:$0xf]
    %v4878 = vld [vmem:[#allocation11 + $0x1e8] sm:$0xf]
    %v4879 = vld [vmem:[#allocation11 + $0x1ec] sm:$0xf]
    %v4880 = vld [vmem:[#allocation11 + $0x1f0] sm:$0xf]
    %v4881 = vld [vmem:[#allocation11 + $0x1f4] sm:$0xf]
    %v4882 = vld [vmem:[#allocation11 + $0x1f8] sm:$0xf]
    %v4883 = vld [vmem:[#allocation11 + $0x1fc] sm:$0xf]
    %v4884 = vld [vmem:[#allocation11 + $0x200] sm:$0xf]
    %v4885 = vld [vmem:[#allocation11 + $0x204] sm:$0xf]
    %v4886 = vld [vmem:[#allocation11 + $0x208] sm:$0xf]
    %v4887 = vld [vmem:[#allocation11 + $0x20c] sm:$0xf]
    %v4888 = vld [vmem:[#allocation11 + $0x210] sm:$0xf]
    %v4889 = vld [vmem:[#allocation11 + $0x214] sm:$0xf]
    %v4890 = vld [vmem:[#allocation11 + $0x218] sm:$0xf]
    %v4891 = vld [vmem:[#allocation11 + $0x21c] sm:$0xf]
    %v4892 = vld [vmem:[#allocation11 + $0x220] sm:$0xf]
    %v4893 = vld [vmem:[#allocation11 + $0x224] sm:$0xf]
    %v4894 = vld [vmem:[#allocation11 + $0x228] sm:$0xf]
    %v4895 = vld [vmem:[#allocation11 + $0x22c] sm:$0xf]
    %v4896 = vld [vmem:[#allocation11 + $0x230] sm:$0xf]
    %v4897 = vld [vmem:[#allocation11 + $0x234] sm:$0xf]
    %v4898 = vld [vmem:[#allocation11 + $0x238] sm:$0xf]
    %v4899 = vld [vmem:[#allocation11 + $0x23c] sm:$0xf]
    %v4900 = vld [vmem:[#allocation11 + $0x240] sm:$0xf]
    %v4901 = vld [vmem:[#allocation11 + $0x244] sm:$0xf]
    %v4902 = vld [vmem:[#allocation11 + $0x248] sm:$0xf]
    %v4903 = vld [vmem:[#allocation11 + $0x24c] sm:$0xf]
    %v4904 = vld [vmem:[#allocation11 + $0x250] sm:$0xf]
    %v4905 = vld [vmem:[#allocation11 + $0x254] sm:$0xf]
    %v4906 = vld [vmem:[#allocation11 + $0x258] sm:$0xf]
    %v4907 = vld [vmem:[#allocation11 + $0x25c] sm:$0xf]
    %v4908 = vld [vmem:[#allocation11 + $0x260] sm:$0xf]
    %v4909 = vld [vmem:[#allocation11 + $0x264] sm:$0xf]
    %v4910 = vld [vmem:[#allocation11 + $0x268] sm:$0xf]
    %v4911 = vld [vmem:[#allocation11 + $0x26c] sm:$0xf]
    %v4912 = vld [vmem:[#allocation11 + $0x270] sm:$0xf]
    %v4913 = vld [vmem:[#allocation11 + $0x274] sm:$0xf]
    %v4914 = vld [vmem:[#allocation11 + $0x278] sm:$0xf]
    %v4915 = vld [vmem:[#allocation11 + $0x27c] sm:$0xf]
    %v4916 = vld [vmem:[#allocation11 + $0x280] sm:$0xf]
    %v4917 = vld [vmem:[#allocation11 + $0x284] sm:$0xf]
    %v4918 = vld [vmem:[#allocation11 + $0x288] sm:$0xf]
    %v4919 = vld [vmem:[#allocation11 + $0x28c] sm:$0xf]
    %v4920 = vld [vmem:[#allocation11 + $0x290] sm:$0xf]
    %v4921 = vld [vmem:[#allocation11 + $0x294] sm:$0xf]
    %v4922 = vld [vmem:[#allocation11 + $0x298] sm:$0xf]
    %v4923 = vld [vmem:[#allocation11 + $0x29c] sm:$0xf]
    %v4924 = vld [vmem:[#allocation11 + $0x2a0] sm:$0xf]
    %v4925 = vld [vmem:[#allocation11 + $0x2a4] sm:$0xf]
    %v4926 = vld [vmem:[#allocation11 + $0x2a8] sm:$0xf]
    %v4927 = vld [vmem:[#allocation11 + $0x2ac] sm:$0xf]
    %v4928 = vld [vmem:[#allocation11 + $0x2b0] sm:$0xf]
    %v4929 = vld [vmem:[#allocation11 + $0x2b4] sm:$0xf]
    %v4930 = vld [vmem:[#allocation11 + $0x2b8] sm:$0xf]
    %v4931 = vld [vmem:[#allocation11 + $0x2bc] sm:$0xf]
    %v4932 = vld [vmem:[#allocation11 + $0x2c0] sm:$0xf]
    %v4933 = vld [vmem:[#allocation11 + $0x2c4] sm:$0xf]
    %v4934 = vld [vmem:[#allocation11 + $0x2c8] sm:$0xf]
    %v4935 = vld [vmem:[#allocation11 + $0x2cc] sm:$0xf]
    %v4936 = vld [vmem:[#allocation11 + $0x2d0] sm:$0xf]
    %v4937 = vld [vmem:[#allocation11 + $0x2d4] sm:$0xf]
    %v4938 = vld [vmem:[#allocation11 + $0x2d8] sm:$0xf]
    %v4939 = vld [vmem:[#allocation11 + $0x2dc] sm:$0xf]
    %v4940 = vld [vmem:[#allocation11 + $0x2e0] sm:$0xf]
    %v4941 = vld [vmem:[#allocation11 + $0x2e4] sm:$0xf]
    %v4942 = vld [vmem:[#allocation11 + $0x2e8] sm:$0xf]
    %v4943 = vld [vmem:[#allocation11 + $0x2ec] sm:$0xf]
    %v4944 = vld [vmem:[#allocation11 + $0x2f0] sm:$0xf]
    %v4945 = vld [vmem:[#allocation11 + $0x2f4] sm:$0xf]
    %v4946 = vld [vmem:[#allocation11 + $0x2f8] sm:$0xf]
    %v4947 = vld [vmem:[#allocation11 + $0x2fc] sm:$0xf]
    %v4948 = vld [vmem:[#allocation12] sm:$0x1]
    %v4950 = vlaneseq
    %v4951 = vshrl.u32 %v4950, 7
    %v4952 = vsub.s32 0, %v4951
    %v4953 = vrot.slane %v4948, %v4952
    %v5147 = vunpack.c.l.b16 %v4756
    %v5148 = vunpack.c.l.b16 %v4757
    %v5149 = vunpack.c.l.b16 %v4758
    %v5150 = vunpack.c.l.b16 %v4759
    %v5151 = vunpack.c.l.b16 %v4760
    %v5152 = vunpack.c.l.b16 %v4761
    %v5153 = vunpack.c.l.b16 %v4762
    %v5154 = vunpack.c.l.b16 %v4763
    %v5155 = vunpack.c.l.b16 %v4764
    %v5156 = vunpack.c.l.b16 %v4765
    %v5157 = vunpack.c.l.b16 %v4766
    %v5158 = vunpack.c.l.b16 %v4767
    %v5159 = vunpack.c.l.b16 %v4768
    %v5160 = vunpack.c.l.b16 %v4769
    %v5161 = vunpack.c.l.b16 %v4770
    %v5162 = vunpack.c.l.b16 %v4771
    %v5163 = vunpack.c.l.b16 %v4772
    %v5164 = vunpack.c.l.b16 %v4773
    %v5165 = vunpack.c.l.b16 %v4774
    %v5166 = vunpack.c.l.b16 %v4775
    %v5167 = vunpack.c.l.b16 %v4776
    %v5168 = vunpack.c.l.b16 %v4777
    %v5169 = vunpack.c.l.b16 %v4778
    %v5170 = vunpack.c.l.b16 %v4779
    %v5171 = vunpack.c.l.b16 %v4780
    %v5172 = vunpack.c.l.b16 %v4781
    %v5173 = vunpack.c.l.b16 %v4782
    %v5174 = vunpack.c.l.b16 %v4783
    %v5175 = vunpack.c.l.b16 %v4784
    %v5176 = vunpack.c.l.b16 %v4785
    %v5177 = vunpack.c.l.b16 %v4786
    %v5178 = vunpack.c.l.b16 %v4787
    %v5179 = vunpack.c.l.b16 %v4788
    %v5180 = vunpack.c.l.b16 %v4789
    %v5181 = vunpack.c.l.b16 %v4790
    %v5182 = vunpack.c.l.b16 %v4791
    %v5183 = vunpack.c.l.b16 %v4792
    %v5184 = vunpack.c.l.b16 %v4793
    %v5185 = vunpack.c.l.b16 %v4794
    %v5186 = vunpack.c.l.b16 %v4795
    %v5187 = vunpack.c.l.b16 %v4796
    %v5188 = vunpack.c.l.b16 %v4797
    %v5189 = vunpack.c.l.b16 %v4798
    %v5190 = vunpack.c.l.b16 %v4799
    %v5191 = vunpack.c.l.b16 %v4800
    %v5192 = vunpack.c.l.b16 %v4801
    %v5193 = vunpack.c.l.b16 %v4802
    %v5194 = vunpack.c.l.b16 %v4803
    %v5195 = vunpack.c.l.b16 %v4804
    %v5196 = vunpack.c.l.b16 %v4805
    %v5197 = vunpack.c.l.b16 %v4806
    %v5198 = vunpack.c.l.b16 %v4807
    %v5199 = vunpack.c.l.b16 %v4808
    %v5200 = vunpack.c.l.b16 %v4809
    %v5201 = vunpack.c.l.b16 %v4810
    %v5202 = vunpack.c.l.b16 %v4811
    %v5203 = vunpack.c.l.b16 %v4812
    %v5204 = vunpack.c.l.b16 %v4813
    %v5205 = vunpack.c.l.b16 %v4814
    %v5206 = vunpack.c.l.b16 %v4815
    %v5207 = vunpack.c.l.b16 %v4816
    %v5208 = vunpack.c.l.b16 %v4817
    %v5209 = vunpack.c.l.b16 %v4818
    %v5210 = vunpack.c.l.b16 %v4819
    %v5211 = vunpack.c.l.b16 %v4820
    %v5212 = vunpack.c.l.b16 %v4821
    %v5213 = vunpack.c.l.b16 %v4822
    %v5214 = vunpack.c.l.b16 %v4823
    %v5215 = vunpack.c.l.b16 %v4824
    %v5216 = vunpack.c.l.b16 %v4825
    %v5217 = vunpack.c.l.b16 %v4826
    %v5218 = vunpack.c.l.b16 %v4827
    %v5219 = vunpack.c.l.b16 %v4828
    %v5220 = vunpack.c.l.b16 %v4829
    %v5221 = vunpack.c.l.b16 %v4830
    %v5222 = vunpack.c.l.b16 %v4831
    %v5223 = vunpack.c.l.b16 %v4832
    %v5224 = vunpack.c.l.b16 %v4833
    %v5225 = vunpack.c.l.b16 %v4834
    %v5226 = vunpack.c.l.b16 %v4835
    %v5227 = vunpack.c.l.b16 %v4836
    %v5228 = vunpack.c.l.b16 %v4837
    %v5229 = vunpack.c.l.b16 %v4838
    %v5230 = vunpack.c.l.b16 %v4839
    %v5231 = vunpack.c.l.b16 %v4840
    %v5232 = vunpack.c.l.b16 %v4841
    %v5233 = vunpack.c.l.b16 %v4842
    %v5234 = vunpack.c.l.b16 %v4843
    %v5235 = vunpack.c.l.b16 %v4844
    %v5236 = vunpack.c.l.b16 %v4845
    %v5237 = vunpack.c.l.b16 %v4846
    %v5238 = vunpack.c.l.b16 %v4847
    %v5239 = vunpack.c.l.b16 %v4848
    %v5240 = vunpack.c.l.b16 %v4849
    %v5241 = vunpack.c.l.b16 %v4850
    %v5242 = vunpack.c.l.b16 %v4851
    %v5243 = vunpack.c.l.b16 %v4852
    %v5244 = vunpack.c.l.b16 %v4853
    %v5245 = vunpack.c.l.b16 %v4854
    %v5246 = vunpack.c.l.b16 %v4855
    %v5247 = vunpack.c.l.b16 %v4856
    %v5248 = vunpack.c.l.b16 %v4857
    %v5249 = vunpack.c.l.b16 %v4858
    %v5250 = vunpack.c.l.b16 %v4859
    %v5251 = vunpack.c.l.b16 %v4860
    %v5252 = vunpack.c.l.b16 %v4861
    %v5253 = vunpack.c.l.b16 %v4862
    %v5254 = vunpack.c.l.b16 %v4863
    %v5255 = vunpack.c.l.b16 %v4864
    %v5256 = vunpack.c.l.b16 %v4865
    %v5257 = vunpack.c.l.b16 %v4866
    %v5258 = vunpack.c.l.b16 %v4867
    %v5259 = vunpack.c.l.b16 %v4868
    %v5260 = vunpack.c.l.b16 %v4869
    %v5261 = vunpack.c.l.b16 %v4870
    %v5262 = vunpack.c.l.b16 %v4871
    %v5263 = vunpack.c.l.b16 %v4872
    %v5264 = vunpack.c.l.b16 %v4873
    %v5265 = vunpack.c.l.b16 %v4874
    %v5266 = vunpack.c.l.b16 %v4875
    %v5267 = vunpack.c.l.b16 %v4876
    %v5268 = vunpack.c.l.b16 %v4877
    %v5269 = vunpack.c.l.b16 %v4878
    %v5270 = vunpack.c.l.b16 %v4879
    %v5271 = vunpack.c.l.b16 %v4880
    %v5272 = vunpack.c.l.b16 %v4881
    %v5273 = vunpack.c.l.b16 %v4882
    %v5274 = vunpack.c.l.b16 %v4883
    %v5275 = vunpack.c.l.b16 %v4884
    %v5276 = vunpack.c.l.b16 %v4885
    %v5277 = vunpack.c.l.b16 %v4886
    %v5278 = vunpack.c.l.b16 %v4887
    %v5279 = vunpack.c.l.b16 %v4888
    %v5280 = vunpack.c.l.b16 %v4889
    %v5281 = vunpack.c.l.b16 %v4890
    %v5282 = vunpack.c.l.b16 %v4891
    %v5283 = vunpack.c.l.b16 %v4892
    %v5284 = vunpack.c.l.b16 %v4893
    %v5285 = vunpack.c.l.b16 %v4894
    %v5286 = vunpack.c.l.b16 %v4895
    %v5287 = vunpack.c.l.b16 %v4896
    %v5288 = vunpack.c.l.b16 %v4897
    %v5289 = vunpack.c.l.b16 %v4898
    %v5290 = vunpack.c.l.b16 %v4899
    %v5291 = vunpack.c.l.b16 %v4900
    %v5292 = vunpack.c.l.b16 %v4901
    %v5293 = vunpack.c.l.b16 %v4902
    %v5294 = vunpack.c.l.b16 %v4903
    %v5295 = vunpack.c.l.b16 %v4904
    %v5296 = vunpack.c.l.b16 %v4905
    %v5297 = vunpack.c.l.b16 %v4906
    %v5298 = vunpack.c.l.b16 %v4907
    %v5299 = vunpack.c.l.b16 %v4908
    %v5300 = vunpack.c.l.b16 %v4909
    %v5301 = vunpack.c.l.b16 %v4910
    %v5302 = vunpack.c.l.b16 %v4911
    %v5303 = vunpack.c.l.b16 %v4912
    %v5304 = vunpack.c.l.b16 %v4913
    %v5305 = vunpack.c.l.b16 %v4914
    %v5306 = vunpack.c.l.b16 %v4915
    %v5307 = vunpack.c.l.b16 %v4916
    %v5308 = vunpack.c.l.b16 %v4917
    %v5309 = vunpack.c.l.b16 %v4918
    %v5310 = vunpack.c.l.b16 %v4919
    %v5311 = vunpack.c.l.b16 %v4920
    %v5312 = vunpack.c.l.b16 %v4921
    %v5313 = vunpack.c.l.b16 %v4922
    %v5314 = vunpack.c.l.b16 %v4923
    %v5315 = vunpack.c.l.b16 %v4924
    %v5316 = vunpack.c.l.b16 %v4925
    %v5317 = vunpack.c.l.b16 %v4926
    %v5318 = vunpack.c.l.b16 %v4927
    %v5319 = vunpack.c.l.b16 %v4928
    %v5320 = vunpack.c.l.b16 %v4929
    %v5321 = vunpack.c.l.b16 %v4930
    %v5322 = vunpack.c.l.b16 %v4931
    %v5323 = vunpack.c.l.b16 %v4932
    %v5324 = vunpack.c.l.b16 %v4933
    %v5325 = vunpack.c.l.b16 %v4934
    %v5326 = vunpack.c.l.b16 %v4935
    %v5327 = vunpack.c.l.b16 %v4936
    %v5328 = vunpack.c.l.b16 %v4937
    %v5329 = vunpack.c.l.b16 %v4938
    %v5330 = vunpack.c.l.b16 %v4939
    %v5331 = vunpack.c.l.b16 %v4940
    %v5332 = vunpack.c.l.b16 %v4941
    %v5333 = vunpack.c.l.b16 %v4942
    %v5334 = vunpack.c.l.b16 %v4943
    %v5335 = vunpack.c.l.b16 %v4944
    %v5336 = vunpack.c.l.b16 %v4945
    %v5337 = vunpack.c.l.b16 %v4946
    %v5338 = vunpack.c.l.b16 %v4947
    %v5339 = vpack.c.b16 %v5148, %v5147
    %v5340 = vpack.c.b16 %v5150, %v5149
    %v5341 = vpack.c.b16 %v5152, %v5151
    %v5342 = vpack.c.b16 %v5154, %v5153
    %v5343 = vpack.c.b16 %v5156, %v5155
    %v5344 = vpack.c.b16 %v5158, %v5157
    %v5345 = vpack.c.b16 %v5160, %v5159
    %v5346 = vpack.c.b16 %v5162, %v5161
    %v5347 = vpack.c.b16 %v5164, %v5163
    %v5348 = vpack.c.b16 %v5166, %v5165
    %v5349 = vpack.c.b16 %v5168, %v5167
    %v5350 = vpack.c.b16 %v5170, %v5169
    %v5351 = vpack.c.b16 %v5172, %v5171
    %v5352 = vpack.c.b16 %v5174, %v5173
    %v5353 = vpack.c.b16 %v5176, %v5175
    %v5354 = vpack.c.b16 %v5178, %v5177
    %v5355 = vpack.c.b16 %v5180, %v5179
    %v5356 = vpack.c.b16 %v5182, %v5181
    %v5357 = vpack.c.b16 %v5184, %v5183
    %v5358 = vpack.c.b16 %v5186, %v5185
    %v5359 = vpack.c.b16 %v5188, %v5187
    %v5360 = vpack.c.b16 %v5190, %v5189
    %v5361 = vpack.c.b16 %v5192, %v5191
    %v5362 = vpack.c.b16 %v5194, %v5193
    %v5363 = vpack.c.b16 %v5196, %v5195
    %v5364 = vpack.c.b16 %v5198, %v5197
    %v5365 = vpack.c.b16 %v5200, %v5199
    %v5366 = vpack.c.b16 %v5202, %v5201
    %v5367 = vpack.c.b16 %v5204, %v5203
    %v5368 = vpack.c.b16 %v5206, %v5205
    %v5369 = vpack.c.b16 %v5208, %v5207
    %v5370 = vpack.c.b16 %v5210, %v5209
    %v5371 = vpack.c.b16 %v5212, %v5211
    %v5372 = vpack.c.b16 %v5214, %v5213
    %v5373 = vpack.c.b16 %v5216, %v5215
    %v5374 = vpack.c.b16 %v5218, %v5217
    %v5375 = vpack.c.b16 %v5220, %v5219
    %v5376 = vpack.c.b16 %v5222, %v5221
    %v5377 = vpack.c.b16 %v5224, %v5223
    %v5378 = vpack.c.b16 %v5226, %v5225
    %v5379 = vpack.c.b16 %v5228, %v5227
    %v5380 = vpack.c.b16 %v5230, %v5229
    %v5381 = vpack.c.b16 %v5232, %v5231
    %v5382 = vpack.c.b16 %v5234, %v5233
    %v5383 = vpack.c.b16 %v5236, %v5235
    %v5384 = vpack.c.b16 %v5238, %v5237
    %v5385 = vpack.c.b16 %v5240, %v5239
    %v5386 = vpack.c.b16 %v5242, %v5241
    %v5387 = vpack.c.b16 %v5244, %v5243
    %v5388 = vpack.c.b16 %v5246, %v5245
    %v5389 = vpack.c.b16 %v5248, %v5247
    %v5390 = vpack.c.b16 %v5250, %v5249
    %v5391 = vpack.c.b16 %v5252, %v5251
    %v5392 = vpack.c.b16 %v5254, %v5253
    %v5393 = vpack.c.b16 %v5256, %v5255
    %v5394 = vpack.c.b16 %v5258, %v5257
    %v5395 = vpack.c.b16 %v5260, %v5259
    %v5396 = vpack.c.b16 %v5262, %v5261
    %v5397 = vpack.c.b16 %v5264, %v5263
    %v5398 = vpack.c.b16 %v5266, %v5265
    %v5399 = vpack.c.b16 %v5268, %v5267
    %v5400 = vpack.c.b16 %v5270, %v5269
    %v5401 = vpack.c.b16 %v5272, %v5271
    %v5402 = vpack.c.b16 %v5274, %v5273
    %v5403 = vpack.c.b16 %v5276, %v5275
    %v5404 = vpack.c.b16 %v5278, %v5277
    %v5405 = vpack.c.b16 %v5280, %v5279
    %v5406 = vpack.c.b16 %v5282, %v5281
    %v5407 = vpack.c.b16 %v5284, %v5283
    %v5408 = vpack.c.b16 %v5286, %v5285
    %v5409 = vpack.c.b16 %v5288, %v5287
    %v5410 = vpack.c.b16 %v5290, %v5289
    %v5411 = vpack.c.b16 %v5292, %v5291
    %v5412 = vpack.c.b16 %v5294, %v5293
    %v5413 = vpack.c.b16 %v5296, %v5295
    %v5414 = vpack.c.b16 %v5298, %v5297
    %v5415 = vpack.c.b16 %v5300, %v5299
    %v5416 = vpack.c.b16 %v5302, %v5301
    %v5417 = vpack.c.b16 %v5304, %v5303
    %v5418 = vpack.c.b16 %v5306, %v5305
    %v5419 = vpack.c.b16 %v5308, %v5307
    %v5420 = vpack.c.b16 %v5310, %v5309
    %v5421 = vpack.c.b16 %v5312, %v5311
    %v5422 = vpack.c.b16 %v5314, %v5313
    %v5423 = vpack.c.b16 %v5316, %v5315
    %v5424 = vpack.c.b16 %v5318, %v5317
    %v5425 = vpack.c.b16 %v5320, %v5319
    %v5426 = vpack.c.b16 %v5322, %v5321
    %v5427 = vpack.c.b16 %v5324, %v5323
    %v5428 = vpack.c.b16 %v5326, %v5325
    %v5429 = vpack.c.b16 %v5328, %v5327
    %v5430 = vpack.c.b16 %v5330, %v5329
    %v5431 = vpack.c.b16 %v5332, %v5331
    %v5432 = vpack.c.b16 %v5334, %v5333
    %v5433 = vpack.c.b16 %v5336, %v5335
    %v5434 = vpack.c.b16 %v5338, %v5337
    %5531 = vmatprep.subr.bf16.mxu0 0
    %5532 = vmatpush1.bf16.msra.mxu0 %v5346
    %5533 = vmatprep.subr.bf16.mxu0 0
    %5534 = vmatpush1.bf16.msra.mxu0 %v5345
    %5535 = vmatprep.subr.bf16.mxu0 0
    %5536 = vmatpush1.bf16.msra.mxu0 %v5344
    %5537 = vmatprep.subr.bf16.mxu0 0
    %5538 = vmatpush1.bf16.msra.mxu0 %v5343
    %5539 = vmatprep.subr.bf16.mxu0 0
    %5540 = vmatpush1.bf16.msra.mxu0 %v5342
    %5541 = vmatprep.subr.bf16.mxu0 0
    %5542 = vmatpush1.bf16.msra.mxu0 %v5341
    %5543 = vmatprep.subr.bf16.mxu0 0
    %5544 = vmatpush1.bf16.msra.mxu0 %v5340
    %5545 = vmatprep.subr.bf16.mxu0 0
    %5546 = vmatpush1.bf16.msra.mxu0 %v5339
    %5547 = vmatprep.subr.bf16.mxu0 0
    %5548 = vmatpush2.bf16.msra.mxu0 %v5354
    %5549 = vmatprep.subr.bf16.mxu0 0
    %5550 = vmatpush2.bf16.msra.mxu0 %v5353
    %5551 = vmatprep.subr.bf16.mxu0 0
    %5552 = vmatpush2.bf16.msra.mxu0 %v5352
    %5553 = vmatprep.subr.bf16.mxu0 0
    %5554 = vmatpush2.bf16.msra.mxu0 %v5351
    %5555 = vmatprep.subr.bf16.mxu0 0
    %5556 = vmatpush2.bf16.msra.mxu0 %v5350
    %5557 = vmatprep.subr.bf16.mxu0 0
    %5558 = vmatpush2.bf16.msra.mxu0 %v5349
    %5559 = vmatprep.subr.bf16.mxu0 0
    %5560 = vmatpush2.bf16.msra.mxu0 %v5348
    %5561 = vmatprep.subr.bf16.mxu0 0
    %5562 = vmatpush2.bf16.msra.mxu0 %v5347
    %5563 = vmatprep.mubr.bf16.mxu0 %v4745
    %5564 = vmatmul.mubr.bf16.gmra.mxu0 %v4744
    %v5565 = vpop.f32.mrf.mxu0
    %v5566 = vadd.f32 %v4953, %v5565
    %v5567 = vpop.f32.mrf.mxu0
    %v5568 = vpop.f32.mrf.mxu0
    %v5569 = vpop.f32.mrf.mxu0
    %5570 = vdwg.mxu0
    %5571 = vmatprep.subr.bf16.mxu0 0
    %5572 = vmatpush1.bf16.msra.mxu0 %v5362
    %5573 = vmatprep.subr.bf16.mxu0 0
    %5574 = vmatpush1.bf16.msra.mxu0 %v5361
    %5575 = vmatprep.subr.bf16.mxu0 0
    %5576 = vmatpush1.bf16.msra.mxu0 %v5360
    %5577 = vmatprep.subr.bf16.mxu0 0
    %5578 = vmatpush1.bf16.msra.mxu0 %v5359
    %5579 = vmatprep.subr.bf16.mxu0 0
    %5580 = vmatpush1.bf16.msra.mxu0 %v5358
    %5581 = vmatprep.subr.bf16.mxu0 0
    %5582 = vmatpush1.bf16.msra.mxu0 %v5357
    %5583 = vmatprep.subr.bf16.mxu0 0
    %5584 = vmatpush1.bf16.msra.mxu0 %v5356
    %5585 = vmatprep.subr.bf16.mxu0 0
    %5586 = vmatpush1.bf16.msra.mxu0 %v5355
    %5587 = vmatprep.subr.bf16.mxu0 0
    %5588 = vmatpush2.bf16.msra.mxu0 %v5370
    %5589 = vmatprep.subr.bf16.mxu0 0
    %5590 = vmatpush2.bf16.msra.mxu0 %v5369
    %5591 = vmatprep.subr.bf16.mxu0 0
    %5592 = vmatpush2.bf16.msra.mxu0 %v5368
    %5593 = vmatprep.subr.bf16.mxu0 0
    %5594 = vmatpush2.bf16.msra.mxu0 %v5367
    %5595 = vmatprep.subr.bf16.mxu0 0
    %5596 = vmatpush2.bf16.msra.mxu0 %v5366
    %5597 = vmatprep.subr.bf16.mxu0 0
    %5598 = vmatpush2.bf16.msra.mxu0 %v5365
    %5599 = vmatprep.subr.bf16.mxu0 0
    %5600 = vmatpush2.bf16.msra.mxu0 %v5364
    %5601 = vmatprep.subr.bf16.mxu0 0
    %5602 = vmatpush2.bf16.msra.mxu0 %v5363
    %5603 = vmatprep.mubr.bf16.mxu0 %v4747
    %5604 = vmatmul.mubr.bf16.gmra.mxu0 %v4746
    %v5605 = vpop.f32.mrf.mxu0
    %v5606 = vadd.f32 %v5566, %v5605
    %v5607 = vpop.f32.mrf.mxu0
    %v5608 = vpop.f32.mrf.mxu0
    %v5609 = vpop.f32.mrf.mxu0
    %5610 = vdwg.mxu0
    %5611 = vmatprep.subr.bf16.mxu0 0
    %5612 = vmatpush1.bf16.msra.mxu0 %v5378
    %5613 = vmatprep.subr.bf16.mxu0 0
    %5614 = vmatpush1.bf16.msra.mxu0 %v5377
    %5615 = vmatprep.subr.bf16.mxu0 0
    %5616 = vmatpush1.bf16.msra.mxu0 %v5376
    %5617 = vmatprep.subr.bf16.mxu0 0
    %5618 = vmatpush1.bf16.msra.mxu0 %v5375
    %5619 = vmatprep.subr.bf16.mxu0 0
    %5620 = vmatpush1.bf16.msra.mxu0 %v5374
    %5621 = vmatprep.subr.bf16.mxu0 0
    %5622 = vmatpush1.bf16.msra.mxu0 %v5373
    %5623 = vmatprep.subr.bf16.mxu0 0
    %5624 = vmatpush1.bf16.msra.mxu0 %v5372
    %5625 = vmatprep.subr.bf16.mxu0 0
    %5626 = vmatpush1.bf16.msra.mxu0 %v5371
    %5627 = vmatprep.subr.bf16.mxu0 0
    %5628 = vmatpush2.bf16.msra.mxu0 %v5386
    %5629 = vmatprep.subr.bf16.mxu0 0
    %5630 = vmatpush2.bf16.msra.mxu0 %v5385
    %5631 = vmatprep.subr.bf16.mxu0 0
    %5632 = vmatpush2.bf16.msra.mxu0 %v5384
    %5633 = vmatprep.subr.bf16.mxu0 0
    %5634 = vmatpush2.bf16.msra.mxu0 %v5383
    %5635 = vmatprep.subr.bf16.mxu0 0
    %5636 = vmatpush2.bf16.msra.mxu0 %v5382
    %5637 = vmatprep.subr.bf16.mxu0 0
    %5638 = vmatpush2.bf16.msra.mxu0 %v5381
    %5639 = vmatprep.subr.bf16.mxu0 0
    %5640 = vmatpush2.bf16.msra.mxu0 %v5380
    %5641 = vmatprep.subr.bf16.mxu0 0
    %5642 = vmatpush2.bf16.msra.mxu0 %v5379
    %5643 = vmatprep.mubr.bf16.mxu0 %v4749
    %5644 = vmatmul.mubr.bf16.gmra.mxu0 %v4748
    %v5645 = vpop.f32.mrf.mxu0
    %v5646 = vadd.f32 %v5606, %v5645
    %v5647 = vpop.f32.mrf.mxu0
    %v5648 = vpop.f32.mrf.mxu0
    %v5649 = vpop.f32.mrf.mxu0
    %5650 = vdwg.mxu0
    %5651 = vmatprep.subr.bf16.mxu0 0
    %5652 = vmatpush1.bf16.msra.mxu0 %v5394
    %5653 = vmatprep.subr.bf16.mxu0 0
    %5654 = vmatpush1.bf16.msra.mxu0 %v5393
    %5655 = vmatprep.subr.bf16.mxu0 0
    %5656 = vmatpush1.bf16.msra.mxu0 %v5392
    %5657 = vmatprep.subr.bf16.mxu0 0
    %5658 = vmatpush1.bf16.msra.mxu0 %v5391
    %5659 = vmatprep.subr.bf16.mxu0 0
    %5660 = vmatpush1.bf16.msra.mxu0 %v5390
    %5661 = vmatprep.subr.bf16.mxu0 0
    %5662 = vmatpush1.bf16.msra.mxu0 %v5389
    %5663 = vmatprep.subr.bf16.mxu0 0
    %5664 = vmatpush1.bf16.msra.mxu0 %v5388
    %5665 = vmatprep.subr.bf16.mxu0 0
    %5666 = vmatpush1.bf16.msra.mxu0 %v5387
    %5667 = vmatprep.subr.bf16.mxu0 0
    %5668 = vmatpush2.bf16.msra.mxu0 %v5402
    %5669 = vmatprep.subr.bf16.mxu0 0
    %5670 = vmatpush2.bf16.msra.mxu0 %v5401
    %5671 = vmatprep.subr.bf16.mxu0 0
    %5672 = vmatpush2.bf16.msra.mxu0 %v5400
    %5673 = vmatprep.subr.bf16.mxu0 0
    %5674 = vmatpush2.bf16.msra.mxu0 %v5399
    %5675 = vmatprep.subr.bf16.mxu0 0
    %5676 = vmatpush2.bf16.msra.mxu0 %v5398
    %5677 = vmatprep.subr.bf16.mxu0 0
    %5678 = vmatpush2.bf16.msra.mxu0 %v5397
    %5679 = vmatprep.subr.bf16.mxu0 0
    %5680 = vmatpush2.bf16.msra.mxu0 %v5396
    %5681 = vmatprep.subr.bf16.mxu0 0
    %5682 = vmatpush2.bf16.msra.mxu0 %v5395
    %5683 = vmatprep.mubr.bf16.mxu0 %v4751
    %5684 = vmatmul.mubr.bf16.gmra.mxu0 %v4750
    %v5685 = vpop.f32.mrf.mxu0
    %v5686 = vadd.f32 %v5646, %v5685
    %v5687 = vpop.f32.mrf.mxu0
    %v5688 = vpop.f32.mrf.mxu0
    %v5689 = vpop.f32.mrf.mxu0
    %5690 = vdwg.mxu0
    %5691 = vmatprep.subr.bf16.mxu0 0
    %5692 = vmatpush1.bf16.msra.mxu0 %v5410
    %5693 = vmatprep.subr.bf16.mxu0 0
    %5694 = vmatpush1.bf16.msra.mxu0 %v5409
    %5695 = vmatprep.subr.bf16.mxu0 0
    %5696 = vmatpush1.bf16.msra.mxu0 %v5408
    %5697 = vmatprep.subr.bf16.mxu0 0
    %5698 = vmatpush1.bf16.msra.mxu0 %v5407
    %5699 = vmatprep.subr.bf16.mxu0 0
    %5700 = vmatpush1.bf16.msra.mxu0 %v5406
    %5701 = vmatprep.subr.bf16.mxu0 0
    %5702 = vmatpush1.bf16.msra.mxu0 %v5405
    %5703 = vmatprep.subr.bf16.mxu0 0
    %5704 = vmatpush1.bf16.msra.mxu0 %v5404
    %5705 = vmatprep.subr.bf16.mxu0 0
    %5706 = vmatpush1.bf16.msra.mxu0 %v5403
    %5707 = vmatprep.subr.bf16.mxu0 0
    %5708 = vmatpush2.bf16.msra.mxu0 %v5418
    %5709 = vmatprep.subr.bf16.mxu0 0
    %5710 = vmatpush2.bf16.msra.mxu0 %v5417
    %5711 = vmatprep.subr.bf16.mxu0 0
    %5712 = vmatpush2.bf16.msra.mxu0 %v5416
    %5713 = vmatprep.subr.bf16.mxu0 0
    %5714 = vmatpush2.bf16.msra.mxu0 %v5415
    %5715 = vmatprep.subr.bf16.mxu0 0
    %5716 = vmatpush2.bf16.msra.mxu0 %v5414
    %5717 = vmatprep.subr.bf16.mxu0 0
    %5718 = vmatpush2.bf16.msra.mxu0 %v5413
    %5719 = vmatprep.subr.bf16.mxu0 0
    %5720 = vmatpush2.bf16.msra.mxu0 %v5412
    %5721 = vmatprep.subr.bf16.mxu0 0
    %5722 = vmatpush2.bf16.msra.mxu0 %v5411
    %5723 = vmatprep.mubr.bf16.mxu0 %v4753
    %5724 = vmatmul.mubr.bf16.gmra.mxu0 %v4752
    %v5725 = vpop.f32.mrf.mxu0
    %v5726 = vadd.f32 %v5686, %v5725
    %v5727 = vpop.f32.mrf.mxu0
    %v5728 = vpop.f32.mrf.mxu0
    %v5729 = vpop.f32.mrf.mxu0
    %5730 = vdwg.mxu0
    %5731 = vmatprep.subr.bf16.mxu0 0
    %5732 = vmatpush1.bf16.msra.mxu0 %v5426
    %5733 = vmatprep.subr.bf16.mxu0 0
    %5734 = vmatpush1.bf16.msra.mxu0 %v5425
    %5735 = vmatprep.subr.bf16.mxu0 0
    %5736 = vmatpush1.bf16.msra.mxu0 %v5424
    %5737 = vmatprep.subr.bf16.mxu0 0
    %5738 = vmatpush1.bf16.msra.mxu0 %v5423
    %5739 = vmatprep.subr.bf16.mxu0 0
    %5740 = vmatpush1.bf16.msra.mxu0 %v5422
    %5741 = vmatprep.subr.bf16.mxu0 0
    %5742 = vmatpush1.bf16.msra.mxu0 %v5421
    %5743 = vmatprep.subr.bf16.mxu0 0
    %5744 = vmatpush1.bf16.msra.mxu0 %v5420
    %5745 = vmatprep.subr.bf16.mxu0 0
    %5746 = vmatpush1.bf16.msra.mxu0 %v5419
    %5747 = vmatprep.subr.bf16.mxu0 0
    %5748 = vmatpush2.bf16.msra.mxu0 %v5434
    %5749 = vmatprep.subr.bf16.mxu0 0
    %5750 = vmatpush2.bf16.msra.mxu0 %v5433
    %5751 = vmatprep.subr.bf16.mxu0 0
    %5752 = vmatpush2.bf16.msra.mxu0 %v5432
    %5753 = vmatprep.subr.bf16.mxu0 0
    %5754 = vmatpush2.bf16.msra.mxu0 %v5431
    %5755 = vmatprep.subr.bf16.mxu0 0
    %5756 = vmatpush2.bf16.msra.mxu0 %v5430
    %5757 = vmatprep.subr.bf16.mxu0 0
    %5758 = vmatpush2.bf16.msra.mxu0 %v5429
    %5759 = vmatprep.subr.bf16.mxu0 0
    %5760 = vmatpush2.bf16.msra.mxu0 %v5428
    %5761 = vmatprep.subr.bf16.mxu0 0
    %5762 = vmatpush2.bf16.msra.mxu0 %v5427
    %5763 = vmatprep.mubr.bf16.mxu0 %v4755
    %5764 = vmatmul.mubr.bf16.gmra.mxu0 %v4754
    %v5765 = vpop.f32.mrf.mxu0
    %v5766 = vadd.f32 %v5726, %v5765
    %v5767 = vpop.f32.mrf.mxu0
    %v5768 = vpop.f32.mrf.mxu0
    %v5769 = vpop.f32.mrf.mxu0
    %5770 = vdwg.mxu0
    %v5771 = vmax.f32 %v5766, 0.0
    %v5772 = vld [vmem:[#allocation14] sm:$0xff]
    %v5773 = vld [vmem:[#allocation14 + $0x8] sm:$0xff]
    %v5774 = vld [vmem:[#allocation14 + $0x10] sm:$0xff]
    %v5775 = vld [vmem:[#allocation14 + $0x18] sm:$0xff]
    %v5776 = vld [vmem:[#allocation14 + $0x20] sm:$0xff]
    %v5777 = vld [vmem:[#allocation14 + $0x28] sm:$0xff]
    %v5778 = vld [vmem:[#allocation14 + $0x30] sm:$0xff]
    %v5779 = vld [vmem:[#allocation14 + $0x38] sm:$0xff]
    %v5780 = vld [vmem:[#allocation14 + $0x40] sm:$0xff]
    %v5781 = vld [vmem:[#allocation14 + $0x48] sm:$0xff]
    %v5782 = vld [vmem:[#allocation14 + $0x50] sm:$0xff]
    %v5783 = vld [vmem:[#allocation14 + $0x58] sm:$0xff]
    %v5784 = vld [vmem:[#allocation14 + $0x60] sm:$0xff]
    %v5785 = vld [vmem:[#allocation14 + $0x68] sm:$0xff]
    %v5786 = vld [vmem:[#allocation14 + $0x70] sm:$0xff]
    %v5787 = vld [vmem:[#allocation14 + $0x78] sm:$0xff]
    %v5788 = vld [vmem:[#allocation15] sm:$0x1]
    %v5790 = vlaneseq
    %v5791 = vshrl.u32 %v5790, 7
    %v5792 = vsub.s32 0, %v5791
    %v5793 = vrot.slane %v5788, %v5792
    %5795 = vmatprep.subr.mxu0 0.0
    %5796 = vmatpush1.msra.mxu0 %v5787
    %5797 = vmatprep.subr.mxu0 0.0
    %5798 = vmatpush1.msra.mxu0 %v5786
    %5799 = vmatprep.subr.mxu0 0.0
    %5800 = vmatpush1.msra.mxu0 %v5785
    %5801 = vmatprep.subr.mxu0 0.0
    %5802 = vmatpush1.msra.mxu0 %v5784
    %5803 = vmatprep.subr.mxu0 0.0
    %5804 = vmatpush1.msra.mxu0 %v5783
    %5805 = vmatprep.subr.mxu0 0.0
    %5806 = vmatpush1.msra.mxu0 %v5782
    %5807 = vmatprep.subr.mxu0 0.0
    %5808 = vmatpush1.msra.mxu0 %v5781
    %5809 = vmatprep.subr.mxu0 0.0
    %5810 = vmatpush1.msra.mxu0 %v5780
    %5811 = vmatprep.subr.mxu0 0.0
    %5812 = vmatpush1.msra.mxu0 %v5779
    %5813 = vmatprep.subr.mxu0 0.0
    %5814 = vmatpush1.msra.mxu0 %v5778
    %5815 = vmatprep.subr.mxu0 0.0
    %5816 = vmatpush1.msra.mxu0 %v5777
    %5817 = vmatprep.subr.mxu0 0.0
    %5818 = vmatpush1.msra.mxu0 %v5776
    %5819 = vmatprep.subr.mxu0 0.0
    %5820 = vmatpush1.msra.mxu0 %v5775
    %5821 = vmatprep.subr.mxu0 0.0
    %5822 = vmatpush1.msra.mxu0 %v5774
    %5823 = vmatprep.subr.mxu0 0.0
    %5824 = vmatpush1.msra.mxu0 %v5773
    %5825 = vmatprep.subr.mxu0 0.0
    %5826 = vmatpush1.msra.mxu0 %v5772
    %5827 = vmatprep.subr.mxu0 0.0
    %5828 = vmatpush2.msra.mxu0 0.0
    %5829 = vmatprep.subr.mxu0 0.0
    %5830 = vmatpush2.msra.mxu0 0.0
    %5831 = vmatprep.subr.mxu0 0.0
    %5832 = vmatpush2.msra.mxu0 0.0
    %5833 = vmatprep.subr.mxu0 0.0
    %5834 = vmatpush2.msra.mxu0 0.0
    %5835 = vmatprep.subr.mxu0 0.0
    %5836 = vmatpush2.msra.mxu0 0.0
    %5837 = vmatprep.subr.mxu0 0.0
    %5838 = vmatpush2.msra.mxu0 0.0
    %5839 = vmatprep.subr.mxu0 0.0
    %5840 = vmatpush2.msra.mxu0 0.0
    %5841 = vmatprep.subr.mxu0 0.0
    %5842 = vmatpush2.msra.mxu0 0.0
    %5843 = vmatprep.subr.mxu0 0.0
    %5844 = vmatpush2.msra.mxu0 0.0
    %5845 = vmatprep.subr.mxu0 0.0
    %5846 = vmatpush2.msra.mxu0 0.0
    %5847 = vmatprep.subr.mxu0 0.0
    %5848 = vmatpush2.msra.mxu0 0.0
    %5849 = vmatprep.subr.mxu0 0.0
    %5850 = vmatpush2.msra.mxu0 0.0
    %5851 = vmatprep.subr.mxu0 0.0
    %5852 = vmatpush2.msra.mxu0 0.0
    %5853 = vmatprep.subr.mxu0 0.0
    %5854 = vmatpush2.msra.mxu0 0.0
    %5855 = vmatprep.subr.mxu0 0.0
    %5856 = vmatpush2.msra.mxu0 0.0
    %5857 = vmatprep.subr.mxu0 0.0
    %5858 = vmatpush2.msra.mxu0 0.0
    %5859 = vmatprep.mubr.f32.mxu0 0.0
    %5860 = vmatmul.mubr.f32.gmra.mxu0 %v5771
    %v5861 = vpop.f32.mrf.mxu0
    %v5862 = vadd.f32 %v5793, %v5861
    %v5863 = vpop.f32.mrf.mxu0
    %5864 = vdwg.mxu0
    %5865 = vst [vmem:[#allocation17] sm:$0x3] %v5862
    // Predicated region
    $region70: #{cnn_net_forward.1} parent=1 // pred_check
      _
    $region71: #{cnn_net_forward.1} parent=1 // pred_check_branch
      %5867 = sbr.rel (0) target = $region73
    $region72: #{cnn_net_forward.1} parent=1 // pred_region
      %s5869 = ssub.s32 32, 32
      %5870 = vsyncadd [#allocation5], %s5869
      %s5872 = sshll.u32 [#allocation17], 4
      %s5873 = int_to_ptr.vmem [resolvable:$true] %s5872
      %5875 = dma.vmem_to_hbm [thread:$0]  %s5873, 32, %s9, [#allocation5]
    $region73: #{cnn_net_forward.1} parent=1 // pred_fallthru
      _
    // Predicated region
    $region74: #{cnn_net_forward.1} parent=1 // pred_check
      _
    $region75: #{cnn_net_forward.1} parent=1 // pred_check_branch
      %5877 = sbr.rel (0) target = $region77
    $region76: #{cnn_net_forward.1} parent=1 // pred_region
      %5878 = dma.done [#allocation5], 32
    $region77: #{cnn_net_forward.1} parent=1 // pred_fallthru
      _
    %5879 = vsyncpa [#allocation4], 1
    %5880 = vsyncpa [#allocation7], 1
    %5881 = vsyncpa [#allocation10], 1
    %5882 = vsyncpa [#allocation13], 1
    %5883 = vsyncpa [#allocation16], 1
    %5884 = vsyncpa [#allocation5], 1

</llo_original>
